<compile_context>
chip_gen: v6e
topology: v6e:2x2x1
jax: 0.10.0
libtpu: 0.0.40
codegen_flags: <defaults>
</compile_context>

<pallas_src>
import functools
import math

import jax
import jax.numpy as jnp
from jax.experimental import pallas as pl
from jax.experimental.pallas import tpu as pltpu

# ---------------- configuration (scaled-down ViT) ----------------
BATCH = 2
CHANNELS = 4
IMAGE_SIZE = 16
PATCH_SIZE = 8
NUM_CLASSES = 10

DEPTH = 2          # module: 6
HEADS = 4          # module: 12
HIDDEN_SIZE = 32   # module: 768
MLP_DIM = 64       # module: 3072
DIM_HEAD = 16      # vit_pytorch default: 64

NUM_PATCHES = (IMAGE_SIZE // PATCH_SIZE) ** 2
PATCH_DIM = CHANNELS * PATCH_SIZE * PATCH_SIZE
INNER_DIM = HEADS * DIM_HEAD
SEQ_LEN = NUM_PATCHES + 1
LN_EPS = 1e-5  # torch.nn.LayerNorm default


# ---------------- in-kernel helpers (f32) ----------------
def _layernorm(x, g, b):
    mean = jnp.mean(x, axis=-1, keepdims=True)
    var = jnp.mean((x - mean) ** 2, axis=-1, keepdims=True)
    return (x - mean) * jax.lax.rsqrt(var + LN_EPS) * g + b


def _gelu(x):  # exact (erf) GELU, matching torch.nn.GELU default (kept for torch parity;
    return 0.5 * x * (1.0 + jax.lax.erf(x * (1.0 / math.sqrt(2.0))))  # tanh-approx is a v5e opt)


# ---------------- the single fused ViT kernel, grid over DEPTH ----------------
def _vit_kernel(patches_ref,
                pe_ln1_g_ref, pe_ln1_b_ref, pe_w_ref, pe_b_ref, pe_ln2_g_ref, pe_ln2_b_ref,
                cls_ref, pos_ref,
                ln1_g_ref, ln1_b_ref, w_qkv_ref, w_out_ref, b_out_ref,
                ln2_g_ref, ln2_b_ref, ff_w1_ref, ff_b1_ref, ff_w2_ref, ff_b2_ref,
                fin_g_ref, fin_b_ref, head_w_ref, head_b_ref,
                out_ref, res_ref,
                *, batch, seq_len, heads, dim_head):
    d = pl.program_id(0)
    n = seq_len - 1
    inner = heads * dim_head
    M = batch * seq_len

    # ---- depth step 0: fused patch embedding (LN -> Linear -> LN) + cls/pos assembly ----
    @pl.when(d == 0)
    def _embed():
        px = patches_ref[...].astype(jnp.float32)                       # [B*n, patch_dim]
        h = _layernorm(px, pe_ln1_g_ref[...], pe_ln1_b_ref[...])
        h = jnp.dot(h.astype(jnp.bfloat16), pe_w_ref[...],
                    preferred_element_type=jnp.float32) + pe_b_ref[...]
        emb = _layernorm(h, pe_ln2_g_ref[...], pe_ln2_b_ref[...])       # [B*n, D]
        pos = pos_ref[...]                                              # [seq, D]
        cls_row = cls_ref[...] + pos[0:1, :]                            # [1, D]
        pos_rest = pos[1:seq_len, :]                                    # [n, D]
        rows = []
        for b in range(batch):                                          # static, small
            rows.append(cls_row)
            rows.append(emb[b * n:(b + 1) * n, :] + pos_rest)
        res_ref[...] = jnp.concatenate(rows, axis=0)                    # residual -> VMEM
    # TODO(synk): Dropout(p=0.1)/emb_dropout treated as identity (inference); torch dropout
    #             RNG is not reproducible in a kernel.

    x = res_ref[...]                                                    # [M, D] f32, resident

    # block-diagonal per-image attention mask built in-kernel (no O(M^2) HBM DMA),
    # broadcasted_iota + static per-image band compares (pure VPU, hides under MXU).
    r = jax.lax.broadcasted_iota(jnp.int32, (M, M), 0)
    c = jax.lax.broadcasted_iota(jnp.int32, (M, M), 1)
    same = None
    for b in range(batch):
        lo, hi = b * seq_len, (b + 1) * seq_len
        blk = (r >= lo) & (r < hi) & (c >= lo) & (c < hi)
        same = blk if same is None else (same | blk)
    attn_bias = jnp.where(same, 0.0, -1e30).astype(jnp.float32)

    # ---- attention block (pre-norm, residual) ----
    scale = dim_head ** -0.5
    h = _layernorm(x, ln1_g_ref[0], ln1_b_ref[0])
    qkv = jnp.dot(h.astype(jnp.bfloat16), w_qkv_ref[0],
                  preferred_element_type=jnp.float32)                   # [M, 3*inner]
    head_outs = []
    for hh in range(heads):   # static loop; at full scale group heads to 128-lane multiples
        lo = hh * dim_head
        q = qkv[:, lo:lo + dim_head] * scale                            # scale folded into q
        k = qkv[:, inner + lo:inner + lo + dim_head]
        v = qkv[:, 2 * inner + lo:2 * inner + lo + dim_head]
        s = jax.lax.dot_general(q, k, (((1,), (1,)), ((), ())),
                                preferred_element_type=jnp.float32)     # [M, M], no k.T mat.
        s = s + attn_bias
        s = s - jnp.max(s, axis=-1, keepdims=True)
        p = jnp.exp(s)
        p = p * pl.reciprocal(jnp.sum(p, axis=-1, keepdims=True), approx=True)
        head_outs.append(jnp.dot(p, v, preferred_element_type=jnp.float32))  # [M, dh]
    # single wide out-projection: concat(heads) -> [M, inner] x [inner, D] (one deep MXU pass)
    attn_out = jnp.concatenate(head_outs, axis=-1).astype(jnp.bfloat16)
    proj = jnp.dot(attn_out, w_out_ref[0], preferred_element_type=jnp.float32)
    x = x + proj + b_out_ref[0]

    # ---- feed-forward block (pre-norm, residual) ----
    h = _layernorm(x, ln2_g_ref[0], ln2_b_ref[0])
    h1 = jnp.dot(h.astype(jnp.bfloat16), ff_w1_ref[0],
                 preferred_element_type=jnp.float32) + ff_b1_ref[0]
    h1 = _gelu(h1)
    h2 = jnp.dot(h1.astype(jnp.bfloat16), ff_w2_ref[0],
                 preferred_element_type=jnp.float32) + ff_b2_ref[0]
    x = x + h2
    res_ref[...] = x

    # ---- last depth step: final LN -> cls pooling -> Linear -> log_softmax ----
    @pl.when(d == pl.num_programs(0) - 1)
    def _head():
        cls_tok = jnp.concatenate(
            [x[b * seq_len:b * seq_len + 1, :] for b in range(batch)], axis=0)   # [B, D]
        hn = _layernorm(cls_tok, fin_g_ref[...], fin_b_ref[...])
        logits = jnp.dot(hn.astype(jnp.bfloat16), head_w_ref[...],
                         preferred_element_type=jnp.float32) + head_b_ref[...]   # bf16 MXU
        mx = jnp.max(logits, axis=-1, keepdims=True)
        sh = logits - mx
        lse = jnp.log(jnp.sum(jnp.exp(sh), axis=-1, keepdims=True))
        out_ref[...] = (sh - lse).astype(out_ref.dtype)


# ---------------- BlockSpec helpers ----------------
def _const_spec(a):            # fetched once, resident across all depth steps
    nd = a.ndim
    return pl.BlockSpec(tuple(a.shape), lambda d, _n=nd: (0,) * _n)


def _layer_spec(a):            # stream layer d's slice; Pallas double-buffers across depth
    nd = a.ndim
    return pl.BlockSpec((1,) + tuple(a.shape[1:]),
                        lambda d, _n=nd: (d,) + (0,) * (_n - 1))


# ---------------- forward pass (one pallas_call) ----------------
def transformer_net_forward(params, img):
    # img: [B, C, H, W]  (NCHW, as PyTorch)
    B, C, H, W = img.shape
    gh, gw = H // PATCH_SIZE, W // PATCH_SIZE
    n = gh * gw
    patch_dim = C * PATCH_SIZE * PATCH_SIZE
    seq = n + 1
    M = B * seq
    D = HIDDEN_SIZE

    # rearrange 'b c (h p1) (w p2) -> (b h w) (p1 p2 c)'  (tiny XLA glue on the raw image)
    xr = img.reshape(B, C, gh, PATCH_SIZE, gw, PATCH_SIZE)
    patches = xr.transpose(0, 2, 4, 3, 5, 1).reshape(B * n, patch_dim)

    p = params
    const_pre = (patches,
                 p["pe_ln1_g"], p["pe_ln1_b"], p["pe_w"], p["pe_b"],
                 p["pe_ln2_g"], p["pe_ln2_b"],
                 p["cls"], p["pos"])
    layer_args = (p["ln1_g"], p["ln1_b"], p["w_qkv"], p["w_out"], p["b_out"],
                  p["ln2_g"], p["ln2_b"], p["ff_w1"], p["ff_b1"], p["ff_w2"], p["ff_b2"])
    const_post = (p["final_ln_g"], p["final_ln_b"], p["head_w"], p["head_b"])

    in_specs = ([_const_spec(a) for a in const_pre]
                + [_layer_spec(a) for a in layer_args]
                + [_const_spec(a) for a in const_post])

    kernel = functools.partial(_vit_kernel, batch=B, seq_len=seq,
                               heads=HEADS, dim_head=DIM_HEAD)

    return pl.pallas_call(
        kernel,
        grid=(DEPTH,),
        out_shape=jax.ShapeDtypeStruct((B, NUM_CLASSES), jnp.float32),
        in_specs=in_specs,
        out_specs=pl.BlockSpec((B, NUM_CLASSES), lambda d: (0, 0)),  # constant -> resident
        scratch_shapes=[pltpu.VMEM((M, D), jnp.float32)],            # residual token slab
        compiler_params=pltpu.CompilerParams(
            dimension_semantics=("arbitrary",),      # depth carries the residual
            vmem_limit_bytes=48 * 1024 * 1024,       # > v5e 16 MiB default, < v7x 64 MiB phys
        ),
    )(*const_pre, *layer_args, *const_post)


# ---------------- parameters (deterministic synthetic init, stacked per layer) ----------------
def init_params(key):
    keys = iter(jax.random.split(key, 64))

    def nrm(shape, scale=0.02, dtype=jnp.float32):
        return (scale * jax.random.normal(next(keys), shape)).astype(dtype)

    return {
        # patch embedding
        "pe_ln1_g": jnp.ones((1, PATCH_DIM), jnp.float32),
        "pe_ln1_b": jnp.zeros((1, PATCH_DIM), jnp.float32),
        "pe_w": nrm((PATCH_DIM, HIDDEN_SIZE), dtype=jnp.bfloat16),
        "pe_b": jnp.zeros((1, HIDDEN_SIZE), jnp.float32),
        "pe_ln2_g": jnp.ones((1, HIDDEN_SIZE), jnp.float32),
        "pe_ln2_b": jnp.zeros((1, HIDDEN_SIZE), jnp.float32),
        # tokens / positions
        "pos": nrm((SEQ_LEN, HIDDEN_SIZE), scale=1.0),
        "cls": nrm((1, HIDDEN_SIZE), scale=1.0),
        # encoder: per-layer weights stacked on a leading DEPTH axis (weight streaming)
        "ln1_g": jnp.ones((DEPTH, 1, HIDDEN_SIZE), jnp.float32),
        "ln1_b": jnp.zeros((DEPTH, 1, HIDDEN_SIZE), jnp.float32),
        "w_qkv": nrm((DEPTH, HIDDEN_SIZE, 3 * INNER_DIM), dtype=jnp.bfloat16),  # bias=False
        "w_out": nrm((DEPTH, INNER_DIM, HIDDEN_SIZE), dtype=jnp.bfloat16),
        "b_out": jnp.zeros((DEPTH, 1, HIDDEN_SIZE), jnp.float32),
        "ln2_g": jnp.ones((DEPTH, 1, HIDDEN_SIZE), jnp.float32),
        "ln2_b": jnp.zeros((DEPTH, 1, HIDDEN_SIZE), jnp.float32),
        "ff_w1": nrm((DEPTH, HIDDEN_SIZE, MLP_DIM), dtype=jnp.bfloat16),
        "ff_b1": jnp.zeros((DEPTH, 1, MLP_DIM), jnp.float32),
        "ff_w2": nrm((DEPTH, MLP_DIM, HIDDEN_SIZE), dtype=jnp.bfloat16),
        "ff_b2": jnp.zeros((DEPTH, 1, HIDDEN_SIZE), jnp.float32),
        # head (bf16 weights: single-pass MXU, consistent precision policy)
        "final_ln_g": jnp.ones((1, HIDDEN_SIZE), jnp.float32),
        "final_ln_b": jnp.zeros((1, HIDDEN_SIZE), jnp.float32),
        "head_w": nrm((HIDDEN_SIZE, NUM_CLASSES), dtype=jnp.bfloat16),
        "head_b": jnp.zeros((1, NUM_CLASSES), jnp.float32),
    }


if __name__ == "__main__":
    key = jax.random.PRNGKey(0)
    pkey, xkey = jax.random.split(key)
    params = init_params(pkey)
    x = jax.random.normal(xkey, (BATCH, CHANNELS, IMAGE_SIZE, IMAGE_SIZE), jnp.float32)

    fwd = jax.jit(transformer_net_forward)
    out = jax.block_until_ready(fwd(params, x))

    assert out.shape == (BATCH, NUM_CLASSES)
    assert bool(jnp.all(jnp.isfinite(out)))
    # rows of log_softmax must exponentiate-sum to ~1
    assert bool(jnp.allclose(jnp.exp(out).sum(axis=1), 1.0, atol=1e-4))
    print("KERNEL_OK")
</pallas_src>

<mosaic_0001>
module attributes {stable_mosaic.version = 11 : i64} {
  func.func @_vit_kernel(%arg0: i32, %arg1: memref<8x256xf32, #tpu.memory_space<vmem>>, %arg2: memref<1x256xf32, #tpu.memory_space<vmem>>, %arg3: memref<1x256xf32, #tpu.memory_space<vmem>>, %arg4: memref<256x32xbf16, #tpu.memory_space<vmem>>, %arg5: memref<1x32xf32, #tpu.memory_space<vmem>>, %arg6: memref<1x32xf32, #tpu.memory_space<vmem>>, %arg7: memref<1x32xf32, #tpu.memory_space<vmem>>, %arg8: memref<1x32xf32, #tpu.memory_space<vmem>>, %arg9: memref<5x32xf32, #tpu.memory_space<vmem>>, %arg10: memref<1x1x32xf32, #tpu.memory_space<vmem>>, %arg11: memref<1x1x32xf32, #tpu.memory_space<vmem>>, %arg12: memref<1x32x192xbf16, #tpu.memory_space<vmem>>, %arg13: memref<1x64x32xbf16, #tpu.memory_space<vmem>>, %arg14: memref<1x1x32xf32, #tpu.memory_space<vmem>>, %arg15: memref<1x1x32xf32, #tpu.memory_space<vmem>>, %arg16: memref<1x1x32xf32, #tpu.memory_space<vmem>>, %arg17: memref<1x32x64xbf16, #tpu.memory_space<vmem>>, %arg18: memref<1x1x64xf32, #tpu.memory_space<vmem>>, %arg19: memref<1x64x32xbf16, #tpu.memory_space<vmem>>, %arg20: memref<1x1x32xf32, #tpu.memory_space<vmem>>, %arg21: memref<1x32xf32, #tpu.memory_space<vmem>>, %arg22: memref<1x32xf32, #tpu.memory_space<vmem>>, %arg23: memref<32x10xbf16, #tpu.memory_space<vmem>>, %arg24: memref<1x10xf32, #tpu.memory_space<vmem>>, %arg25: memref<2x10xf32, #tpu.memory_space<vmem>>, %arg26: memref<10x32xf32, #tpu.memory_space<vmem>>) attributes {dimension_semantics = [#tpu.dimension_semantics<arbitrary>], iteration_bounds = array<i64: 2>, scalar_prefetch = 0 : i64, scratch_operands = 1 : i64, tpu.core_type = #tpu.core_type<tc>, window_params = [{pipeline_mode = #tpu.pipeline_mode<synchronous>, transform_indices = @transform_0, window_bounds = array<i64: 8, 256>}, {pipeline_mode = #tpu.pipeline_mode<synchronous>, transform_indices = @transform_1, window_bounds = array<i64: 1, 256>}, {pipeline_mode = #tpu.pipeline_mode<synchronous>, transform_indices = @transform_2, window_bounds = array<i64: 1, 256>}, {pipeline_mode = #tpu.pipeline_mode<synchronous>, transform_indices = @transform_3, window_bounds = array<i64: 256, 32>}, {pipeline_mode = #tpu.pipeline_mode<synchronous>, transform_indices = @transform_4, window_bounds = array<i64: 1, 32>}, {pipeline_mode = #tpu.pipeline_mode<synchronous>, transform_indices = @transform_5, window_bounds = array<i64: 1, 32>}, {pipeline_mode = #tpu.pipeline_mode<synchronous>, transform_indices = @transform_6, window_bounds = array<i64: 1, 32>}, {pipeline_mode = #tpu.pipeline_mode<synchronous>, transform_indices = @transform_7, window_bounds = array<i64: 1, 32>}, {pipeline_mode = #tpu.pipeline_mode<synchronous>, transform_indices = @transform_8, window_bounds = array<i64: 5, 32>}, {transform_indices = @transform_9, window_bounds = array<i64: 1, 1, 32>}, {transform_indices = @transform_10, window_bounds = array<i64: 1, 1, 32>}, {transform_indices = @transform_11, window_bounds = array<i64: 1, 32, 192>}, {transform_indices = @transform_12, window_bounds = array<i64: 1, 64, 32>}, {transform_indices = @transform_13, window_bounds = array<i64: 1, 1, 32>}, {transform_indices = @transform_14, window_bounds = array<i64: 1, 1, 32>}, {transform_indices = @transform_15, window_bounds = array<i64: 1, 1, 32>}, {transform_indices = @transform_16, window_bounds = array<i64: 1, 32, 64>}, {transform_indices = @transform_17, window_bounds = array<i64: 1, 1, 64>}, {transform_indices = @transform_18, window_bounds = array<i64: 1, 64, 32>}, {transform_indices = @transform_19, window_bounds = array<i64: 1, 1, 32>}, {pipeline_mode = #tpu.pipeline_mode<synchronous>, transform_indices = @transform_20, window_bounds = array<i64: 1, 32>}, {pipeline_mode = #tpu.pipeline_mode<synchronous>, transform_indices = @transform_21, window_bounds = array<i64: 1, 32>}, {pipeline_mode = #tpu.pipeline_mode<synchronous>, transform_indices = @transform_22, window_bounds = array<i64: 32, 10>}, {pipeline_mode = #tpu.pipeline_mode<synchronous>, transform_indices = @transform_23, window_bounds = array<i64: 1, 10>}, {pipeline_mode = #tpu.pipeline_mode<synchronous>, transform_indices = @transform_24, window_bounds = array<i64: 2, 10>}]} {
    %c0_i32 = arith.constant 0 : i32
    %0 = arith.cmpi eq, %arg0, %c0_i32 : i32
    %1 = arith.extui %0 : i1 to i32
    %c0_i32_0 = arith.constant 0 : i32
    %2 = arith.cmpi ne, %1, %c0_i32_0 : i32
    scf.if %2 {
      %c0_82 = arith.constant 0 : index
      %c0_83 = arith.constant 0 : index
      %199 = vector.load %arg1[%c0_82, %c0_83] : memref<8x256xf32, #tpu.memory_space<vmem>>, vector<8x256xf32>
      %c0_84 = arith.constant 0 : index
      %c0_85 = arith.constant 0 : index
      %200 = vector.load %arg2[%c0_84, %c0_85] : memref<1x256xf32, #tpu.memory_space<vmem>>, vector<1x256xf32>
      %c0_86 = arith.constant 0 : index
      %c0_87 = arith.constant 0 : index
      %201 = vector.load %arg3[%c0_86, %c0_87] : memref<1x256xf32, #tpu.memory_space<vmem>>, vector<1x256xf32>
      %cst_88 = arith.constant dense<0.000000e+00> : vector<8xf32>
      %202 = vector.multi_reduction <add>, %199, %cst_88 [1] : vector<8x256xf32> to vector<8xf32>
      %203 = vector.shape_cast %202 : vector<8xf32> to vector<8x1xf32>
      %cst_89 = arith.constant 2.560000e+02 : f32
      %204 = vector.broadcast %cst_89 : f32 to vector<8x1xf32>
      %205 = arith.divf %203, %204 : vector<8x1xf32>
      %206 = vector.broadcast %205 : vector<8x1xf32> to vector<8x256xf32>
      %207 = arith.subf %199, %206 : vector<8x256xf32>
      %208 = arith.mulf %207, %207 : vector<8x256xf32>
      %cst_90 = arith.constant dense<0.000000e+00> : vector<8xf32>
      %209 = vector.multi_reduction <add>, %208, %cst_90 [1] : vector<8x256xf32> to vector<8xf32>
      %210 = vector.shape_cast %209 : vector<8xf32> to vector<8x1xf32>
      %cst_91 = arith.constant 2.560000e+02 : f32
      %211 = vector.broadcast %cst_91 : f32 to vector<8x1xf32>
      %212 = arith.divf %210, %211 : vector<8x1xf32>
      %213 = vector.broadcast %205 : vector<8x1xf32> to vector<8x256xf32>
      %214 = arith.subf %199, %213 : vector<8x256xf32>
      %cst_92 = arith.constant 9.99999974E-6 : f32
      %215 = vector.broadcast %cst_92 : f32 to vector<8x1xf32>
      %216 = arith.addf %212, %215 : vector<8x1xf32>
      %217 = math.rsqrt %216 : vector<8x1xf32>
      %218 = vector.broadcast %217 : vector<8x1xf32> to vector<8x256xf32>
      %219 = arith.mulf %214, %218 : vector<8x256xf32>
      %220 = vector.broadcast %200 : vector<1x256xf32> to vector<8x256xf32>
      %221 = arith.mulf %219, %220 : vector<8x256xf32>
      %222 = vector.broadcast %201 : vector<1x256xf32> to vector<8x256xf32>
      %223 = arith.addf %221, %222 : vector<8x256xf32>
      %224 = arith.truncf %223 : vector<8x256xf32> to vector<8x256xbf16>
      %c0_93 = arith.constant 0 : index
      %c0_94 = arith.constant 0 : index
      %225 = vector.load %arg4[%c0_93, %c0_94] : memref<256x32xbf16, #tpu.memory_space<vmem>>, vector<256x32xbf16>
      %cst_95 = arith.constant dense<0.000000e+00> : vector<8x32xf32>
      %226 = tpu.matmul %224, %225, %cst_95 {dimension_numbers = #tpu.dot_dimension_numbers<[1], [0], [0], [1], [0, 0, 1, 1], [], []>} : vector<8x256xbf16>, vector<256x32xbf16>, vector<8x32xf32> -> vector<8x32xf32>
      %c0_96 = arith.constant 0 : index
      %c0_97 = arith.constant 0 : index
      %227 = vector.load %arg5[%c0_96, %c0_97] : memref<1x32xf32, #tpu.memory_space<vmem>>, vector<1x32xf32>
      %228 = vector.broadcast %227 : vector<1x32xf32> to vector<8x32xf32>
      %229 = arith.addf %226, %228 : vector<8x32xf32>
      %c0_98 = arith.constant 0 : index
      %c0_99 = arith.constant 0 : index
      %230 = vector.load %arg6[%c0_98, %c0_99] : memref<1x32xf32, #tpu.memory_space<vmem>>, vector<1x32xf32>
      %c0_100 = arith.constant 0 : index
      %c0_101 = arith.constant 0 : index
      %231 = vector.load %arg7[%c0_100, %c0_101] : memref<1x32xf32, #tpu.memory_space<vmem>>, vector<1x32xf32>
      %cst_102 = arith.constant dense<0.000000e+00> : vector<8xf32>
      %232 = vector.multi_reduction <add>, %229, %cst_102 [1] : vector<8x32xf32> to vector<8xf32>
      %233 = vector.shape_cast %232 : vector<8xf32> to vector<8x1xf32>
      %cst_103 = arith.constant 3.200000e+01 : f32
      %234 = vector.broadcast %cst_103 : f32 to vector<8x1xf32>
      %235 = arith.divf %233, %234 : vector<8x1xf32>
      %236 = vector.broadcast %235 : vector<8x1xf32> to vector<8x32xf32>
      %237 = arith.subf %229, %236 : vector<8x32xf32>
      %238 = arith.mulf %237, %237 : vector<8x32xf32>
      %cst_104 = arith.constant dense<0.000000e+00> : vector<8xf32>
      %239 = vector.multi_reduction <add>, %238, %cst_104 [1] : vector<8x32xf32> to vector<8xf32>
      %240 = vector.shape_cast %239 : vector<8xf32> to vector<8x1xf32>
      %cst_105 = arith.constant 3.200000e+01 : f32
      %241 = vector.broadcast %cst_105 : f32 to vector<8x1xf32>
      %242 = arith.divf %240, %241 : vector<8x1xf32>
      %243 = vector.broadcast %235 : vector<8x1xf32> to vector<8x32xf32>
      %244 = arith.subf %229, %243 : vector<8x32xf32>
      %cst_106 = arith.constant 9.99999974E-6 : f32
      %245 = vector.broadcast %cst_106 : f32 to vector<8x1xf32>
      %246 = arith.addf %242, %245 : vector<8x1xf32>
      %247 = math.rsqrt %246 : vector<8x1xf32>
      %248 = vector.broadcast %247 : vector<8x1xf32> to vector<8x32xf32>
      %249 = arith.mulf %244, %248 : vector<8x32xf32>
      %250 = vector.broadcast %230 : vector<1x32xf32> to vector<8x32xf32>
      %251 = arith.mulf %249, %250 : vector<8x32xf32>
      %252 = vector.broadcast %231 : vector<1x32xf32> to vector<8x32xf32>
      %253 = arith.addf %251, %252 : vector<8x32xf32>
      %c0_107 = arith.constant 0 : index
      %c0_108 = arith.constant 0 : index
      %254 = vector.load %arg9[%c0_107, %c0_108] : memref<5x32xf32, #tpu.memory_space<vmem>>, vector<5x32xf32>
      %c0_109 = arith.constant 0 : index
      %c0_110 = arith.constant 0 : index
      %255 = vector.load %arg8[%c0_109, %c0_110] : memref<1x32xf32, #tpu.memory_space<vmem>>, vector<1x32xf32>
      %256 = vector.extract_strided_slice %254 {offsets = [0, 0], sizes = [1, 32], strides = [1, 1]} : vector<5x32xf32> to vector<1x32xf32>
      %257 = arith.addf %255, %256 : vector<1x32xf32>
      %258 = vector.extract_strided_slice %254 {offsets = [1, 0], sizes = [4, 32], strides = [1, 1]} : vector<5x32xf32> to vector<4x32xf32>
      %259 = vector.extract_strided_slice %253 {offsets = [0, 0], sizes = [4, 32], strides = [1, 1]} : vector<8x32xf32> to vector<4x32xf32>
      %260 = arith.addf %259, %258 : vector<4x32xf32>
      %261 = vector.extract_strided_slice %253 {offsets = [4, 0], sizes = [4, 32], strides = [1, 1]} : vector<8x32xf32> to vector<4x32xf32>
      %262 = arith.addf %261, %258 : vector<4x32xf32>
      %263 = tpu.concatenate %257, %260, %257, %262 in 0 : vector<1x32xf32>, vector<4x32xf32>, vector<1x32xf32>, vector<4x32xf32> -> vector<10x32xf32>
      %c0_111 = arith.constant 0 : index
      %c0_112 = arith.constant 0 : index
      %264 = vector.load %arg26[%c0_111, %c0_112] : memref<10x32xf32, #tpu.memory_space<vmem>>, vector<10x32xf32>
      tpu.vector_store %arg26[%c0_111, %c0_112], %263 {strides = array<i32>} : memref<10x32xf32, #tpu.memory_space<vmem>>, vector<10x32xf32>,
    } else {
    }
    %c0 = arith.constant 0 : index
    %c0_1 = arith.constant 0 : index
    %3 = vector.load %arg26[%c0, %c0_1] : memref<10x32xf32, #tpu.memory_space<vmem>>, vector<10x32xf32>
    %4 = tpu.iota {dimensions = array<i32: 0>} : vector<10x10xi32>
    %5 = tpu.iota {dimensions = array<i32: 1>} : vector<10x10xi32>
    %c0_i32_2 = arith.constant 0 : i32
    %6 = vector.broadcast %c0_i32_2 : i32 to vector<10x10xi32>
    %7 = arith.cmpi sge, %4, %6 : vector<10x10xi32>
    %c5_i32 = arith.constant 5 : i32
    %8 = vector.broadcast %c5_i32 : i32 to vector<10x10xi32>
    %9 = arith.cmpi slt, %4, %8 : vector<10x10xi32>
    %10 = arith.andi %7, %9 : vector<10x10xi1>
    %c0_i32_3 = arith.constant 0 : i32
    %11 = vector.broadcast %c0_i32_3 : i32 to vector<10x10xi32>
    %12 = arith.cmpi sge, %5, %11 : vector<10x10xi32>
    %13 = arith.andi %10, %12 : vector<10x10xi1>
    %c5_i32_4 = arith.constant 5 : i32
    %14 = vector.broadcast %c5_i32_4 : i32 to vector<10x10xi32>
    %15 = arith.cmpi slt, %5, %14 : vector<10x10xi32>
    %16 = arith.andi %13, %15 : vector<10x10xi1>
    %c5_i32_5 = arith.constant 5 : i32
    %17 = vector.broadcast %c5_i32_5 : i32 to vector<10x10xi32>
    %18 = arith.cmpi sge, %4, %17 : vector<10x10xi32>
    %c10_i32 = arith.constant 10 : i32
    %19 = vector.broadcast %c10_i32 : i32 to vector<10x10xi32>
    %20 = arith.cmpi slt, %4, %19 : vector<10x10xi32>
    %21 = arith.andi %18, %20 : vector<10x10xi1>
    %c5_i32_6 = arith.constant 5 : i32
    %22 = vector.broadcast %c5_i32_6 : i32 to vector<10x10xi32>
    %23 = arith.cmpi sge, %5, %22 : vector<10x10xi32>
    %24 = arith.andi %21, %23 : vector<10x10xi1>
    %c10_i32_7 = arith.constant 10 : i32
    %25 = vector.broadcast %c10_i32_7 : i32 to vector<10x10xi32>
    %26 = arith.cmpi slt, %5, %25 : vector<10x10xi32>
    %27 = arith.andi %24, %26 : vector<10x10xi1>
    %28 = arith.ori %16, %27 : vector<10x10xi1>
    %cst = arith.constant 0.000000e+00 : f32
    %cst_8 = arith.constant -1.000000e+30 : f32
    %29 = vector.broadcast %cst : f32 to vector<10x10xf32>
    %30 = vector.broadcast %cst_8 : f32 to vector<10x10xf32>
    %31 = arith.select %28, %29, %30 : vector<10x10xi1>, vector<10x10xf32>
    %c0_9 = arith.constant 0 : index
    %c0_10 = arith.constant 0 : index
    %c0_11 = arith.constant 0 : index
    %32 = vector.load %arg10[%c0_9, %c0_10, %c0_11] : memref<1x1x32xf32, #tpu.memory_space<vmem>>, vector<1x1x32xf32>
    %33 = vector.shape_cast %32 : vector<1x1x32xf32> to vector<1x32xf32>
    %c0_12 = arith.constant 0 : index
    %c0_13 = arith.constant 0 : index
    %c0_14 = arith.constant 0 : index
    %34 = vector.load %arg11[%c0_12, %c0_13, %c0_14] : memref<1x1x32xf32, #tpu.memory_space<vmem>>, vector<1x1x32xf32>
    %35 = vector.shape_cast %34 : vector<1x1x32xf32> to vector<1x32xf32>
    %cst_15 = arith.constant dense<0.000000e+00> : vector<10xf32>
    %36 = vector.multi_reduction <add>, %3, %cst_15 [1] : vector<10x32xf32> to vector<10xf32>
    %37 = vector.shape_cast %36 : vector<10xf32> to vector<10x1xf32>
    %cst_16 = arith.constant 3.200000e+01 : f32
    %38 = vector.broadcast %cst_16 : f32 to vector<10x1xf32>
    %39 = arith.divf %37, %38 : vector<10x1xf32>
    %40 = vector.broadcast %39 : vector<10x1xf32> to vector<10x32xf32>
    %41 = arith.subf %3, %40 : vector<10x32xf32>
    %42 = arith.mulf %41, %41 : vector<10x32xf32>
    %cst_17 = arith.constant dense<0.000000e+00> : vector<10xf32>
    %43 = vector.multi_reduction <add>, %42, %cst_17 [1] : vector<10x32xf32> to vector<10xf32>
    %44 = vector.shape_cast %43 : vector<10xf32> to vector<10x1xf32>
    %cst_18 = arith.constant 3.200000e+01 : f32
    %45 = vector.broadcast %cst_18 : f32 to vector<10x1xf32>
    %46 = arith.divf %44, %45 : vector<10x1xf32>
    %47 = vector.broadcast %39 : vector<10x1xf32> to vector<10x32xf32>
    %48 = arith.subf %3, %47 : vector<10x32xf32>
    %cst_19 = arith.constant 9.99999974E-6 : f32
    %49 = vector.broadcast %cst_19 : f32 to vector<10x1xf32>
    %50 = arith.addf %46, %49 : vector<10x1xf32>
    %51 = math.rsqrt %50 : vector<10x1xf32>
    %52 = vector.broadcast %51 : vector<10x1xf32> to vector<10x32xf32>
    %53 = arith.mulf %48, %52 : vector<10x32xf32>
    %54 = vector.broadcast %33 : vector<1x32xf32> to vector<10x32xf32>
    %55 = arith.mulf %53, %54 : vector<10x32xf32>
    %56 = vector.broadcast %35 : vector<1x32xf32> to vector<10x32xf32>
    %57 = arith.addf %55, %56 : vector<10x32xf32>
    %58 = arith.truncf %57 : vector<10x32xf32> to vector<10x32xbf16>
    %c0_20 = arith.constant 0 : index
    %c0_21 = arith.constant 0 : index
    %c0_22 = arith.constant 0 : index
    %59 = vector.load %arg12[%c0_20, %c0_21, %c0_22] : memref<1x32x192xbf16, #tpu.memory_space<vmem>>, vector<1x32x192xbf16>
    %60 = vector.shape_cast %59 : vector<1x32x192xbf16> to vector<32x192xbf16>
    %cst_23 = arith.constant dense<0.000000e+00> : vector<10x192xf32>
    %61 = tpu.matmul %58, %60, %cst_23 {dimension_numbers = #tpu.dot_dimension_numbers<[1], [0], [0], [1], [0, 0, 1, 1], [], []>} : vector<10x32xbf16>, vector<32x192xbf16>, vector<10x192xf32> -> vector<10x192xf32>
    %62 = vector.extract_strided_slice %61 {offsets = [0, 0], sizes = [10, 16], strides = [1, 1]} : vector<10x192xf32> to vector<10x16xf32>
    %cst_24 = arith.constant 2.500000e-01 : f32
    %63 = vector.broadcast %cst_24 : f32 to vector<10x16xf32>
    %64 = arith.mulf %62, %63 : vector<10x16xf32>
    %65 = vector.extract_strided_slice %61 {offsets = [0, 64], sizes = [10, 16], strides = [1, 1]} : vector<10x192xf32> to vector<10x16xf32>
    %66 = vector.extract_strided_slice %61 {offsets = [0, 128], sizes = [10, 16], strides = [1, 1]} : vector<10x192xf32> to vector<10x16xf32>
    %cst_25 = arith.constant dense<0.000000e+00> : vector<10x10xf32>
    %67 = tpu.matmul %64, %65, %cst_25 {dimension_numbers = #tpu.dot_dimension_numbers<[1], [1], [0], [0], [0, 0, 1, 0], [], []>} : vector<10x16xf32>, vector<10x16xf32>, vector<10x10xf32> -> vector<10x10xf32>
    %68 = arith.addf %67, %31 : vector<10x10xf32>
    %cst_26 = arith.constant dense<0xFF800000> : vector<10xf32>
    %69 = vector.multi_reduction <maximumf>, %68, %cst_26 [1] : vector<10x10xf32> to vector<10xf32>
    %70 = vector.shape_cast %69 : vector<10xf32> to vector<10x1xf32>
    %71 = vector.broadcast %70 : vector<10x1xf32> to vector<10x10xf32>
    %72 = arith.subf %68, %71 : vector<10x10xf32>
    %73 = math.exp %72 : vector<10x10xf32>
    %cst_27 = arith.constant dense<0.000000e+00> : vector<10xf32>
    %74 = vector.multi_reduction <add>, %73, %cst_27 [1] : vector<10x10xf32> to vector<10xf32>
    %75 = vector.shape_cast %74 : vector<10xf32> to vector<10x1xf32>
    %76 = tpu.reciprocal %75 {approx = true} : vector<10x1xf32> -> vector<10x1xf32>
    %77 = vector.broadcast %76 : vector<10x1xf32> to vector<10x10xf32>
    %78 = arith.mulf %73, %77 : vector<10x10xf32>
    %cst_28 = arith.constant dense<0.000000e+00> : vector<10x16xf32>
    %79 = tpu.matmul %78, %66, %cst_28 {dimension_numbers = #tpu.dot_dimension_numbers<[1], [0], [0], [1], [0, 0, 1, 1], [], []>} : vector<10x10xf32>, vector<10x16xf32>, vector<10x16xf32> -> vector<10x16xf32>
    %80 = vector.extract_strided_slice %61 {offsets = [0, 16], sizes = [10, 16], strides = [1, 1]} : vector<10x192xf32> to vector<10x16xf32>
    %cst_29 = arith.constant 2.500000e-01 : f32
    %81 = vector.broadcast %cst_29 : f32 to vector<10x16xf32>
    %82 = arith.mulf %80, %81 : vector<10x16xf32>
    %83 = vector.extract_strided_slice %61 {offsets = [0, 80], sizes = [10, 16], strides = [1, 1]} : vector<10x192xf32> to vector<10x16xf32>
    %84 = vector.extract_strided_slice %61 {offsets = [0, 144], sizes = [10, 16], strides = [1, 1]} : vector<10x192xf32> to vector<10x16xf32>
    %cst_30 = arith.constant dense<0.000000e+00> : vector<10x10xf32>
    %85 = tpu.matmul %82, %83, %cst_30 {dimension_numbers = #tpu.dot_dimension_numbers<[1], [1], [0], [0], [0, 0, 1, 0], [], []>} : vector<10x16xf32>, vector<10x16xf32>, vector<10x10xf32> -> vector<10x10xf32>
    %86 = arith.addf %85, %31 : vector<10x10xf32>
    %cst_31 = arith.constant dense<0xFF800000> : vector<10xf32>
    %87 = vector.multi_reduction <maximumf>, %86, %cst_31 [1] : vector<10x10xf32> to vector<10xf32>
    %88 = vector.shape_cast %87 : vector<10xf32> to vector<10x1xf32>
    %89 = vector.broadcast %88 : vector<10x1xf32> to vector<10x10xf32>
    %90 = arith.subf %86, %89 : vector<10x10xf32>
    %91 = math.exp %90 : vector<10x10xf32>
    %cst_32 = arith.constant dense<0.000000e+00> : vector<10xf32>
    %92 = vector.multi_reduction <add>, %91, %cst_32 [1] : vector<10x10xf32> to vector<10xf32>
    %93 = vector.shape_cast %92 : vector<10xf32> to vector<10x1xf32>
    %94 = tpu.reciprocal %93 {approx = true} : vector<10x1xf32> -> vector<10x1xf32>
    %95 = vector.broadcast %94 : vector<10x1xf32> to vector<10x10xf32>
    %96 = arith.mulf %91, %95 : vector<10x10xf32>
    %cst_33 = arith.constant dense<0.000000e+00> : vector<10x16xf32>
    %97 = tpu.matmul %96, %84, %cst_33 {dimension_numbers = #tpu.dot_dimension_numbers<[1], [0], [0], [1], [0, 0, 1, 1], [], []>} : vector<10x10xf32>, vector<10x16xf32>, vector<10x16xf32> -> vector<10x16xf32>
    %98 = vector.extract_strided_slice %61 {offsets = [0, 32], sizes = [10, 16], strides = [1, 1]} : vector<10x192xf32> to vector<10x16xf32>
    %cst_34 = arith.constant 2.500000e-01 : f32
    %99 = vector.broadcast %cst_34 : f32 to vector<10x16xf32>
    %100 = arith.mulf %98, %99 : vector<10x16xf32>
    %101 = vector.extract_strided_slice %61 {offsets = [0, 96], sizes = [10, 16], strides = [1, 1]} : vector<10x192xf32> to vector<10x16xf32>
    %102 = vector.extract_strided_slice %61 {offsets = [0, 160], sizes = [10, 16], strides = [1, 1]} : vector<10x192xf32> to vector<10x16xf32>
    %cst_35 = arith.constant dense<0.000000e+00> : vector<10x10xf32>
    %103 = tpu.matmul %100, %101, %cst_35 {dimension_numbers = #tpu.dot_dimension_numbers<[1], [1], [0], [0], [0, 0, 1, 0], [], []>} : vector<10x16xf32>, vector<10x16xf32>, vector<10x10xf32> -> vector<10x10xf32>
    %104 = arith.addf %103, %31 : vector<10x10xf32>
    %cst_36 = arith.constant dense<0xFF800000> : vector<10xf32>
    %105 = vector.multi_reduction <maximumf>, %104, %cst_36 [1] : vector<10x10xf32> to vector<10xf32>
    %106 = vector.shape_cast %105 : vector<10xf32> to vector<10x1xf32>
    %107 = vector.broadcast %106 : vector<10x1xf32> to vector<10x10xf32>
    %108 = arith.subf %104, %107 : vector<10x10xf32>
    %109 = math.exp %108 : vector<10x10xf32>
    %cst_37 = arith.constant dense<0.000000e+00> : vector<10xf32>
    %110 = vector.multi_reduction <add>, %109, %cst_37 [1] : vector<10x10xf32> to vector<10xf32>
    %111 = vector.shape_cast %110 : vector<10xf32> to vector<10x1xf32>
    %112 = tpu.reciprocal %111 {approx = true} : vector<10x1xf32> -> vector<10x1xf32>
    %113 = vector.broadcast %112 : vector<10x1xf32> to vector<10x10xf32>
    %114 = arith.mulf %109, %113 : vector<10x10xf32>
    %cst_38 = arith.constant dense<0.000000e+00> : vector<10x16xf32>
    %115 = tpu.matmul %114, %102, %cst_38 {dimension_numbers = #tpu.dot_dimension_numbers<[1], [0], [0], [1], [0, 0, 1, 1], [], []>} : vector<10x10xf32>, vector<10x16xf32>, vector<10x16xf32> -> vector<10x16xf32>
    %116 = vector.extract_strided_slice %61 {offsets = [0, 48], sizes = [10, 16], strides = [1, 1]} : vector<10x192xf32> to vector<10x16xf32>
    %cst_39 = arith.constant 2.500000e-01 : f32
    %117 = vector.broadcast %cst_39 : f32 to vector<10x16xf32>
    %118 = arith.mulf %116, %117 : vector<10x16xf32>
    %119 = vector.extract_strided_slice %61 {offsets = [0, 112], sizes = [10, 16], strides = [1, 1]} : vector<10x192xf32> to vector<10x16xf32>
    %120 = vector.extract_strided_slice %61 {offsets = [0, 176], sizes = [10, 16], strides = [1, 1]} : vector<10x192xf32> to vector<10x16xf32>
    %cst_40 = arith.constant dense<0.000000e+00> : vector<10x10xf32>
    %121 = tpu.matmul %118, %119, %cst_40 {dimension_numbers = #tpu.dot_dimension_numbers<[1], [1], [0], [0], [0, 0, 1, 0], [], []>} : vector<10x16xf32>, vector<10x16xf32>, vector<10x10xf32> -> vector<10x10xf32>
    %122 = arith.addf %121, %31 : vector<10x10xf32>
    %cst_41 = arith.constant dense<0xFF800000> : vector<10xf32>
    %123 = vector.multi_reduction <maximumf>, %122, %cst_41 [1] : vector<10x10xf32> to vector<10xf32>
    %124 = vector.shape_cast %123 : vector<10xf32> to vector<10x1xf32>
    %125 = vector.broadcast %124 : vector<10x1xf32> to vector<10x10xf32>
    %126 = arith.subf %122, %125 : vector<10x10xf32>
    %127 = math.exp %126 : vector<10x10xf32>
    %cst_42 = arith.constant dense<0.000000e+00> : vector<10xf32>
    %128 = vector.multi_reduction <add>, %127, %cst_42 [1] : vector<10x10xf32> to vector<10xf32>
    %129 = vector.shape_cast %128 : vector<10xf32> to vector<10x1xf32>
    %130 = tpu.reciprocal %129 {approx = true} : vector<10x1xf32> -> vector<10x1xf32>
    %131 = vector.broadcast %130 : vector<10x1xf32> to vector<10x10xf32>
    %132 = arith.mulf %127, %131 : vector<10x10xf32>
    %cst_43 = arith.constant dense<0.000000e+00> : vector<10x16xf32>
    %133 = tpu.matmul %132, %120, %cst_43 {dimension_numbers = #tpu.dot_dimension_numbers<[1], [0], [0], [1], [0, 0, 1, 1], [], []>} : vector<10x10xf32>, vector<10x16xf32>, vector<10x16xf32> -> vector<10x16xf32>
    %134 = tpu.concatenate %79, %97, %115, %133 in 1 : vector<10x16xf32>, vector<10x16xf32>, vector<10x16xf32>, vector<10x16xf32> -> vector<10x64xf32>
    %135 = arith.truncf %134 : vector<10x64xf32> to vector<10x64xbf16>
    %c0_44 = arith.constant 0 : index
    %c0_45 = arith.constant 0 : index
    %c0_46 = arith.constant 0 : index
    %136 = vector.load %arg13[%c0_44, %c0_45, %c0_46] : memref<1x64x32xbf16, #tpu.memory_space<vmem>>, vector<1x64x32xbf16>
    %137 = vector.shape_cast %136 : vector<1x64x32xbf16> to vector<64x32xbf16>
    %cst_47 = arith.constant dense<0.000000e+00> : vector<10x32xf32>
    %138 = tpu.matmul %135, %137, %cst_47 {dimension_numbers = #tpu.dot_dimension_numbers<[1], [0], [0], [1], [0, 0, 1, 1], [], []>} : vector<10x64xbf16>, vector<64x32xbf16>, vector<10x32xf32> -> vector<10x32xf32>
    %139 = arith.addf %3, %138 : vector<10x32xf32>
    %c0_48 = arith.constant 0 : index
    %c0_49 = arith.constant 0 : index
    %c0_50 = arith.constant 0 : index
    %140 = vector.load %arg14[%c0_48, %c0_49, %c0_50] : memref<1x1x32xf32, #tpu.memory_space<vmem>>, vector<1x1x32xf32>
    %141 = vector.shape_cast %140 : vector<1x1x32xf32> to vector<1x32xf32>
    %142 = vector.broadcast %141 : vector<1x32xf32> to vector<10x32xf32>
    %143 = arith.addf %139, %142 : vector<10x32xf32>
    %c0_51 = arith.constant 0 : index
    %c0_52 = arith.constant 0 : index
    %c0_53 = arith.constant 0 : index
    %144 = vector.load %arg15[%c0_51, %c0_52, %c0_53] : memref<1x1x32xf32, #tpu.memory_space<vmem>>, vector<1x1x32xf32>
    %145 = vector.shape_cast %144 : vector<1x1x32xf32> to vector<1x32xf32>
    %c0_54 = arith.constant 0 : index
    %c0_55 = arith.constant 0 : index
    %c0_56 = arith.constant 0 : index
    %146 = vector.load %arg16[%c0_54, %c0_55, %c0_56] : memref<1x1x32xf32, #tpu.memory_space<vmem>>, vector<1x1x32xf32>
    %147 = vector.shape_cast %146 : vector<1x1x32xf32> to vector<1x32xf32>
    %cst_57 = arith.constant dense<0.000000e+00> : vector<10xf32>
    %148 = vector.multi_reduction <add>, %143, %cst_57 [1] : vector<10x32xf32> to vector<10xf32>
    %149 = vector.shape_cast %148 : vector<10xf32> to vector<10x1xf32>
    %cst_58 = arith.constant 3.200000e+01 : f32
    %150 = vector.broadcast %cst_58 : f32 to vector<10x1xf32>
    %151 = arith.divf %149, %150 : vector<10x1xf32>
    %152 = vector.broadcast %151 : vector<10x1xf32> to vector<10x32xf32>
    %153 = arith.subf %143, %152 : vector<10x32xf32>
    %154 = arith.mulf %153, %153 : vector<10x32xf32>
    %cst_59 = arith.constant dense<0.000000e+00> : vector<10xf32>
    %155 = vector.multi_reduction <add>, %154, %cst_59 [1] : vector<10x32xf32> to vector<10xf32>
    %156 = vector.shape_cast %155 : vector<10xf32> to vector<10x1xf32>
    %cst_60 = arith.constant 3.200000e+01 : f32
    %157 = vector.broadcast %cst_60 : f32 to vector<10x1xf32>
    %158 = arith.divf %156, %157 : vector<10x1xf32>
    %159 = vector.broadcast %151 : vector<10x1xf32> to vector<10x32xf32>
    %160 = arith.subf %143, %159 : vector<10x32xf32>
    %cst_61 = arith.constant 9.99999974E-6 : f32
    %161 = vector.broadcast %cst_61 : f32 to vector<10x1xf32>
    %162 = arith.addf %158, %161 : vector<10x1xf32>
    %163 = math.rsqrt %162 : vector<10x1xf32>
    %164 = vector.broadcast %163 : vector<10x1xf32> to vector<10x32xf32>
    %165 = arith.mulf %160, %164 : vector<10x32xf32>
    %166 = vector.broadcast %145 : vector<1x32xf32> to vector<10x32xf32>
    %167 = arith.mulf %165, %166 : vector<10x32xf32>
    %168 = vector.broadcast %147 : vector<1x32xf32> to vector<10x32xf32>
    %169 = arith.addf %167, %168 : vector<10x32xf32>
    %170 = arith.truncf %169 : vector<10x32xf32> to vector<10x32xbf16>
    %c0_62 = arith.constant 0 : index
    %c0_63 = arith.constant 0 : index
    %c0_64 = arith.constant 0 : index
    %171 = vector.load %arg17[%c0_62, %c0_63, %c0_64] : memref<1x32x64xbf16, #tpu.memory_space<vmem>>, vector<1x32x64xbf16>
    %172 = vector.shape_cast %171 : vector<1x32x64xbf16> to vector<32x64xbf16>
    %cst_65 = arith.constant dense<0.000000e+00> : vector<10x64xf32>
    %173 = tpu.matmul %170, %172, %cst_65 {dimension_numbers = #tpu.dot_dimension_numbers<[1], [0], [0], [1], [0, 0, 1, 1], [], []>} : vector<10x32xbf16>, vector<32x64xbf16>, vector<10x64xf32> -> vector<10x64xf32>
    %c0_66 = arith.constant 0 : index
    %c0_67 = arith.constant 0 : index
    %c0_68 = arith.constant 0 : index
    %174 = vector.load %arg18[%c0_66, %c0_67, %c0_68] : memref<1x1x64xf32, #tpu.memory_space<vmem>>, vector<1x1x64xf32>
    %175 = vector.shape_cast %174 : vector<1x1x64xf32> to vector<1x64xf32>
    %176 = vector.broadcast %175 : vector<1x64xf32> to vector<10x64xf32>
    %177 = arith.addf %173, %176 : vector<10x64xf32>
    %cst_69 = arith.constant 5.000000e-01 : f32
    %178 = vector.broadcast %cst_69 : f32 to vector<10x64xf32>
    %179 = arith.mulf %178, %177 : vector<10x64xf32>
    %cst_70 = arith.constant 0.707106769 : f32
    %180 = vector.broadcast %cst_70 : f32 to vector<10x64xf32>
    %181 = arith.mulf %177, %180 : vector<10x64xf32>
    %182 = math.erf %181 : vector<10x64xf32>
    %cst_71 = arith.constant 1.000000e+00 : f32
    %183 = vector.broadcast %cst_71 : f32 to vector<10x64xf32>
    %184 = arith.addf %183, %182 : vector<10x64xf32>
    %185 = arith.mulf %179, %184 : vector<10x64xf32>
    %186 = arith.truncf %185 : vector<10x64xf32> to vector<10x64xbf16>
    %c0_72 = arith.constant 0 : index
    %c0_73 = arith.constant 0 : index
    %c0_74 = arith.constant 0 : index
    %187 = vector.load %arg19[%c0_72, %c0_73, %c0_74] : memref<1x64x32xbf16, #tpu.memory_space<vmem>>, vector<1x64x32xbf16>
    %188 = vector.shape_cast %187 : vector<1x64x32xbf16> to vector<64x32xbf16>
    %cst_75 = arith.constant dense<0.000000e+00> : vector<10x32xf32>
    %189 = tpu.matmul %186, %188, %cst_75 {dimension_numbers = #tpu.dot_dimension_numbers<[1], [0], [0], [1], [0, 0, 1, 1], [], []>} : vector<10x64xbf16>, vector<64x32xbf16>, vector<10x32xf32> -> vector<10x32xf32>
    %c0_76 = arith.constant 0 : index
    %c0_77 = arith.constant 0 : index
    %c0_78 = arith.constant 0 : index
    %190 = vector.load %arg20[%c0_76, %c0_77, %c0_78] : memref<1x1x32xf32, #tpu.memory_space<vmem>>, vector<1x1x32xf32>
    %191 = vector.shape_cast %190 : vector<1x1x32xf32> to vector<1x32xf32>
    %192 = vector.broadcast %191 : vector<1x32xf32> to vector<10x32xf32>
    %193 = arith.addf %189, %192 : vector<10x32xf32>
    %194 = arith.addf %143, %193 : vector<10x32xf32>
    %c0_79 = arith.constant 0 : index
    %c0_80 = arith.constant 0 : index
    %195 = vector.load %arg26[%c0_79, %c0_80] : memref<10x32xf32, #tpu.memory_space<vmem>>, vector<10x32xf32>
    tpu.vector_store %arg26[%c0_79, %c0_80], %194 {strides = array<i32>} : memref<10x32xf32, #tpu.memory_space<vmem>>, vector<10x32xf32>,
    %c1_i32 = arith.constant 1 : i32
    %196 = arith.cmpi eq, %arg0, %c1_i32 : i32
    %197 = arith.extui %196 : i1 to i32
    %c0_i32_81 = arith.constant 0 : i32
    %198 = arith.cmpi ne, %197, %c0_i32_81 : i32
    scf.if %198 {
      %199 = vector.extract_strided_slice %194 {offsets = [0, 0], sizes = [1, 32], strides = [1, 1]} : vector<10x32xf32> to vector<1x32xf32>
      %200 = vector.extract_strided_slice %194 {offsets = [5, 0], sizes = [1, 32], strides = [1, 1]} : vector<10x32xf32> to vector<1x32xf32>
      %201 = tpu.concatenate %199, %200 in 0 : vector<1x32xf32>, vector<1x32xf32> -> vector<2x32xf32>
      %c0_82 = arith.constant 0 : index
      %c0_83 = arith.constant 0 : index
      %202 = vector.load %arg21[%c0_82, %c0_83] : memref<1x32xf32, #tpu.memory_space<vmem>>, vector<1x32xf32>
      %c0_84 = arith.constant 0 : index
      %c0_85 = arith.constant 0 : index
      %203 = vector.load %arg22[%c0_84, %c0_85] : memref<1x32xf32, #tpu.memory_space<vmem>>, vector<1x32xf32>
      %cst_86 = arith.constant dense<0.000000e+00> : vector<2xf32>
      %204 = vector.multi_reduction <add>, %201, %cst_86 [1] : vector<2x32xf32> to vector<2xf32>
      %205 = vector.shape_cast %204 : vector<2xf32> to vector<2x1xf32>
      %cst_87 = arith.constant 3.200000e+01 : f32
      %206 = vector.broadcast %cst_87 : f32 to vector<2x1xf32>
      %207 = arith.divf %205, %206 : vector<2x1xf32>
      %208 = vector.broadcast %207 : vector<2x1xf32> to vector<2x32xf32>
      %209 = arith.subf %201, %208 : vector<2x32xf32>
      %210 = arith.mulf %209, %209 : vector<2x32xf32>
      %cst_88 = arith.constant dense<0.000000e+00> : vector<2xf32>
      %211 = vector.multi_reduction <add>, %210, %cst_88 [1] : vector<2x32xf32> to vector<2xf32>
      %212 = vector.shape_cast %211 : vector<2xf32> to vector<2x1xf32>
      %cst_89 = arith.constant 3.200000e+01 : f32
      %213 = vector.broadcast %cst_89 : f32 to vector<2x1xf32>
      %214 = arith.divf %212, %213 : vector<2x1xf32>
      %215 = vector.broadcast %207 : vector<2x1xf32> to vector<2x32xf32>
      %216 = arith.subf %201, %215 : vector<2x32xf32>
      %cst_90 = arith.constant 9.99999974E-6 : f32
      %217 = vector.broadcast %cst_90 : f32 to vector<2x1xf32>
      %218 = arith.addf %214, %217 : vector<2x1xf32>
      %219 = math.rsqrt %218 : vector<2x1xf32>
      %220 = vector.broadcast %219 : vector<2x1xf32> to vector<2x32xf32>
      %221 = arith.mulf %216, %220 : vector<2x32xf32>
      %222 = vector.broadcast %202 : vector<1x32xf32> to vector<2x32xf32>
      %223 = arith.mulf %221, %222 : vector<2x32xf32>
      %224 = vector.broadcast %203 : vector<1x32xf32> to vector<2x32xf32>
      %225 = arith.addf %223, %224 : vector<2x32xf32>
      %226 = arith.truncf %225 : vector<2x32xf32> to vector<2x32xbf16>
      %c0_91 = arith.constant 0 : index
      %c0_92 = arith.constant 0 : index
      %227 = vector.load %arg23[%c0_91, %c0_92] : memref<32x10xbf16, #tpu.memory_space<vmem>>, vector<32x10xbf16>
      %cst_93 = arith.constant dense<0.000000e+00> : vector<2x10xf32>
      %228 = tpu.matmul %226, %227, %cst_93 {dimension_numbers = #tpu.dot_dimension_numbers<[1], [0], [0], [1], [0, 0, 1, 1], [], []>} : vector<2x32xbf16>, vector<32x10xbf16>, vector<2x10xf32> -> vector<2x10xf32>
      %c0_94 = arith.constant 0 : index
      %c0_95 = arith.constant 0 : index
      %229 = vector.load %arg24[%c0_94, %c0_95] : memref<1x10xf32, #tpu.memory_space<vmem>>, vector<1x10xf32>
      %230 = vector.broadcast %229 : vector<1x10xf32> to vector<2x10xf32>
      %231 = arith.addf %228, %230 : vector<2x10xf32>
      %cst_96 = arith.constant dense<0xFF800000> : vector<2xf32>
      %232 = vector.multi_reduction <maximumf>, %231, %cst_96 [1] : vector<2x10xf32> to vector<2xf32>
      %233 = vector.shape_cast %232 : vector<2xf32> to vector<2x1xf32>
      %234 = vector.broadcast %233 : vector<2x1xf32> to vector<2x10xf32>
      %235 = arith.subf %231, %234 : vector<2x10xf32>
      %236 = math.exp %235 : vector<2x10xf32>
      %cst_97 = arith.constant dense<0.000000e+00> : vector<2xf32>
      %237 = vector.multi_reduction <add>, %236, %cst_97 [1] : vector<2x10xf32> to vector<2xf32>
      %238 = vector.shape_cast %237 : vector<2xf32> to vector<2x1xf32>
      %239 = math.log %238 : vector<2x1xf32>
      %240 = vector.broadcast %239 : vector<2x1xf32> to vector<2x10xf32>
      %241 = arith.subf %235, %240 : vector<2x10xf32>
      %c0_98 = arith.constant 0 : index
      %c0_99 = arith.constant 0 : index
      %242 = vector.load %arg25[%c0_98, %c0_99] : memref<2x10xf32, #tpu.memory_space<vmem>>, vector<2x10xf32>
      tpu.vector_store %arg25[%c0_98, %c0_99], %241 {strides = array<i32>} : memref<2x10xf32, #tpu.memory_space<vmem>>, vector<2x10xf32>,
    } else {
    }
    return
  }
  func.func @transform_0(%arg0: i32) -> (i32, i32) {
    %c0_i32 = arith.constant 0 : i32
    %c0_i32_0 = arith.constant 0 : i32
    %c0_i32_1 = arith.constant 0 : i32
    return %c0_i32, %c0_i32_0 : i32, i32
  }
  func.func @transform_1(%arg0: i32) -> (i32, i32) {
    %c0_i32 = arith.constant 0 : i32
    %c0_i32_0 = arith.constant 0 : i32
    %c0_i32_1 = arith.constant 0 : i32
    return %c0_i32, %c0_i32_0 : i32, i32
  }
  func.func @transform_2(%arg0: i32) -> (i32, i32) {
    %c0_i32 = arith.constant 0 : i32
    %c0_i32_0 = arith.constant 0 : i32
    %c0_i32_1 = arith.constant 0 : i32
    return %c0_i32, %c0_i32_0 : i32, i32
  }
  func.func @transform_3(%arg0: i32) -> (i32, i32) {
    %c0_i32 = arith.constant 0 : i32
    %c0_i32_0 = arith.constant 0 : i32
    %c0_i32_1 = arith.constant 0 : i32
    return %c0_i32, %c0_i32_0 : i32, i32
  }
  func.func @transform_4(%arg0: i32) -> (i32, i32) {
    %c0_i32 = arith.constant 0 : i32
    %c0_i32_0 = arith.constant 0 : i32
    %c0_i32_1 = arith.constant 0 : i32
    return %c0_i32, %c0_i32_0 : i32, i32
  }
  func.func @transform_5(%arg0: i32) -> (i32, i32) {
    %c0_i32 = arith.constant 0 : i32
    %c0_i32_0 = arith.constant 0 : i32
    %c0_i32_1 = arith.constant 0 : i32
    return %c0_i32, %c0_i32_0 : i32, i32
  }
  func.func @transform_6(%arg0: i32) -> (i32, i32) {
    %c0_i32 = arith.constant 0 : i32
    %c0_i32_0 = arith.constant 0 : i32
    %c0_i32_1 = arith.constant 0 : i32
    return %c0_i32, %c0_i32_0 : i32, i32
  }
  func.func @transform_7(%arg0: i32) -> (i32, i32) {
    %c0_i32 = arith.constant 0 : i32
    %c0_i32_0 = arith.constant 0 : i32
    %c0_i32_1 = arith.constant 0 : i32
    return %c0_i32, %c0_i32_0 : i32, i32
  }
  func.func @transform_8(%arg0: i32) -> (i32, i32) {
    %c0_i32 = arith.constant 0 : i32
    %c0_i32_0 = arith.constant 0 : i32
    %c0_i32_1 = arith.constant 0 : i32
    return %c0_i32, %c0_i32_0 : i32, i32
  }
  func.func @transform_9(%arg0: i32) -> (i32, i32, i32) {
    %c0_i32 = arith.constant 0 : i32
    %c0_i32_0 = arith.constant 0 : i32
    %c0_i32_1 = arith.constant 0 : i32
    return %arg0, %c0_i32, %c0_i32_0 : i32, i32, i32
  }
  func.func @transform_10(%arg0: i32) -> (i32, i32, i32) {
    %c0_i32 = arith.constant 0 : i32
    %c0_i32_0 = arith.constant 0 : i32
    %c0_i32_1 = arith.constant 0 : i32
    return %arg0, %c0_i32, %c0_i32_0 : i32, i32, i32
  }
  func.func @transform_11(%arg0: i32) -> (i32, i32, i32) {
    %c0_i32 = arith.constant 0 : i32
    %c0_i32_0 = arith.constant 0 : i32
    %c0_i32_1 = arith.constant 0 : i32
    return %arg0, %c0_i32, %c0_i32_0 : i32, i32, i32
  }
  func.func @transform_12(%arg0: i32) -> (i32, i32, i32) {
    %c0_i32 = arith.constant 0 : i32
    %c0_i32_0 = arith.constant 0 : i32
    %c0_i32_1 = arith.constant 0 : i32
    return %arg0, %c0_i32, %c0_i32_0 : i32, i32, i32
  }
  func.func @transform_13(%arg0: i32) -> (i32, i32, i32) {
    %c0_i32 = arith.constant 0 : i32
    %c0_i32_0 = arith.constant 0 : i32
    %c0_i32_1 = arith.constant 0 : i32
    return %arg0, %c0_i32, %c0_i32_0 : i32, i32, i32
  }
  func.func @transform_14(%arg0: i32) -> (i32, i32, i32) {
    %c0_i32 = arith.constant 0 : i32
    %c0_i32_0 = arith.constant 0 : i32
    %c0_i32_1 = arith.constant 0 : i32
    return %arg0, %c0_i32, %c0_i32_0 : i32, i32, i32
  }
  func.func @transform_15(%arg0: i32) -> (i32, i32, i32) {
    %c0_i32 = arith.constant 0 : i32
    %c0_i32_0 = arith.constant 0 : i32
    %c0_i32_1 = arith.constant 0 : i32
    return %arg0, %c0_i32, %c0_i32_0 : i32, i32, i32
  }
  func.func @transform_16(%arg0: i32) -> (i32, i32, i32) {
    %c0_i32 = arith.constant 0 : i32
    %c0_i32_0 = arith.constant 0 : i32
    %c0_i32_1 = arith.constant 0 : i32
    return %arg0, %c0_i32, %c0_i32_0 : i32, i32, i32
  }
  func.func @transform_17(%arg0: i32) -> (i32, i32, i32) {
    %c0_i32 = arith.constant 0 : i32
    %c0_i32_0 = arith.constant 0 : i32
    %c0_i32_1 = arith.constant 0 : i32
    return %arg0, %c0_i32, %c0_i32_0 : i32, i32, i32
  }
  func.func @transform_18(%arg0: i32) -> (i32, i32, i32) {
    %c0_i32 = arith.constant 0 : i32
    %c0_i32_0 = arith.constant 0 : i32
    %c0_i32_1 = arith.constant 0 : i32
    return %arg0, %c0_i32, %c0_i32_0 : i32, i32, i32
  }
  func.func @transform_19(%arg0: i32) -> (i32, i32, i32) {
    %c0_i32 = arith.constant 0 : i32
    %c0_i32_0 = arith.constant 0 : i32
    %c0_i32_1 = arith.constant 0 : i32
    return %arg0, %c0_i32, %c0_i32_0 : i32, i32, i32
  }
  func.func @transform_20(%arg0: i32) -> (i32, i32) {
    %c0_i32 = arith.constant 0 : i32
    %c0_i32_0 = arith.constant 0 : i32
    %c0_i32_1 = arith.constant 0 : i32
    return %c0_i32, %c0_i32_0 : i32, i32
  }
  func.func @transform_21(%arg0: i32) -> (i32, i32) {
    %c0_i32 = arith.constant 0 : i32
    %c0_i32_0 = arith.constant 0 : i32
    %c0_i32_1 = arith.constant 0 : i32
    return %c0_i32, %c0_i32_0 : i32, i32
  }
  func.func @transform_22(%arg0: i32) -> (i32, i32) {
    %c0_i32 = arith.constant 0 : i32
    %c0_i32_0 = arith.constant 0 : i32
    %c0_i32_1 = arith.constant 0 : i32
    return %c0_i32, %c0_i32_0 : i32, i32
  }
  func.func @transform_23(%arg0: i32) -> (i32, i32) {
    %c0_i32 = arith.constant 0 : i32
    %c0_i32_0 = arith.constant 0 : i32
    %c0_i32_1 = arith.constant 0 : i32
    return %c0_i32, %c0_i32_0 : i32, i32
  }
  func.func @transform_24(%arg0: i32) -> (i32, i32) {
    %c0_i32 = arith.constant 0 : i32
    %c0_i32_0 = arith.constant 0 : i32
    %c0_i32_1 = arith.constant 0 : i32
    return %c0_i32, %c0_i32_0 : i32, i32
  }
}

</mosaic_0001>

<llo_original>
// kernel: transformer_net_forward.1
$region0: #{transformer_net_forward.1}
  #allocation0 [shape = 'u32[]', space=smem, size = 0x4, offset = 0x4, fixed_abs, tag = 'smem constant byte address 0x4 - core index']
  #allocation1 [shape = 'u32[144,128]{1,0:T(1,128)}', space=vmem, size = 0x12000, scoped, tag = 'internal scratch']
  #allocation2 [shape = 'f32[10,32]{1,0:T(8,128)}', space=vmem, size = 0x2000, scoped, tag = 'scratch operand']
  %s0 = inlined_call_operand.vmem [shape: f32[8,256], index: 0, kind: input, shape index: {}]
  %s1 = inlined_call_operand.vmem [shape: f32[1,256], index: 1, kind: input, shape index: {}]
  %s2 = inlined_call_operand.vmem [shape: f32[1,256], index: 2, kind: input, shape index: {}]
  %s3 = inlined_call_operand.vmem [shape: bf16[256,32], index: 3, kind: input, shape index: {}]
  %s4 = inlined_call_operand.vmem [shape: f32[1,32], index: 4, kind: input, shape index: {}]
  %s5 = inlined_call_operand.vmem [shape: f32[1,32], index: 5, kind: input, shape index: {}]
  %s6 = inlined_call_operand.vmem [shape: f32[1,32], index: 6, kind: input, shape index: {}]
  %s7 = inlined_call_operand.vmem [shape: f32[1,32], index: 7, kind: input, shape index: {}]
  %s8 = inlined_call_operand.vmem [shape: f32[5,32], index: 8, kind: input, shape index: {}]
  %s9 = inlined_call_operand.vmem [shape: f32[2,1,32], index: 9, kind: input, shape index: {}]
  %s10 = inlined_call_operand.vmem [shape: f32[2,1,32], index: 10, kind: input, shape index: {}]
  %s11 = inlined_call_operand.vmem [shape: bf16[2,32,192], index: 11, kind: input, shape index: {}]
  %s12 = inlined_call_operand.vmem [shape: bf16[2,64,32], index: 12, kind: input, shape index: {}]
  %s13 = inlined_call_operand.vmem [shape: f32[2,1,32], index: 13, kind: input, shape index: {}]
  %s14 = inlined_call_operand.vmem [shape: f32[2,1,32], index: 14, kind: input, shape index: {}]
  %s15 = inlined_call_operand.vmem [shape: f32[2,1,32], index: 15, kind: input, shape index: {}]
  %s16 = inlined_call_operand.vmem [shape: bf16[2,32,64], index: 16, kind: input, shape index: {}]
  %s17 = inlined_call_operand.vmem [shape: f32[2,1,64], index: 17, kind: input, shape index: {}]
  %s18 = inlined_call_operand.vmem [shape: bf16[2,64,32], index: 18, kind: input, shape index: {}]
  %s19 = inlined_call_operand.vmem [shape: f32[2,1,32], index: 19, kind: input, shape index: {}]
  %s20 = inlined_call_operand.vmem [shape: f32[1,32], index: 20, kind: input, shape index: {}]
  %s21 = inlined_call_operand.vmem [shape: f32[1,32], index: 21, kind: input, shape index: {}]
  %s22 = inlined_call_operand.vmem [shape: bf16[32,10], index: 22, kind: input, shape index: {}]
  %s23 = inlined_call_operand.vmem [shape: f32[1,10], index: 23, kind: input, shape index: {}]
  %s24 = inlined_call_operand.hbm [shape: f32[2,10], index: 24, kind: output, shape index: {}]
  %s25 = sld [smem:[#allocation0]]
  $region137: #{transformer_net_forward.1} parent=0
    _
  %s27 = ssub.s32 1, %s25
  %s28 = scalar_select 0, %s27, %s25
  $region1: #{transformer_net_forward.1} parent=0
    #allocation3 [shape = 'u8[1024]{0}', space=vmem, size = 0x400, scoped, tag = 'output window, operand 0, single buffered']
    #allocation4 [shape = 's32[2]{0}', space=sflag, size = 0x8, scoped, tag = 'scoped memory for transformer_net_forward.1']
    %29 = vsyncpa [#allocation4], 0
    loop: start=0, step=1, limit=4
    $region2: #{transformer_net_forward.1} parent=1 // loop_pre_header
      _
    $region3: #{transformer_net_forward.1} parent=1 // loop_header
      %s31 = sphi 0, %s35
      %p32 = scmp.ge.s32.totalorder %s31, 4
      %s39 = sphi 0, %s39
      %s41 = sphi 0, %s39
      %s42 = sphi 0, %s41
      %s56 = sphi 0, %s42
      %s60 = sphi 0, %s60
      %s62 = sphi 0, %s60
      %s63 = sphi 0, %s62
      %s77 = sphi 0, %s63
      %s81 = sphi 0, %s81
      %s83 = sphi 0, %s81
      %s84 = sphi 0, %s83
      %s98 = sphi 0, %s84
      %s102 = sphi 0, %s102
      %s104 = sphi 0, %s102
      %s105 = sphi 0, %s104
      %s119 = sphi 0, %s105
      %s123 = sphi 0, %s123
      %s125 = sphi 0, %s123
      %s126 = sphi 0, %s125
      %s140 = sphi 0, %s126
      %s144 = sphi 0, %s144
      %s146 = sphi 0, %s144
      %s147 = sphi 0, %s146
      %s161 = sphi 0, %s147
      %s165 = sphi 0, %s165
      %s167 = sphi 0, %s165
      %s168 = sphi 0, %s167
      %s182 = sphi 0, %s168
      %s186 = sphi 0, %s186
      %s188 = sphi 0, %s186
      %s189 = sphi 0, %s188
      %s203 = sphi 0, %s189
      %s207 = sphi 0, %s207
      %s209 = sphi 0, %s207
      %s210 = sphi 0, %s209
      %s224 = sphi 0, %s210
      %s230 = sphi 0, %s232
      %s233 = sphi 0, %s230
      %s234 = sphi 0, %s233
      %s250 = sphi 0, %s234
      %s256 = sphi 0, %s258
      %s259 = sphi 0, %s256
      %s260 = sphi 0, %s259
      %s276 = sphi 0, %s260
      %s282 = sphi 0, %s284
      %s285 = sphi 0, %s282
      %s286 = sphi 0, %s285
      %s302 = sphi 0, %s286
      %s308 = sphi 0, %s310
      %s311 = sphi 0, %s308
      %s312 = sphi 0, %s311
      %s328 = sphi 0, %s312
      %s334 = sphi 0, %s336
      %s337 = sphi 0, %s334
      %s338 = sphi 0, %s337
      %s354 = sphi 0, %s338
      %s360 = sphi 0, %s362
      %s363 = sphi 0, %s360
      %s364 = sphi 0, %s363
      %s380 = sphi 0, %s364
      %s386 = sphi 0, %s388
      %s389 = sphi 0, %s386
      %s390 = sphi 0, %s389
      %s406 = sphi 0, %s390
      %s412 = sphi 0, %s414
      %s415 = sphi 0, %s412
      %s416 = sphi 0, %s415
      %s432 = sphi 0, %s416
      %s438 = sphi 0, %s440
      %s441 = sphi 0, %s438
      %s442 = sphi 0, %s441
      %s458 = sphi 0, %s442
      %s464 = sphi 0, %s466
      %s467 = sphi 0, %s464
      %s468 = sphi 0, %s467
      %s484 = sphi 0, %s468
      %s490 = sphi 0, %s492
      %s493 = sphi 0, %s490
      %s494 = sphi 0, %s493
      %s510 = sphi 0, %s494
      %s514 = sphi 0, %s514
      %s516 = sphi 0, %s514
      %s517 = sphi 0, %s516
      %s531 = sphi 0, %s517
      %s535 = sphi 0, %s535
      %s537 = sphi 0, %s535
      %s538 = sphi 0, %s537
      %s552 = sphi 0, %s538
      %s556 = sphi 0, %s556
      %s558 = sphi 0, %s556
      %s559 = sphi 0, %s558
      %s573 = sphi 0, %s559
      %s577 = sphi 0, %s577
      %s579 = sphi 0, %s577
      %s580 = sphi 0, %s579
      %s594 = sphi 0, %s580
      %s598 = sphi 0, %s598
      %s600 = sphi 0, %s598
      %s601 = sphi 0, %s600
      %s615 = sphi 0, %s601
    $region4: #{transformer_net_forward.1} parent=1 // loop_header_branch
      %34 = sbr.rel (%p32) target = $region8
    $region5: #{transformer_net_forward.1} parent=1 // loop_body
      %s36 = ssub.s32 %s31, 1
      %s37 = ssub.s32 %s31, 2
      %s38 = sadd.s32 %s31, 1
      %s40 = sadd.s32 %s39, 1
      %p43 = scmp.eq.s32.totalorder %s31, 1
      %p44 = scmp.ne.s32.totalorder %s39, %s41
      %p45 = scmp.eq.s32.totalorder %s31, 0
      %p46 = por %p44, %p45
      %p47 = scmp.ne.s32.totalorder %s39, %s41
      %p48 = scmp.eq.s32.totalorder %s36, 1
      %p49 = por %p47, %p48
      %p50 = scmp.ne.s32.totalorder %s41, %s42
      %p51 = scmp.eq.s32.totalorder %s36, 0
      %p52 = por %p50, %p51
      %p53 = scmp.ne.s32.totalorder %s41, %s42
      %p54 = scmp.eq.s32.totalorder %s37, 1
      %p55 = por %p53, %p54
      %p57 = scmp.ne.s32.totalorder %s42, %s56
      %p58 = scmp.eq.s32.totalorder %s37, 0
      %p59 = por %p57, %p58
      %s61 = sadd.s32 %s60, 1
      %p64 = scmp.eq.s32.totalorder %s31, 1
      %p65 = scmp.ne.s32.totalorder %s60, %s62
      %p66 = scmp.eq.s32.totalorder %s31, 0
      %p67 = por %p65, %p66
      %p68 = scmp.ne.s32.totalorder %s60, %s62
      %p69 = scmp.eq.s32.totalorder %s36, 1
      %p70 = por %p68, %p69
      %p71 = scmp.ne.s32.totalorder %s62, %s63
      %p72 = scmp.eq.s32.totalorder %s36, 0
      %p73 = por %p71, %p72
      %p74 = scmp.ne.s32.totalorder %s62, %s63
      %p75 = scmp.eq.s32.totalorder %s37, 1
      %p76 = por %p74, %p75
      %p78 = scmp.ne.s32.totalorder %s63, %s77
      %p79 = scmp.eq.s32.totalorder %s37, 0
      %p80 = por %p78, %p79
      %s82 = sadd.s32 %s81, 1
      %p85 = scmp.eq.s32.totalorder %s31, 1
      %p86 = scmp.ne.s32.totalorder %s81, %s83
      %p87 = scmp.eq.s32.totalorder %s31, 0
      %p88 = por %p86, %p87
      %p89 = scmp.ne.s32.totalorder %s81, %s83
      %p90 = scmp.eq.s32.totalorder %s36, 1
      %p91 = por %p89, %p90
      %p92 = scmp.ne.s32.totalorder %s83, %s84
      %p93 = scmp.eq.s32.totalorder %s36, 0
      %p94 = por %p92, %p93
      %p95 = scmp.ne.s32.totalorder %s83, %s84
      %p96 = scmp.eq.s32.totalorder %s37, 1
      %p97 = por %p95, %p96
      %p99 = scmp.ne.s32.totalorder %s84, %s98
      %p100 = scmp.eq.s32.totalorder %s37, 0
      %p101 = por %p99, %p100
      %s103 = sadd.s32 %s102, 1
      %p106 = scmp.eq.s32.totalorder %s31, 1
      %p107 = scmp.ne.s32.totalorder %s102, %s104
      %p108 = scmp.eq.s32.totalorder %s31, 0
      %p109 = por %p107, %p108
      %p110 = scmp.ne.s32.totalorder %s102, %s104
      %p111 = scmp.eq.s32.totalorder %s36, 1
      %p112 = por %p110, %p111
      %p113 = scmp.ne.s32.totalorder %s104, %s105
      %p114 = scmp.eq.s32.totalorder %s36, 0
      %p115 = por %p113, %p114
      %p116 = scmp.ne.s32.totalorder %s104, %s105
      %p117 = scmp.eq.s32.totalorder %s37, 1
      %p118 = por %p116, %p117
      %p120 = scmp.ne.s32.totalorder %s105, %s119
      %p121 = scmp.eq.s32.totalorder %s37, 0
      %p122 = por %p120, %p121
      %s124 = sadd.s32 %s123, 1
      %p127 = scmp.eq.s32.totalorder %s31, 1
      %p128 = scmp.ne.s32.totalorder %s123, %s125
      %p129 = scmp.eq.s32.totalorder %s31, 0
      %p130 = por %p128, %p129
      %p131 = scmp.ne.s32.totalorder %s123, %s125
      %p132 = scmp.eq.s32.totalorder %s36, 1
      %p133 = por %p131, %p132
      %p134 = scmp.ne.s32.totalorder %s125, %s126
      %p135 = scmp.eq.s32.totalorder %s36, 0
      %p136 = por %p134, %p135
      %p137 = scmp.ne.s32.totalorder %s125, %s126
      %p138 = scmp.eq.s32.totalorder %s37, 1
      %p139 = por %p137, %p138
      %p141 = scmp.ne.s32.totalorder %s126, %s140
      %p142 = scmp.eq.s32.totalorder %s37, 0
      %p143 = por %p141, %p142
      %s145 = sadd.s32 %s144, 1
      %p148 = scmp.eq.s32.totalorder %s31, 1
      %p149 = scmp.ne.s32.totalorder %s144, %s146
      %p150 = scmp.eq.s32.totalorder %s31, 0
      %p151 = por %p149, %p150
      %p152 = scmp.ne.s32.totalorder %s144, %s146
      %p153 = scmp.eq.s32.totalorder %s36, 1
      %p154 = por %p152, %p153
      %p155 = scmp.ne.s32.totalorder %s146, %s147
      %p156 = scmp.eq.s32.totalorder %s36, 0
      %p157 = por %p155, %p156
      %p158 = scmp.ne.s32.totalorder %s146, %s147
      %p159 = scmp.eq.s32.totalorder %s37, 1
      %p160 = por %p158, %p159
      %p162 = scmp.ne.s32.totalorder %s147, %s161
      %p163 = scmp.eq.s32.totalorder %s37, 0
      %p164 = por %p162, %p163
      %s166 = sadd.s32 %s165, 1
      %p169 = scmp.eq.s32.totalorder %s31, 1
      %p170 = scmp.ne.s32.totalorder %s165, %s167
      %p171 = scmp.eq.s32.totalorder %s31, 0
      %p172 = por %p170, %p171
      %p173 = scmp.ne.s32.totalorder %s165, %s167
      %p174 = scmp.eq.s32.totalorder %s36, 1
      %p175 = por %p173, %p174
      %p176 = scmp.ne.s32.totalorder %s167, %s168
      %p177 = scmp.eq.s32.totalorder %s36, 0
      %p178 = por %p176, %p177
      %p179 = scmp.ne.s32.totalorder %s167, %s168
      %p180 = scmp.eq.s32.totalorder %s37, 1
      %p181 = por %p179, %p180
      %p183 = scmp.ne.s32.totalorder %s168, %s182
      %p184 = scmp.eq.s32.totalorder %s37, 0
      %p185 = por %p183, %p184
      %s187 = sadd.s32 %s186, 1
      %p190 = scmp.eq.s32.totalorder %s31, 1
      %p191 = scmp.ne.s32.totalorder %s186, %s188
      %p192 = scmp.eq.s32.totalorder %s31, 0
      %p193 = por %p191, %p192
      %p194 = scmp.ne.s32.totalorder %s186, %s188
      %p195 = scmp.eq.s32.totalorder %s36, 1
      %p196 = por %p194, %p195
      %p197 = scmp.ne.s32.totalorder %s188, %s189
      %p198 = scmp.eq.s32.totalorder %s36, 0
      %p199 = por %p197, %p198
      %p200 = scmp.ne.s32.totalorder %s188, %s189
      %p201 = scmp.eq.s32.totalorder %s37, 1
      %p202 = por %p200, %p201
      %p204 = scmp.ne.s32.totalorder %s189, %s203
      %p205 = scmp.eq.s32.totalorder %s37, 0
      %p206 = por %p204, %p205
      %s208 = sadd.s32 %s207, 1
      %p211 = scmp.eq.s32.totalorder %s31, 1
      %p212 = scmp.ne.s32.totalorder %s207, %s209
      %p213 = scmp.eq.s32.totalorder %s31, 0
      %p214 = por %p212, %p213
      %p215 = scmp.ne.s32.totalorder %s207, %s209
      %p216 = scmp.eq.s32.totalorder %s36, 1
      %p217 = por %p215, %p216
      %p218 = scmp.ne.s32.totalorder %s209, %s210
      %p219 = scmp.eq.s32.totalorder %s36, 0
      %p220 = por %p218, %p219
      %p221 = scmp.ne.s32.totalorder %s209, %s210
      %p222 = scmp.eq.s32.totalorder %s37, 1
      %p223 = por %p221, %p222
      %p225 = scmp.ne.s32.totalorder %s210, %s224
      %p226 = scmp.eq.s32.totalorder %s37, 0
      %p227 = por %p225, %p226
      %s228 = ssub.s32 %s31, %s38
      %p229 = scmp.eq.s32.totalorder %s228, 0
      %s231 = sadd.s32 %s230, 1
      %s232 = scalar_select %p229, %s230, %s231
      %p235 = pneg %p229
      %p236 = scmp.eq.s32.totalorder %s31, 1
      %p237 = por %p235, %p236
      %p238 = scmp.ne.s32.totalorder %s230, %s233
      %p239 = scmp.eq.s32.totalorder %s31, 0
      %p240 = por %p238, %p239
      %p241 = scmp.ne.s32.totalorder %s230, %s233
      %p242 = scmp.eq.s32.totalorder %s36, 1
      %p243 = por %p241, %p242
      %p244 = scmp.ne.s32.totalorder %s233, %s234
      %p245 = scmp.eq.s32.totalorder %s36, 0
      %p246 = por %p244, %p245
      %p247 = scmp.ne.s32.totalorder %s233, %s234
      %p248 = scmp.eq.s32.totalorder %s37, 1
      %p249 = por %p247, %p248
      %p251 = scmp.ne.s32.totalorder %s234, %s250
      %p252 = scmp.eq.s32.totalorder %s37, 0
      %p253 = por %p251, %p252
      %s254 = ssub.s32 %s31, %s38
      %p255 = scmp.eq.s32.totalorder %s254, 0
      %s257 = sadd.s32 %s256, 1
      %s258 = scalar_select %p255, %s256, %s257
      %p261 = pneg %p255
      %p262 = scmp.eq.s32.totalorder %s31, 1
      %p263 = por %p261, %p262
      %p264 = scmp.ne.s32.totalorder %s256, %s259
      %p265 = scmp.eq.s32.totalorder %s31, 0
      %p266 = por %p264, %p265
      %p267 = scmp.ne.s32.totalorder %s256, %s259
      %p268 = scmp.eq.s32.totalorder %s36, 1
      %p269 = por %p267, %p268
      %p270 = scmp.ne.s32.totalorder %s259, %s260
      %p271 = scmp.eq.s32.totalorder %s36, 0
      %p272 = por %p270, %p271
      %p273 = scmp.ne.s32.totalorder %s259, %s260
      %p274 = scmp.eq.s32.totalorder %s37, 1
      %p275 = por %p273, %p274
      %p277 = scmp.ne.s32.totalorder %s260, %s276
      %p278 = scmp.eq.s32.totalorder %s37, 0
      %p279 = por %p277, %p278
      %s280 = ssub.s32 %s31, %s38
      %p281 = scmp.eq.s32.totalorder %s280, 0
      %s283 = sadd.s32 %s282, 1
      %s284 = scalar_select %p281, %s282, %s283
      %p287 = pneg %p281
      %p288 = scmp.eq.s32.totalorder %s31, 1
      %p289 = por %p287, %p288
      %p290 = scmp.ne.s32.totalorder %s282, %s285
      %p291 = scmp.eq.s32.totalorder %s31, 0
      %p292 = por %p290, %p291
      %p293 = scmp.ne.s32.totalorder %s282, %s285
      %p294 = scmp.eq.s32.totalorder %s36, 1
      %p295 = por %p293, %p294
      %p296 = scmp.ne.s32.totalorder %s285, %s286
      %p297 = scmp.eq.s32.totalorder %s36, 0
      %p298 = por %p296, %p297
      %p299 = scmp.ne.s32.totalorder %s285, %s286
      %p300 = scmp.eq.s32.totalorder %s37, 1
      %p301 = por %p299, %p300
      %p303 = scmp.ne.s32.totalorder %s286, %s302
      %p304 = scmp.eq.s32.totalorder %s37, 0
      %p305 = por %p303, %p304
      %s306 = ssub.s32 %s31, %s38
      %p307 = scmp.eq.s32.totalorder %s306, 0
      %s309 = sadd.s32 %s308, 1
      %s310 = scalar_select %p307, %s308, %s309
      %p313 = pneg %p307
      %p314 = scmp.eq.s32.totalorder %s31, 1
      %p315 = por %p313, %p314
      %p316 = scmp.ne.s32.totalorder %s308, %s311
      %p317 = scmp.eq.s32.totalorder %s31, 0
      %p318 = por %p316, %p317
      %p319 = scmp.ne.s32.totalorder %s308, %s311
      %p320 = scmp.eq.s32.totalorder %s36, 1
      %p321 = por %p319, %p320
      %p322 = scmp.ne.s32.totalorder %s311, %s312
      %p323 = scmp.eq.s32.totalorder %s36, 0
      %p324 = por %p322, %p323
      %p325 = scmp.ne.s32.totalorder %s311, %s312
      %p326 = scmp.eq.s32.totalorder %s37, 1
      %p327 = por %p325, %p326
      %p329 = scmp.ne.s32.totalorder %s312, %s328
      %p330 = scmp.eq.s32.totalorder %s37, 0
      %p331 = por %p329, %p330
      %s332 = ssub.s32 %s31, %s38
      %p333 = scmp.eq.s32.totalorder %s332, 0
      %s335 = sadd.s32 %s334, 1
      %s336 = scalar_select %p333, %s334, %s335
      %p339 = pneg %p333
      %p340 = scmp.eq.s32.totalorder %s31, 1
      %p341 = por %p339, %p340
      %p342 = scmp.ne.s32.totalorder %s334, %s337
      %p343 = scmp.eq.s32.totalorder %s31, 0
      %p344 = por %p342, %p343
      %p345 = scmp.ne.s32.totalorder %s334, %s337
      %p346 = scmp.eq.s32.totalorder %s36, 1
      %p347 = por %p345, %p346
      %p348 = scmp.ne.s32.totalorder %s337, %s338
      %p349 = scmp.eq.s32.totalorder %s36, 0
      %p350 = por %p348, %p349
      %p351 = scmp.ne.s32.totalorder %s337, %s338
      %p352 = scmp.eq.s32.totalorder %s37, 1
      %p353 = por %p351, %p352
      %p355 = scmp.ne.s32.totalorder %s338, %s354
      %p356 = scmp.eq.s32.totalorder %s37, 0
      %p357 = por %p355, %p356
      %s358 = ssub.s32 %s31, %s38
      %p359 = scmp.eq.s32.totalorder %s358, 0
      %s361 = sadd.s32 %s360, 1
      %s362 = scalar_select %p359, %s360, %s361
      %p365 = pneg %p359
      %p366 = scmp.eq.s32.totalorder %s31, 1
      %p367 = por %p365, %p366
      %p368 = scmp.ne.s32.totalorder %s360, %s363
      %p369 = scmp.eq.s32.totalorder %s31, 0
      %p370 = por %p368, %p369
      %p371 = scmp.ne.s32.totalorder %s360, %s363
      %p372 = scmp.eq.s32.totalorder %s36, 1
      %p373 = por %p371, %p372
      %p374 = scmp.ne.s32.totalorder %s363, %s364
      %p375 = scmp.eq.s32.totalorder %s36, 0
      %p376 = por %p374, %p375
      %p377 = scmp.ne.s32.totalorder %s363, %s364
      %p378 = scmp.eq.s32.totalorder %s37, 1
      %p379 = por %p377, %p378
      %p381 = scmp.ne.s32.totalorder %s364, %s380
      %p382 = scmp.eq.s32.totalorder %s37, 0
      %p383 = por %p381, %p382
      %s384 = ssub.s32 %s31, %s38
      %p385 = scmp.eq.s32.totalorder %s384, 0
      %s387 = sadd.s32 %s386, 1
      %s388 = scalar_select %p385, %s386, %s387
      %p391 = pneg %p385
      %p392 = scmp.eq.s32.totalorder %s31, 1
      %p393 = por %p391, %p392
      %p394 = scmp.ne.s32.totalorder %s386, %s389
      %p395 = scmp.eq.s32.totalorder %s31, 0
      %p396 = por %p394, %p395
      %p397 = scmp.ne.s32.totalorder %s386, %s389
      %p398 = scmp.eq.s32.totalorder %s36, 1
      %p399 = por %p397, %p398
      %p400 = scmp.ne.s32.totalorder %s389, %s390
      %p401 = scmp.eq.s32.totalorder %s36, 0
      %p402 = por %p400, %p401
      %p403 = scmp.ne.s32.totalorder %s389, %s390
      %p404 = scmp.eq.s32.totalorder %s37, 1
      %p405 = por %p403, %p404
      %p407 = scmp.ne.s32.totalorder %s390, %s406
      %p408 = scmp.eq.s32.totalorder %s37, 0
      %p409 = por %p407, %p408
      %s410 = ssub.s32 %s31, %s38
      %p411 = scmp.eq.s32.totalorder %s410, 0
      %s413 = sadd.s32 %s412, 1
      %s414 = scalar_select %p411, %s412, %s413
      %p417 = pneg %p411
      %p418 = scmp.eq.s32.totalorder %s31, 1
      %p419 = por %p417, %p418
      %p420 = scmp.ne.s32.totalorder %s412, %s415
      %p421 = scmp.eq.s32.totalorder %s31, 0
      %p422 = por %p420, %p421
      %p423 = scmp.ne.s32.totalorder %s412, %s415
      %p424 = scmp.eq.s32.totalorder %s36, 1
      %p425 = por %p423, %p424
      %p426 = scmp.ne.s32.totalorder %s415, %s416
      %p427 = scmp.eq.s32.totalorder %s36, 0
      %p428 = por %p426, %p427
      %p429 = scmp.ne.s32.totalorder %s415, %s416
      %p430 = scmp.eq.s32.totalorder %s37, 1
      %p431 = por %p429, %p430
      %p433 = scmp.ne.s32.totalorder %s416, %s432
      %p434 = scmp.eq.s32.totalorder %s37, 0
      %p435 = por %p433, %p434
      %s436 = ssub.s32 %s31, %s38
      %p437 = scmp.eq.s32.totalorder %s436, 0
      %s439 = sadd.s32 %s438, 1
      %s440 = scalar_select %p437, %s438, %s439
      %p443 = pneg %p437
      %p444 = scmp.eq.s32.totalorder %s31, 1
      %p445 = por %p443, %p444
      %p446 = scmp.ne.s32.totalorder %s438, %s441
      %p447 = scmp.eq.s32.totalorder %s31, 0
      %p448 = por %p446, %p447
      %p449 = scmp.ne.s32.totalorder %s438, %s441
      %p450 = scmp.eq.s32.totalorder %s36, 1
      %p451 = por %p449, %p450
      %p452 = scmp.ne.s32.totalorder %s441, %s442
      %p453 = scmp.eq.s32.totalorder %s36, 0
      %p454 = por %p452, %p453
      %p455 = scmp.ne.s32.totalorder %s441, %s442
      %p456 = scmp.eq.s32.totalorder %s37, 1
      %p457 = por %p455, %p456
      %p459 = scmp.ne.s32.totalorder %s442, %s458
      %p460 = scmp.eq.s32.totalorder %s37, 0
      %p461 = por %p459, %p460
      %s462 = ssub.s32 %s31, %s38
      %p463 = scmp.eq.s32.totalorder %s462, 0
      %s465 = sadd.s32 %s464, 1
      %s466 = scalar_select %p463, %s464, %s465
      %p469 = pneg %p463
      %p470 = scmp.eq.s32.totalorder %s31, 1
      %p471 = por %p469, %p470
      %p472 = scmp.ne.s32.totalorder %s464, %s467
      %p473 = scmp.eq.s32.totalorder %s31, 0
      %p474 = por %p472, %p473
      %p475 = scmp.ne.s32.totalorder %s464, %s467
      %p476 = scmp.eq.s32.totalorder %s36, 1
      %p477 = por %p475, %p476
      %p478 = scmp.ne.s32.totalorder %s467, %s468
      %p479 = scmp.eq.s32.totalorder %s36, 0
      %p480 = por %p478, %p479
      %p481 = scmp.ne.s32.totalorder %s467, %s468
      %p482 = scmp.eq.s32.totalorder %s37, 1
      %p483 = por %p481, %p482
      %p485 = scmp.ne.s32.totalorder %s468, %s484
      %p486 = scmp.eq.s32.totalorder %s37, 0
      %p487 = por %p485, %p486
      %s488 = ssub.s32 %s31, %s38
      %p489 = scmp.eq.s32.totalorder %s488, 0
      %s491 = sadd.s32 %s490, 1
      %s492 = scalar_select %p489, %s490, %s491
      %p495 = pneg %p489
      %p496 = scmp.eq.s32.totalorder %s31, 1
      %p497 = por %p495, %p496
      %p498 = scmp.ne.s32.totalorder %s490, %s493
      %p499 = scmp.eq.s32.totalorder %s31, 0
      %p500 = por %p498, %p499
      %p501 = scmp.ne.s32.totalorder %s490, %s493
      %p502 = scmp.eq.s32.totalorder %s36, 1
      %p503 = por %p501, %p502
      %p504 = scmp.ne.s32.totalorder %s493, %s494
      %p505 = scmp.eq.s32.totalorder %s36, 0
      %p506 = por %p504, %p505
      %p507 = scmp.ne.s32.totalorder %s493, %s494
      %p508 = scmp.eq.s32.totalorder %s37, 1
      %p509 = por %p507, %p508
      %p511 = scmp.ne.s32.totalorder %s494, %s510
      %p512 = scmp.eq.s32.totalorder %s37, 0
      %p513 = por %p511, %p512
      %s515 = sadd.s32 %s514, 1
      %p518 = scmp.eq.s32.totalorder %s31, 1
      %p519 = scmp.ne.s32.totalorder %s514, %s516
      %p520 = scmp.eq.s32.totalorder %s31, 0
      %p521 = por %p519, %p520
      %p522 = scmp.ne.s32.totalorder %s514, %s516
      %p523 = scmp.eq.s32.totalorder %s36, 1
      %p524 = por %p522, %p523
      %p525 = scmp.ne.s32.totalorder %s516, %s517
      %p526 = scmp.eq.s32.totalorder %s36, 0
      %p527 = por %p525, %p526
      %p528 = scmp.ne.s32.totalorder %s516, %s517
      %p529 = scmp.eq.s32.totalorder %s37, 1
      %p530 = por %p528, %p529
      %p532 = scmp.ne.s32.totalorder %s517, %s531
      %p533 = scmp.eq.s32.totalorder %s37, 0
      %p534 = por %p532, %p533
      %s536 = sadd.s32 %s535, 1
      %p539 = scmp.eq.s32.totalorder %s31, 1
      %p540 = scmp.ne.s32.totalorder %s535, %s537
      %p541 = scmp.eq.s32.totalorder %s31, 0
      %p542 = por %p540, %p541
      %p543 = scmp.ne.s32.totalorder %s535, %s537
      %p544 = scmp.eq.s32.totalorder %s36, 1
      %p545 = por %p543, %p544
      %p546 = scmp.ne.s32.totalorder %s537, %s538
      %p547 = scmp.eq.s32.totalorder %s36, 0
      %p548 = por %p546, %p547
      %p549 = scmp.ne.s32.totalorder %s537, %s538
      %p550 = scmp.eq.s32.totalorder %s37, 1
      %p551 = por %p549, %p550
      %p553 = scmp.ne.s32.totalorder %s538, %s552
      %p554 = scmp.eq.s32.totalorder %s37, 0
      %p555 = por %p553, %p554
      %s557 = sadd.s32 %s556, 1
      %p560 = scmp.eq.s32.totalorder %s31, 1
      %p561 = scmp.ne.s32.totalorder %s556, %s558
      %p562 = scmp.eq.s32.totalorder %s31, 0
      %p563 = por %p561, %p562
      %p564 = scmp.ne.s32.totalorder %s556, %s558
      %p565 = scmp.eq.s32.totalorder %s36, 1
      %p566 = por %p564, %p565
      %p567 = scmp.ne.s32.totalorder %s558, %s559
      %p568 = scmp.eq.s32.totalorder %s36, 0
      %p569 = por %p567, %p568
      %p570 = scmp.ne.s32.totalorder %s558, %s559
      %p571 = scmp.eq.s32.totalorder %s37, 1
      %p572 = por %p570, %p571
      %p574 = scmp.ne.s32.totalorder %s559, %s573
      %p575 = scmp.eq.s32.totalorder %s37, 0
      %p576 = por %p574, %p575
      %s578 = sadd.s32 %s577, 1
      %p581 = scmp.eq.s32.totalorder %s31, 1
      %p582 = scmp.ne.s32.totalorder %s577, %s579
      %p583 = scmp.eq.s32.totalorder %s31, 0
      %p584 = por %p582, %p583
      %p585 = scmp.ne.s32.totalorder %s577, %s579
      %p586 = scmp.eq.s32.totalorder %s36, 1
      %p587 = por %p585, %p586
      %p588 = scmp.ne.s32.totalorder %s579, %s580
      %p589 = scmp.eq.s32.totalorder %s36, 0
      %p590 = por %p588, %p589
      %p591 = scmp.ne.s32.totalorder %s579, %s580
      %p592 = scmp.eq.s32.totalorder %s37, 1
      %p593 = por %p591, %p592
      %p595 = scmp.ne.s32.totalorder %s580, %s594
      %p596 = scmp.eq.s32.totalorder %s37, 0
      %p597 = por %p595, %p596
      %s599 = sadd.s32 %s598, 1
      %p602 = scmp.eq.s32.totalorder %s31, 1
      %p603 = scmp.ne.s32.totalorder %s598, %s600
      %p604 = scmp.eq.s32.totalorder %s31, 0
      %p605 = por %p603, %p604
      %p606 = scmp.ne.s32.totalorder %s598, %s600
      %p607 = scmp.eq.s32.totalorder %s36, 1
      %p608 = por %p606, %p607
      %p609 = scmp.ne.s32.totalorder %s600, %s601
      %p610 = scmp.eq.s32.totalorder %s36, 0
      %p611 = por %p609, %p610
      %p612 = scmp.ne.s32.totalorder %s600, %s601
      %p613 = scmp.eq.s32.totalorder %s37, 1
      %p614 = por %p612, %p613
      %p616 = scmp.ne.s32.totalorder %s601, %s615
      %p617 = scmp.eq.s32.totalorder %s37, 0
      %p618 = por %p616, %p617
      %p619 = scmp.le.s32.totalorder 1, %s31
      %p620 = scmp.lt.s32.totalorder %s31, 3
      %p621 = pnand %p619, %p620
      %p622 = pneg %p621
      // Predicated region
      $region9: #{transformer_net_forward.1} parent=5 // pred_check
        _
      $region10: #{transformer_net_forward.1} parent=5 // pred_check_branch
        %624 = sbr.rel (%p621) target = $region12
      $region11: #{transformer_net_forward.1} parent=5 // pred_region
        %s625 = ssub.s32 %s31, 1
        // Predicated region
        $region13: #{transformer_net_forward.1} parent=11 // pred_check
          %p626 = pneg %p52
        $region14: #{transformer_net_forward.1} parent=11 // pred_check_branch
          %628 = sbr.rel (%p626) target = $region16
        $region15: #{transformer_net_forward.1} parent=11 // pred_region
          _
        $region16: #{transformer_net_forward.1} parent=11 // pred_fallthru
          _
        // Predicated region
        $region17: #{transformer_net_forward.1} parent=11 // pred_check
          %p629 = pneg %p73
        $region18: #{transformer_net_forward.1} parent=11 // pred_check_branch
          %631 = sbr.rel (%p629) target = $region20
        $region19: #{transformer_net_forward.1} parent=11 // pred_region
          _
        $region20: #{transformer_net_forward.1} parent=11 // pred_fallthru
          _
        // Predicated region
        $region21: #{transformer_net_forward.1} parent=11 // pred_check
          %p632 = pneg %p94
        $region22: #{transformer_net_forward.1} parent=11 // pred_check_branch
          %634 = sbr.rel (%p632) target = $region24
        $region23: #{transformer_net_forward.1} parent=11 // pred_region
          _
        $region24: #{transformer_net_forward.1} parent=11 // pred_fallthru
          _
        // Predicated region
        $region25: #{transformer_net_forward.1} parent=11 // pred_check
          %p635 = pneg %p115
        $region26: #{transformer_net_forward.1} parent=11 // pred_check_branch
          %637 = sbr.rel (%p635) target = $region28
        $region27: #{transformer_net_forward.1} parent=11 // pred_region
          _
        $region28: #{transformer_net_forward.1} parent=11 // pred_fallthru
          _
        // Predicated region
        $region29: #{transformer_net_forward.1} parent=11 // pred_check
          %p638 = pneg %p136
        $region30: #{transformer_net_forward.1} parent=11 // pred_check_branch
          %640 = sbr.rel (%p638) target = $region32
        $region31: #{transformer_net_forward.1} parent=11 // pred_region
          _
        $region32: #{transformer_net_forward.1} parent=11 // pred_fallthru
          _
        // Predicated region
        $region33: #{transformer_net_forward.1} parent=11 // pred_check
          %p641 = pneg %p157
        $region34: #{transformer_net_forward.1} parent=11 // pred_check_branch
          %643 = sbr.rel (%p641) target = $region36
        $region35: #{transformer_net_forward.1} parent=11 // pred_region
          _
        $region36: #{transformer_net_forward.1} parent=11 // pred_fallthru
          _
        // Predicated region
        $region37: #{transformer_net_forward.1} parent=11 // pred_check
          %p644 = pneg %p178
        $region38: #{transformer_net_forward.1} parent=11 // pred_check_branch
          %646 = sbr.rel (%p644) target = $region40
        $region39: #{transformer_net_forward.1} parent=11 // pred_region
          _
        $region40: #{transformer_net_forward.1} parent=11 // pred_fallthru
          _
        // Predicated region
        $region41: #{transformer_net_forward.1} parent=11 // pred_check
          %p647 = pneg %p199
        $region42: #{transformer_net_forward.1} parent=11 // pred_check_branch
          %649 = sbr.rel (%p647) target = $region44
        $region43: #{transformer_net_forward.1} parent=11 // pred_region
          _
        $region44: #{transformer_net_forward.1} parent=11 // pred_fallthru
          _
        // Predicated region
        $region45: #{transformer_net_forward.1} parent=11 // pred_check
          %p650 = pneg %p220
        $region46: #{transformer_net_forward.1} parent=11 // pred_check_branch
          %652 = sbr.rel (%p650) target = $region48
        $region47: #{transformer_net_forward.1} parent=11 // pred_region
          _
        $region48: #{transformer_net_forward.1} parent=11 // pred_fallthru
          _
        // Predicated region
        $region49: #{transformer_net_forward.1} parent=11 // pred_check
          %p653 = pneg %p527
        $region50: #{transformer_net_forward.1} parent=11 // pred_check_branch
          %655 = sbr.rel (%p653) target = $region52
        $region51: #{transformer_net_forward.1} parent=11 // pred_region
          _
        $region52: #{transformer_net_forward.1} parent=11 // pred_fallthru
          _
        // Predicated region
        $region53: #{transformer_net_forward.1} parent=11 // pred_check
          %p656 = pneg %p548
        $region54: #{transformer_net_forward.1} parent=11 // pred_check_branch
          %658 = sbr.rel (%p656) target = $region56
        $region55: #{transformer_net_forward.1} parent=11 // pred_region
          _
        $region56: #{transformer_net_forward.1} parent=11 // pred_fallthru
          _
        // Predicated region
        $region57: #{transformer_net_forward.1} parent=11 // pred_check
          %p659 = pneg %p569
        $region58: #{transformer_net_forward.1} parent=11 // pred_check_branch
          %661 = sbr.rel (%p659) target = $region60
        $region59: #{transformer_net_forward.1} parent=11 // pred_region
          _
        $region60: #{transformer_net_forward.1} parent=11 // pred_fallthru
          _
        // Predicated region
        $region61: #{transformer_net_forward.1} parent=11 // pred_check
          %p662 = pneg %p590
        $region62: #{transformer_net_forward.1} parent=11 // pred_check_branch
          %664 = sbr.rel (%p662) target = $region64
        $region63: #{transformer_net_forward.1} parent=11 // pred_region
          _
        $region64: #{transformer_net_forward.1} parent=11 // pred_fallthru
          _
      $region12: #{transformer_net_forward.1} parent=5 // pred_fallthru
        _
      %p665 = scmp.lt.s32.totalorder %s31, 2
      // Predicated region
      $region65: #{transformer_net_forward.1} parent=5 // pred_check
        %p666 = pneg %p665
      $region66: #{transformer_net_forward.1} parent=5 // pred_check_branch
        %668 = sbr.rel (%p666) target = $region68
      $region67: #{transformer_net_forward.1} parent=5 // pred_region
        // Predicated region
        $region69: #{transformer_net_forward.1} parent=67 // pred_check
          %p669 = pneg %p240
        $region70: #{transformer_net_forward.1} parent=67 // pred_check_branch
          %671 = sbr.rel (%p669) target = $region72
        $region71: #{transformer_net_forward.1} parent=67 // pred_region
          %p672 = scmp.lt.s32.totalorder %s31, 1
          %s673 = scalar_select %p672, %s31, 1
          %s674 = scalar_lea.vmem %s9, %s673
        $region72: #{transformer_net_forward.1} parent=67 // pred_fallthru
          _
        // Predicated region
        $region73: #{transformer_net_forward.1} parent=67 // pred_check
          %p675 = pneg %p266
        $region74: #{transformer_net_forward.1} parent=67 // pred_check_branch
          %677 = sbr.rel (%p675) target = $region76
        $region75: #{transformer_net_forward.1} parent=67 // pred_region
          %p678 = scmp.lt.s32.totalorder %s31, 1
          %s679 = scalar_select %p678, %s31, 1
          %s680 = scalar_lea.vmem %s10, %s679
        $region76: #{transformer_net_forward.1} parent=67 // pred_fallthru
          _
        // Predicated region
        $region77: #{transformer_net_forward.1} parent=67 // pred_check
          %p681 = pneg %p292
        $region78: #{transformer_net_forward.1} parent=67 // pred_check_branch
          %683 = sbr.rel (%p681) target = $region80
        $region79: #{transformer_net_forward.1} parent=67 // pred_region
          %p684 = scmp.lt.s32.totalorder %s31, 1
          %s685 = scalar_select %p684, %s31, 1
          %s686 = smul.addr %s685, 8
          %s687 = smul.addr %s686, 4
          %s688 = scalar_lea.vmem %s11, %s687
        $region80: #{transformer_net_forward.1} parent=67 // pred_fallthru
          _
        // Predicated region
        $region81: #{transformer_net_forward.1} parent=67 // pred_check
          %p689 = pneg %p318
        $region82: #{transformer_net_forward.1} parent=67 // pred_check_branch
          %691 = sbr.rel (%p689) target = $region84
        $region83: #{transformer_net_forward.1} parent=67 // pred_region
          %p692 = scmp.lt.s32.totalorder %s31, 1
          %s693 = scalar_select %p692, %s31, 1
          %s694 = smul.addr %s693, 8
          %s695 = smul.addr %s694, 4
          %s696 = scalar_lea.vmem %s12, %s695
        $region84: #{transformer_net_forward.1} parent=67 // pred_fallthru
          _
        // Predicated region
        $region85: #{transformer_net_forward.1} parent=67 // pred_check
          %p697 = pneg %p344
        $region86: #{transformer_net_forward.1} parent=67 // pred_check_branch
          %699 = sbr.rel (%p697) target = $region88
        $region87: #{transformer_net_forward.1} parent=67 // pred_region
          %p700 = scmp.lt.s32.totalorder %s31, 1
          %s701 = scalar_select %p700, %s31, 1
          %s702 = scalar_lea.vmem %s13, %s701
        $region88: #{transformer_net_forward.1} parent=67 // pred_fallthru
          _
        // Predicated region
        $region89: #{transformer_net_forward.1} parent=67 // pred_check
          %p703 = pneg %p370
        $region90: #{transformer_net_forward.1} parent=67 // pred_check_branch
          %705 = sbr.rel (%p703) target = $region92
        $region91: #{transformer_net_forward.1} parent=67 // pred_region
          %p706 = scmp.lt.s32.totalorder %s31, 1
          %s707 = scalar_select %p706, %s31, 1
          %s708 = scalar_lea.vmem %s14, %s707
        $region92: #{transformer_net_forward.1} parent=67 // pred_fallthru
          _
        // Predicated region
        $region93: #{transformer_net_forward.1} parent=67 // pred_check
          %p709 = pneg %p396
        $region94: #{transformer_net_forward.1} parent=67 // pred_check_branch
          %711 = sbr.rel (%p709) target = $region96
        $region95: #{transformer_net_forward.1} parent=67 // pred_region
          %p712 = scmp.lt.s32.totalorder %s31, 1
          %s713 = scalar_select %p712, %s31, 1
          %s714 = scalar_lea.vmem %s15, %s713
        $region96: #{transformer_net_forward.1} parent=67 // pred_fallthru
          _
        // Predicated region
        $region97: #{transformer_net_forward.1} parent=67 // pred_check
          %p715 = pneg %p422
        $region98: #{transformer_net_forward.1} parent=67 // pred_check_branch
          %717 = sbr.rel (%p715) target = $region100
        $region99: #{transformer_net_forward.1} parent=67 // pred_region
          %p718 = scmp.lt.s32.totalorder %s31, 1
          %s719 = scalar_select %p718, %s31, 1
          %s720 = smul.addr %s719, 4
          %s721 = smul.addr %s720, 4
          %s722 = scalar_lea.vmem %s16, %s721
        $region100: #{transformer_net_forward.1} parent=67 // pred_fallthru
          _
        // Predicated region
        $region101: #{transformer_net_forward.1} parent=67 // pred_check
          %p723 = pneg %p448
        $region102: #{transformer_net_forward.1} parent=67 // pred_check_branch
          %725 = sbr.rel (%p723) target = $region104
        $region103: #{transformer_net_forward.1} parent=67 // pred_region
          %p726 = scmp.lt.s32.totalorder %s31, 1
          %s727 = scalar_select %p726, %s31, 1
          %s728 = scalar_lea.vmem %s17, %s727
        $region104: #{transformer_net_forward.1} parent=67 // pred_fallthru
          _
        // Predicated region
        $region105: #{transformer_net_forward.1} parent=67 // pred_check
          %p729 = pneg %p474
        $region106: #{transformer_net_forward.1} parent=67 // pred_check_branch
          %731 = sbr.rel (%p729) target = $region108
        $region107: #{transformer_net_forward.1} parent=67 // pred_region
          %p732 = scmp.lt.s32.totalorder %s31, 1
          %s733 = scalar_select %p732, %s31, 1
          %s734 = smul.addr %s733, 8
          %s735 = smul.addr %s734, 4
          %s736 = scalar_lea.vmem %s18, %s735
        $region108: #{transformer_net_forward.1} parent=67 // pred_fallthru
          _
        // Predicated region
        $region109: #{transformer_net_forward.1} parent=67 // pred_check
          %p737 = pneg %p500
        $region110: #{transformer_net_forward.1} parent=67 // pred_check_branch
          %739 = sbr.rel (%p737) target = $region112
        $region111: #{transformer_net_forward.1} parent=67 // pred_region
          %p740 = scmp.lt.s32.totalorder %s31, 1
          %s741 = scalar_select %p740, %s31, 1
          %s742 = scalar_lea.vmem %s19, %s741
        $region112: #{transformer_net_forward.1} parent=67 // pred_fallthru
          _
      $region68: #{transformer_net_forward.1} parent=5 // pred_fallthru
        _
      %p743 = scmp.le.s32.totalorder 1, %s31
      %p744 = scmp.lt.s32.totalorder %s31, 3
      %p745 = pnand %p743, %p744
      %p746 = pneg %p745
      // Predicated region
      $region113: #{transformer_net_forward.1} parent=5 // pred_check
        _
      $region114: #{transformer_net_forward.1} parent=5 // pred_check_branch
        %748 = sbr.rel (%p745) target = $region116
      $region115: #{transformer_net_forward.1} parent=5 // pred_region
        %s749 = ssub.s32 %s31, 1
        %p750 = pneg %p52
        %p751 = pneg %p49
        %p752 = pneg %p73
        %p753 = pneg %p70
        %p754 = pneg %p94
        %p755 = pneg %p91
        %p756 = pneg %p115
        %p757 = pneg %p112
        %p758 = pneg %p136
        %p759 = pneg %p133
        %p760 = pneg %p157
        %p761 = pneg %p154
        %p762 = pneg %p178
        %p763 = pneg %p175
        %p764 = pneg %p199
        %p765 = pneg %p196
        %p766 = pneg %p220
        %p767 = pneg %p217
        %p768 = scmp.lt.s32.totalorder %s36, 1
        %s769 = scalar_select %p768, %s36, 1
        %s770 = scalar_lea.vmem %s9, %s769
        %p771 = pneg %p246
        %p772 = pneg %p243
        %p773 = scmp.lt.s32.totalorder %s36, 1
        %s774 = scalar_select %p773, %s36, 1
        %s775 = scalar_lea.vmem %s10, %s774
        %p776 = pneg %p272
        %p777 = pneg %p269
        %p778 = scmp.lt.s32.totalorder %s36, 1
        %s779 = scalar_select %p778, %s36, 1
        %s780 = smul.addr %s779, 8
        %s781 = smul.addr %s780, 4
        %s782 = scalar_lea.vmem %s11, %s781
        %p783 = pneg %p298
        %p784 = pneg %p295
        %p785 = scmp.lt.s32.totalorder %s36, 1
        %s786 = scalar_select %p785, %s36, 1
        %s787 = smul.addr %s786, 8
        %s788 = smul.addr %s787, 4
        %s789 = scalar_lea.vmem %s12, %s788
        %p790 = pneg %p324
        %p791 = pneg %p321
        %p792 = scmp.lt.s32.totalorder %s36, 1
        %s793 = scalar_select %p792, %s36, 1
        %s794 = scalar_lea.vmem %s13, %s793
        %p795 = pneg %p350
        %p796 = pneg %p347
        %p797 = scmp.lt.s32.totalorder %s36, 1
        %s798 = scalar_select %p797, %s36, 1
        %s799 = scalar_lea.vmem %s14, %s798
        %p800 = pneg %p376
        %p801 = pneg %p373
        %p802 = scmp.lt.s32.totalorder %s36, 1
        %s803 = scalar_select %p802, %s36, 1
        %s804 = scalar_lea.vmem %s15, %s803
        %p805 = pneg %p402
        %p806 = pneg %p399
        %p807 = scmp.lt.s32.totalorder %s36, 1
        %s808 = scalar_select %p807, %s36, 1
        %s809 = smul.addr %s808, 4
        %s810 = smul.addr %s809, 4
        %s811 = scalar_lea.vmem %s16, %s810
        %p812 = pneg %p428
        %p813 = pneg %p425
        %p814 = scmp.lt.s32.totalorder %s36, 1
        %s815 = scalar_select %p814, %s36, 1
        %s816 = scalar_lea.vmem %s17, %s815
        %p817 = pneg %p454
        %p818 = pneg %p451
        %p819 = scmp.lt.s32.totalorder %s36, 1
        %s820 = scalar_select %p819, %s36, 1
        %s821 = smul.addr %s820, 8
        %s822 = smul.addr %s821, 4
        %s823 = scalar_lea.vmem %s18, %s822
        %p824 = pneg %p480
        %p825 = pneg %p477
        %p826 = scmp.lt.s32.totalorder %s36, 1
        %s827 = scalar_select %p826, %s36, 1
        %s828 = scalar_lea.vmem %s19, %s827
        %p829 = pneg %p506
        %p830 = pneg %p503
        %p831 = pneg %p527
        %p832 = pneg %p524
        %p833 = pneg %p548
        %p834 = pneg %p545
        %p835 = pneg %p569
        %p836 = pneg %p566
        %p837 = pneg %p590
        %p838 = pneg %p587
        %p839 = pneg %p611
        %p840 = pneg %p608
        %p841 = scmp.lt.s32.totalorder %s36, 1
        %s842 = scalar_select %p841, %s36, 1
        %s843 = scalar_lea.vmem %s9, %s842
        %p844 = scmp.lt.s32.totalorder %s36, 1
        %s845 = scalar_select %p844, %s36, 1
        %s846 = scalar_lea.vmem %s10, %s845
        %p847 = scmp.lt.s32.totalorder %s36, 1
        %s848 = scalar_select %p847, %s36, 1
        %s849 = smul.addr %s848, 8
        %s850 = smul.addr %s849, 4
        %s851 = scalar_lea.vmem %s11, %s850
        %p852 = scmp.lt.s32.totalorder %s36, 1
        %s853 = scalar_select %p852, %s36, 1
        %s854 = smul.addr %s853, 8
        %s855 = smul.addr %s854, 4
        %s856 = scalar_lea.vmem %s12, %s855
        %p857 = scmp.lt.s32.totalorder %s36, 1
        %s858 = scalar_select %p857, %s36, 1
        %s859 = scalar_lea.vmem %s13, %s858
        %p860 = scmp.lt.s32.totalorder %s36, 1
        %s861 = scalar_select %p860, %s36, 1
        %s862 = scalar_lea.vmem %s14, %s861
        %p863 = scmp.lt.s32.totalorder %s36, 1
        %s864 = scalar_select %p863, %s36, 1
        %s865 = scalar_lea.vmem %s15, %s864
        %p866 = scmp.lt.s32.totalorder %s36, 1
        %s867 = scalar_select %p866, %s36, 1
        %s868 = smul.addr %s867, 4
        %s869 = smul.addr %s868, 4
        %s870 = scalar_lea.vmem %s16, %s869
        %p871 = scmp.lt.s32.totalorder %s36, 1
        %s872 = scalar_select %p871, %s36, 1
        %s873 = scalar_lea.vmem %s17, %s872
        %p874 = scmp.lt.s32.totalorder %s36, 1
        %s875 = scalar_select %p874, %s36, 1
        %s876 = smul.addr %s875, 8
        %s877 = smul.addr %s876, 4
        %s878 = scalar_lea.vmem %s18, %s877
        %p879 = scmp.lt.s32.totalorder %s36, 1
        %s880 = scalar_select %p879, %s36, 1
        %s881 = scalar_lea.vmem %s19, %s880
        %p883 = scmp.eq.s32.totalorder %s36, 0
        // Predicated region
        $region117: #{transformer_net_forward.1} parent=115 // pred_check
          %p884 = pneg %p883
        $region118: #{transformer_net_forward.1} parent=115 // pred_check_branch
          %886 = sbr.rel (%p884) target = $region120
        $region119: #{transformer_net_forward.1} parent=115 // pred_region
          %v887 = vld [vmem:[%s0] sm:$0xff]
          %v888 = vld [vmem:[%s0 + $0x8] sm:$0xff]
          %v889 = vld [vmem:[%s1] sm:$0x3]
          %v890 = vld [vmem:[%s2] sm:$0x3]
          %v891 = vadd.f32 %v887, %v888
          %892 = vadd.xlane.f32.xlu0 %v891
          %v893 = vpop.xlane.xlu0 %892
          %v894 = vrcp.pop 256.0
          %v895 = vmul.f32 %v893, %v894
          %v896 = vsub.f32 %v887, %v895
          %v897 = vsub.f32 %v888, %v895
          %v898 = vmul.f32 %v896, %v896
          %v899 = vmul.f32 %v897, %v897
          %v900 = vadd.f32 %v898, %v899
          %901 = vadd.xlane.f32.xlu0 %v900
          %v902 = vpop.xlane.xlu0 %901
          %v903 = vmul.f32 %v902, %v894
          %v904 = vadd.f32 %v903, 1e-05
          %v905 = vrsqrt.pop %v904
          %v906 = vmul.f32 %v896, %v905
          %v907 = vmul.f32 %v897, %v905
          %v909 = vlaneseq
          %v910 = vshrl.u32 %v909, 7
          %v911 = vsub.s32 0, %v910
          %v912 = vrot.slane %v889, %v911
          %v913 = vlaneseq
          %v914 = vshrl.u32 %v913, 7
          %v915 = vsub.s32 1, %v914
          %v916 = vrot.slane %v889, %v915
          %v919 = vmul.f32 %v906, %v912
          %v920 = vmul.f32 %v907, %v916
          %v922 = vlaneseq
          %v923 = vshrl.u32 %v922, 7
          %v924 = vsub.s32 0, %v923
          %v925 = vrot.slane %v890, %v924
          %v926 = vlaneseq
          %v927 = vshrl.u32 %v926, 7
          %v928 = vsub.s32 1, %v927
          %v929 = vrot.slane %v890, %v928
          %v932 = vadd.f32 %v919, %v925
          %v933 = vadd.f32 %v920, %v929
          %v934 = vpack.c.bf16 %v932, %v932
          %v935 = vpack.c.bf16 %v933, %v933
          %v936 = vld [vmem:[%s3] sm:$0xf]
          %v937 = vld [vmem:[%s3 + $0x4] sm:$0xf]
          %v938 = vld [vmem:[%s3 + $0x8] sm:$0xf]
          %v939 = vld [vmem:[%s3 + $0xc] sm:$0xf]
          %v940 = vld [vmem:[%s3 + $0x10] sm:$0xf]
          %v941 = vld [vmem:[%s3 + $0x14] sm:$0xf]
          %v942 = vld [vmem:[%s3 + $0x18] sm:$0xf]
          %v943 = vld [vmem:[%s3 + $0x1c] sm:$0xf]
          %v944 = vld [vmem:[%s3 + $0x20] sm:$0xf]
          %v945 = vld [vmem:[%s3 + $0x24] sm:$0xf]
          %v946 = vld [vmem:[%s3 + $0x28] sm:$0xf]
          %v947 = vld [vmem:[%s3 + $0x2c] sm:$0xf]
          %v948 = vld [vmem:[%s3 + $0x30] sm:$0xf]
          %v949 = vld [vmem:[%s3 + $0x34] sm:$0xf]
          %v950 = vld [vmem:[%s3 + $0x38] sm:$0xf]
          %v951 = vld [vmem:[%s3 + $0x3c] sm:$0xf]
          %v952 = vld [vmem:[%s3 + $0x40] sm:$0xf]
          %v953 = vld [vmem:[%s3 + $0x44] sm:$0xf]
          %v954 = vld [vmem:[%s3 + $0x48] sm:$0xf]
          %v955 = vld [vmem:[%s3 + $0x4c] sm:$0xf]
          %v956 = vld [vmem:[%s3 + $0x50] sm:$0xf]
          %v957 = vld [vmem:[%s3 + $0x54] sm:$0xf]
          %v958 = vld [vmem:[%s3 + $0x58] sm:$0xf]
          %v959 = vld [vmem:[%s3 + $0x5c] sm:$0xf]
          %v960 = vld [vmem:[%s3 + $0x60] sm:$0xf]
          %v961 = vld [vmem:[%s3 + $0x64] sm:$0xf]
          %v962 = vld [vmem:[%s3 + $0x68] sm:$0xf]
          %v963 = vld [vmem:[%s3 + $0x6c] sm:$0xf]
          %v964 = vld [vmem:[%s3 + $0x70] sm:$0xf]
          %v965 = vld [vmem:[%s3 + $0x74] sm:$0xf]
          %v966 = vld [vmem:[%s3 + $0x78] sm:$0xf]
          %v967 = vld [vmem:[%s3 + $0x7c] sm:$0xf]
          %v968 = vld [vmem:[%s4] sm:$0x1]
          %v970 = vlaneseq
          %v971 = vshrl.u32 %v970, 7
          %v972 = vsub.s32 0, %v971
          %v973 = vrot.slane %v968, %v972
          %v1007 = vunpack.c.l.b16 %v936
          %v1008 = vunpack.c.l.b16 %v937
          %v1009 = vunpack.c.l.b16 %v938
          %v1010 = vunpack.c.l.b16 %v939
          %v1011 = vunpack.c.l.b16 %v940
          %v1012 = vunpack.c.l.b16 %v941
          %v1013 = vunpack.c.l.b16 %v942
          %v1014 = vunpack.c.l.b16 %v943
          %v1015 = vunpack.c.l.b16 %v944
          %v1016 = vunpack.c.l.b16 %v945
          %v1017 = vunpack.c.l.b16 %v946
          %v1018 = vunpack.c.l.b16 %v947
          %v1019 = vunpack.c.l.b16 %v948
          %v1020 = vunpack.c.l.b16 %v949
          %v1021 = vunpack.c.l.b16 %v950
          %v1022 = vunpack.c.l.b16 %v951
          %v1023 = vunpack.c.l.b16 %v952
          %v1024 = vunpack.c.l.b16 %v953
          %v1025 = vunpack.c.l.b16 %v954
          %v1026 = vunpack.c.l.b16 %v955
          %v1027 = vunpack.c.l.b16 %v956
          %v1028 = vunpack.c.l.b16 %v957
          %v1029 = vunpack.c.l.b16 %v958
          %v1030 = vunpack.c.l.b16 %v959
          %v1031 = vunpack.c.l.b16 %v960
          %v1032 = vunpack.c.l.b16 %v961
          %v1033 = vunpack.c.l.b16 %v962
          %v1034 = vunpack.c.l.b16 %v963
          %v1035 = vunpack.c.l.b16 %v964
          %v1036 = vunpack.c.l.b16 %v965
          %v1037 = vunpack.c.l.b16 %v966
          %v1038 = vunpack.c.l.b16 %v967
          %v1039 = vpack.c.b16 %v1008, %v1007
          %v1040 = vpack.c.b16 %v1010, %v1009
          %v1041 = vpack.c.b16 %v1012, %v1011
          %v1042 = vpack.c.b16 %v1014, %v1013
          %v1043 = vpack.c.b16 %v1016, %v1015
          %v1044 = vpack.c.b16 %v1018, %v1017
          %v1045 = vpack.c.b16 %v1020, %v1019
          %v1046 = vpack.c.b16 %v1022, %v1021
          %v1047 = vpack.c.b16 %v1024, %v1023
          %v1048 = vpack.c.b16 %v1026, %v1025
          %v1049 = vpack.c.b16 %v1028, %v1027
          %v1050 = vpack.c.b16 %v1030, %v1029
          %v1051 = vpack.c.b16 %v1032, %v1031
          %v1052 = vpack.c.b16 %v1034, %v1033
          %v1053 = vpack.c.b16 %v1036, %v1035
          %v1054 = vpack.c.b16 %v1038, %v1037
          %1071 = vmatprep.subr.bf16.mxu0 0
          %1072 = vmatpush1.bf16.msra.mxu0 %v1046
          %1073 = vmatprep.subr.bf16.mxu0 0
          %1074 = vmatpush1.bf16.msra.mxu0 %v1045
          %1075 = vmatprep.subr.bf16.mxu0 0
          %1076 = vmatpush1.bf16.msra.mxu0 %v1044
          %1077 = vmatprep.subr.bf16.mxu0 0
          %1078 = vmatpush1.bf16.msra.mxu0 %v1043
          %1079 = vmatprep.subr.bf16.mxu0 0
          %1080 = vmatpush1.bf16.msra.mxu0 %v1042
          %1081 = vmatprep.subr.bf16.mxu0 0
          %1082 = vmatpush1.bf16.msra.mxu0 %v1041
          %1083 = vmatprep.subr.bf16.mxu0 0
          %1084 = vmatpush1.bf16.msra.mxu0 %v1040
          %1085 = vmatprep.subr.bf16.mxu0 0
          %1086 = vmatpush1.bf16.msra.mxu0 %v1039
          %1087 = vmatprep.subr.bf16.mxu0 0
          %1088 = vmatpush2.bf16.msra.mxu0 %v1054
          %1089 = vmatprep.subr.bf16.mxu0 0
          %1090 = vmatpush2.bf16.msra.mxu0 %v1053
          %1091 = vmatprep.subr.bf16.mxu0 0
          %1092 = vmatpush2.bf16.msra.mxu0 %v1052
          %1093 = vmatprep.subr.bf16.mxu0 0
          %1094 = vmatpush2.bf16.msra.mxu0 %v1051
          %1095 = vmatprep.subr.bf16.mxu0 0
          %1096 = vmatpush2.bf16.msra.mxu0 %v1050
          %1097 = vmatprep.subr.bf16.mxu0 0
          %1098 = vmatpush2.bf16.msra.mxu0 %v1049
          %1099 = vmatprep.subr.bf16.mxu0 0
          %1100 = vmatpush2.bf16.msra.mxu0 %v1048
          %1101 = vmatprep.subr.bf16.mxu0 0
          %1102 = vmatpush2.bf16.msra.mxu0 %v1047
          %1103 = vmatprep.mubr.bf16.mxu0 %v935
          %1104 = vmatmul.mubr.bf16.gmra.mxu0 %v934
          %v1105 = vpop.f32.mrf.mxu0
          %v1106 = vadd.f32 %v973, %v1105
          %v1107 = vpop.f32.mrf.mxu0
          %v1108 = vpop.f32.mrf.mxu0
          %v1109 = vpop.f32.mrf.mxu0
          %1110 = vdwg.mxu0
          %v1111 = vld [vmem:[%s5] sm:$0x1]
          %v1112 = vld [vmem:[%s6] sm:$0x1]
          %vm1113 = vcmask 261120
          %v1114 = vsel %vm1113, %v1106, 0.0
          %1115 = vadd.xlane.f32.xlu0 %v1114
          %v1116 = vpop.xlane.xlu0 %1115
          %v1117 = vrcp.pop 32.0
          %v1118 = vmul.f32 %v1116, %v1117
          %v1119 = vsub.f32 %v1106, %v1118
          %v1120 = vmul.f32 %v1119, %v1119
          %v1121 = vsel %vm1113, %v1120, 0.0
          %1122 = vadd.xlane.f32.xlu0 %v1121
          %v1123 = vpop.xlane.xlu0 %1122
          %v1124 = vmul.f32 %v1123, %v1117
          %v1125 = vadd.f32 %v1124, 1e-05
          %v1126 = vrsqrt.pop %v1125
          %v1127 = vmul.f32 %v1119, %v1126
          %v1129 = vlaneseq
          %v1130 = vshrl.u32 %v1129, 7
          %v1131 = vsub.s32 0, %v1130
          %v1132 = vrot.slane %v1111, %v1131
          %v1134 = vmul.f32 %v1127, %v1132
          %v1136 = vlaneseq
          %v1137 = vshrl.u32 %v1136, 7
          %v1138 = vsub.s32 0, %v1137
          %v1139 = vrot.slane %v1112, %v1138
          %v1141 = vadd.f32 %v1134, %v1139
          %v1142 = vld [vmem:[%s8] sm:$0x1f]
          %v1143 = vld [vmem:[%s7] sm:$0x1]
          %v1144 = vadd.f32 %v1143, %v1142
          %v1146 = vrot.slane %v1142, 1
          %v1148 = vadd.f32 %v1141, %v1146
          %v1149 = vrot.slane %v1142, 5
          %v1151 = vadd.f32 %v1141, %v1149
          %v1153 = vrot.slane %v1148, 7
          %v1156 = vlaneseq
          %v1157 = vshrl.u32 %v1156, 7
          %v1158 = vsub.s32 0, %v1157
          %v1159 = vrot.slane %v1144, %v1158
          %v1162 = vrot.slane %v1151, 6
          %vm1164 = vcmask 1040384
          %v1165 = vsel %vm1164, %v1144, %v1153
          %vm1166 = vcmask 1044480
          %v1167 = vsel %vm1166, %v1165, %v1159
          %vm1168 = vcmask 1045504
          %v1169 = vsel %vm1168, %v1167, %v1162
          %1170 = vst.msk [vmem:[#allocation2] sm:$0xff] %vm1113, %v1169
          %vm1171 = vcmask 254976
          %1172 = vst.msk [vmem:[#allocation2 + $0x8] sm:$0x3] %vm1171, %v1162
        $region120: #{transformer_net_forward.1} parent=115 // pred_fallthru
          _
        %v1173 = vld [vmem:[#allocation2] sm:$0xff]
        %v1174 = vld [vmem:[#allocation2 + $0x8] sm:$0x3]
        %v1175 = vlaneseq
        %v1176 = vshrl.u32 %v1175, 7
        %v1177 = vadd.s32 %v1176, 8
        %v1178 = vlaneseq
        %v1179 = vand.u32 %v1178, 127
        %vm1180 = vcmp.ge.s32.totalorder %v1176, 0
        %vm1181 = vcmp.ge.s32.totalorder %v1177, 0
        %vm1182 = vcmp.lt.s32.totalorder %v1176, 5
        %vm1183 = vcmp.lt.s32.totalorder %v1177, 5
        %vm1184 = vmand %vm1180, %vm1182
        %vm1185 = vmand %vm1181, %vm1183
        %vm1186 = vcmp.ge.s32.totalorder %v1179, 0
        %vm1187 = vmand %vm1184, %vm1186
        %vm1188 = vmand %vm1185, %vm1186
        %vm1189 = vcmp.lt.s32.totalorder %v1179, 5
        %vm1190 = vmand %vm1187, %vm1189
        %vm1191 = vmand %vm1188, %vm1189
        %vm1192 = vcmp.ge.s32.totalorder %v1176, 5
        %vm1193 = vcmp.ge.s32.totalorder %v1177, 5
        %vm1194 = vcmp.lt.s32.totalorder %v1176, 10
        %vm1195 = vcmp.lt.s32.totalorder %v1177, 10
        %vm1196 = vmand %vm1192, %vm1194
        %vm1197 = vmand %vm1193, %vm1195
        %vm1198 = vcmp.ge.s32.totalorder %v1179, 5
        %vm1199 = vmand %vm1196, %vm1198
        %vm1200 = vmand %vm1197, %vm1198
        %vm1201 = vcmp.lt.s32.totalorder %v1179, 10
        %vm1202 = vmand %vm1199, %vm1201
        %vm1203 = vmand %vm1200, %vm1201
        %vm1204 = vmor %vm1190, %vm1202
        %vm1205 = vmor %vm1191, %vm1203
        %v1206 = vsel %vm1204, 0.0, -1e+30
        %v1207 = vsel %vm1205, 0.0, -1e+30
        %v1208 = vld [vmem:[%s843] sm:$0x1]
        %v1209 = vld [vmem:[%s846] sm:$0x1]
        %vm1210 = vcmask 261120
        %v1211 = vsel %vm1210, %v1173, 0.0
        %1212 = vadd.xlane.f32.xlu0 %v1211
        %v1213 = vpop.xlane.xlu0 %1212
        %vm1214 = vcmask 254976
        %v1215 = vsel %vm1214, %v1174, 0.0
        %1216 = vadd.xlane.f32.xlu0 %v1215
        %v1217 = vpop.xlane.xlu0 %1216
        %v1218 = vrcp.pop 32.0
        %v1219 = vmul.f32 %v1213, %v1218
        %v1220 = vmul.f32 %v1217, %v1218
        %v1221 = vsub.f32 %v1173, %v1219
        %v1222 = vsub.f32 %v1174, %v1220
        %v1223 = vmul.f32 %v1221, %v1221
        %v1224 = vmul.f32 %v1222, %v1222
        %v1225 = vsel %vm1210, %v1223, 0.0
        %1226 = vadd.xlane.f32.xlu0 %v1225
        %v1227 = vpop.xlane.xlu0 %1226
        %v1228 = vsel %vm1214, %v1224, 0.0
        %1229 = vadd.xlane.f32.xlu0 %v1228
        %v1230 = vpop.xlane.xlu0 %1229
        %v1231 = vmul.f32 %v1227, %v1218
        %v1232 = vmul.f32 %v1230, %v1218
        %v1233 = vadd.f32 %v1231, 1e-05
        %v1234 = vadd.f32 %v1232, 1e-05
        %v1235 = vrsqrt.pop %v1233
        %v1236 = vrsqrt.pop %v1234
        %v1237 = vmul.f32 %v1221, %v1235
        %v1238 = vmul.f32 %v1222, %v1236
        %v1240 = vlaneseq
        %v1241 = vshrl.u32 %v1240, 7
        %v1242 = vsub.s32 0, %v1241
        %v1243 = vrot.slane %v1208, %v1242
        %v1245 = vmul.f32 %v1237, %v1243
        %v1246 = vmul.f32 %v1238, %v1243
        %v1248 = vlaneseq
        %v1249 = vshrl.u32 %v1248, 7
        %v1250 = vsub.s32 0, %v1249
        %v1251 = vrot.slane %v1209, %v1250
        %v1253 = vadd.f32 %v1245, %v1251
        %v1254 = vadd.f32 %v1246, %v1251
        %v1255 = vpack.c.bf16 %v1254, %v1253
        %v1256 = vld [vmem:[%s851] sm:$0xff]
        %v1257 = vld [vmem:[%s851 + $0x8] sm:$0xff]
        %v1258 = vld [vmem:[%s851 + $0x10] sm:$0xff]
        %v1259 = vld [vmem:[%s851 + $0x18] sm:$0xff]
        %v1264 = vunpack.c.l.b16 %v1256
        %v1265 = vunpack.c.h.b16 %v1256
        %v1266 = vunpack.c.l.b16 %v1257
        %v1267 = vunpack.c.h.b16 %v1257
        %v1268 = vunpack.c.l.b16 %v1258
        %v1269 = vunpack.c.h.b16 %v1258
        %v1270 = vunpack.c.l.b16 %v1259
        %v1271 = vunpack.c.h.b16 %v1259
        %v1272 = vpack.c.b16 %v1266, %v1264
        %v1273 = vpack.c.b16 %v1267, %v1265
        %v1274 = vpack.c.b16 %v1270, %v1268
        %v1275 = vpack.c.b16 %v1271, %v1269
        %v1281 = vsel %vm1210, %v1255, 0
        %1283 = vmatprep.subr.bf16.mxu0 0
        %1284 = vmatpush1.bf16.msra.mxu0 0
        %1285 = vmatprep.subr.bf16.mxu0 0
        %1286 = vmatpush1.bf16.msra.mxu0 0
        %1287 = vmatprep.subr.bf16.mxu0 0
        %1288 = vmatpush1.bf16.msra.mxu0 0
        %1289 = vmatprep.subr.bf16.mxu0 0
        %1290 = vmatpush1.bf16.msra.mxu0 0
        %1291 = vmatprep.subr.bf16.mxu0 0
        %1292 = vmatpush1.bf16.msra.mxu0 0
        %1293 = vmatprep.subr.bf16.mxu0 0
        %1294 = vmatpush1.bf16.msra.mxu0 0
        %1295 = vmatprep.subr.bf16.mxu0 %v1275
        %1296 = vmatpush1.bf16.msra.mxu0 %v1274
        %1297 = vmatprep.subr.bf16.mxu0 %v1273
        %1298 = vmatpush1.bf16.msra.mxu0 %v1272
        %1299 = vmatprep.subr.bf16.mxu0 0
        %1300 = vmatpush2.bf16.msra.mxu0 0
        %1301 = vmatprep.subr.bf16.mxu0 0
        %1302 = vmatpush2.bf16.msra.mxu0 0
        %1303 = vmatprep.subr.bf16.mxu0 0
        %1304 = vmatpush2.bf16.msra.mxu0 0
        %1305 = vmatprep.subr.bf16.mxu0 0
        %1306 = vmatpush2.bf16.msra.mxu0 0
        %1307 = vmatprep.subr.bf16.mxu0 0
        %1308 = vmatpush2.bf16.msra.mxu0 0
        %1309 = vmatprep.subr.bf16.mxu0 0
        %1310 = vmatpush2.bf16.msra.mxu0 0
        %1311 = vmatprep.subr.bf16.mxu0 0
        %1312 = vmatpush2.bf16.msra.mxu0 0
        %1313 = vmatprep.subr.bf16.mxu0 0
        %1314 = vmatpush2.bf16.msra.mxu0 0
        %1315 = vmatprep.mubr.bf16.mxu0 0
        %1316 = vmatmul.mubr.bf16.gmra.mxu0 %v1281
        %v1317 = vpop.f32.mrf.mxu0
        %v1318 = vadd.f32 0.0, %v1317
        %v1319 = vpop.f32.mrf.mxu0
        %v1320 = vadd.f32 0.0, %v1319
        %v1321 = vpop.f32.mrf.mxu0
        %v1322 = vadd.f32 0.0, %v1321
        %v1323 = vpop.f32.mrf.mxu0
        %v1324 = vadd.f32 0.0, %v1323
        %1325 = vdwg.mxu0
        %v1326 = vmul.f32 %v1318, 0.25
        %v1327 = vmul.f32 %v1322, 0.25
        %1330 = vrot.lane.b32.xlu0 %v1318, 64
        %v1331 = vpop.permute.xlu0 %1330
        %1332 = vrot.lane.b32.xlu0 %v1322, 64
        %v1333 = vpop.permute.xlu0 %1332
        %vm1334 = vcmask 130048
        %v1336 = vsel %vm1334, %v1326, 0
        %v1339 = vsel %vm1334, %v1327, 0
        %v1341 = vsel %vm1334, %v1331, 0
        %v1343 = vsel %vm1334, %v1333, 0
        %1345 = vmatprep.subr.mxu0 0.0
        %1346 = vmatpush1.xpose.msra.mxu0 0.0
        %1347 = vmatprep.subr.mxu0 0.0
        %1348 = vmatpush1.xpose.msra.mxu0 0.0
        %1349 = vmatprep.subr.mxu0 0.0
        %1350 = vmatpush1.xpose.msra.mxu0 0.0
        %1351 = vmatprep.subr.mxu0 0.0
        %1352 = vmatpush1.xpose.msra.mxu0 0.0
        %1353 = vmatprep.subr.mxu0 0.0
        %1354 = vmatpush1.xpose.msra.mxu0 0.0
        %1355 = vmatprep.subr.mxu0 0.0
        %1356 = vmatpush1.xpose.msra.mxu0 0.0
        %1357 = vmatprep.subr.mxu0 0.0
        %1358 = vmatpush1.xpose.msra.mxu0 0.0
        %1359 = vmatprep.subr.mxu0 0.0
        %1360 = vmatpush1.xpose.msra.mxu0 0.0
        %1361 = vmatprep.subr.mxu0 0.0
        %1362 = vmatpush1.xpose.msra.mxu0 0.0
        %1363 = vmatprep.subr.mxu0 0.0
        %1364 = vmatpush1.xpose.msra.mxu0 0.0
        %1365 = vmatprep.subr.mxu0 0.0
        %1366 = vmatpush1.xpose.msra.mxu0 0.0
        %1367 = vmatprep.subr.mxu0 0.0
        %1368 = vmatpush1.xpose.msra.mxu0 0.0
        %1369 = vmatprep.subr.mxu0 0.0
        %1370 = vmatpush1.xpose.msra.mxu0 0.0
        %1371 = vmatprep.subr.mxu0 0.0
        %1372 = vmatpush1.xpose.msra.mxu0 0.0
        %1373 = vmatprep.subr.mxu0 0.0
        %1374 = vmatpush1.xpose.msra.mxu0 %v1343
        %1375 = vmatprep.subr.mxu0 0.0
        %1376 = vmatpush1.xpose.msra.mxu0 %v1341
        %1377 = vmatprep.subr.mxu0 0.0
        %1378 = vmatpush2.xpose.msra.mxu0 0.0
        %1379 = vmatprep.subr.mxu0 0.0
        %1380 = vmatpush2.xpose.msra.mxu0 0.0
        %1381 = vmatprep.subr.mxu0 0.0
        %1382 = vmatpush2.xpose.msra.mxu0 0.0
        %1383 = vmatprep.subr.mxu0 0.0
        %1384 = vmatpush2.xpose.msra.mxu0 0.0
        %1385 = vmatprep.subr.mxu0 0.0
        %1386 = vmatpush2.xpose.msra.mxu0 0.0
        %1387 = vmatprep.subr.mxu0 0.0
        %1388 = vmatpush2.xpose.msra.mxu0 0.0
        %1389 = vmatprep.subr.mxu0 0.0
        %1390 = vmatpush2.xpose.msra.mxu0 0.0
        %1391 = vmatprep.subr.mxu0 0.0
        %1392 = vmatpush2.xpose.msra.mxu0 0.0
        %1393 = vmatprep.subr.mxu0 0.0
        %1394 = vmatpush2.xpose.msra.mxu0 0.0
        %1395 = vmatprep.subr.mxu0 0.0
        %1396 = vmatpush2.xpose.msra.mxu0 0.0
        %1397 = vmatprep.subr.mxu0 0.0
        %1398 = vmatpush2.xpose.msra.mxu0 0.0
        %1399 = vmatprep.subr.mxu0 0.0
        %1400 = vmatpush2.xpose.msra.mxu0 0.0
        %1401 = vmatprep.subr.mxu0 0.0
        %1402 = vmatpush2.xpose.msra.mxu0 0.0
        %1403 = vmatprep.subr.mxu0 0.0
        %1404 = vmatpush2.xpose.msra.mxu0 0.0
        %1405 = vmatprep.subr.mxu0 0.0
        %1406 = vmatpush2.xpose.msra.mxu0 0.0
        %1407 = vmatprep.subr.mxu0 0.0
        %1408 = vmatpush2.xpose.msra.mxu0 0.0
        %1409 = vmatprep.mubr.f32.mxu0 0.0
        %1410 = vmatmul.mubr.f32.gmra.mxu0 %v1336
        %v1411 = vpop.f32.mrf.mxu0
        %v1412 = vadd.f32 %v1206, %v1411
        %v1413 = vpop.f32.mrf.mxu0
        %1414 = vmatprep.mubr.f32.mxu0 0.0
        %1415 = vmatmul.mubr.f32.gmra.mxu0 %v1339
        %v1416 = vpop.f32.mrf.mxu0
        %v1417 = vadd.f32 %v1207, %v1416
        %v1418 = vpop.f32.mrf.mxu0
        %1419 = vdwg.mxu0
        %vm1420 = vcmask 80896
        %v1421 = vsel %vm1420, %v1412, -inf
        %1422 = vmax.xlane.f32.xlu0 %v1421
        %v1423 = vpop.xlane.xlu0 %1422
        %vm1424 = vcmask 74752
        %v1425 = vsel %vm1424, %v1417, -inf
        %1426 = vmax.xlane.f32.xlu0 %v1425
        %v1427 = vpop.xlane.xlu0 %1426
        %v1428 = vsub.f32 %v1412, %v1423
        %v1429 = vsub.f32 %v1417, %v1427
        %v1430 = vmul.f32 %v1428, 1.442695
        %v1431 = vpow.pop %v1430
        %v1432 = vmul.f32 %v1429, 1.442695
        %v1433 = vpow.pop %v1432
        %v1434 = vsel %vm1420, %v1431, 0.0
        %1435 = vadd.xlane.f32.xlu0 %v1434
        %v1436 = vpop.xlane.xlu0 %1435
        %v1437 = vsel %vm1424, %v1433, 0.0
        %1438 = vadd.xlane.f32.xlu0 %v1437
        %v1439 = vpop.xlane.xlu0 %1438
        %v1440 = vrcp.pop %v1436
        %v1441 = vrcp.pop %v1439
        %v1442 = vmul.f32 %v1431, %v1440
        %v1443 = vmul.f32 %v1433, %v1441
        %v1445 = vsel %vm1420, %v1442, 0
        %v1448 = vsel %vm1420, %v1443, 0
        %vm1450 = vcmask 1041408
        %v1452 = vsel %vm1450, %v1324, 0
        %1454 = vmatprep.subr.mxu0 0.0
        %1455 = vmatpush1.msra.mxu0 0.0
        %1456 = vmatprep.subr.mxu0 0.0
        %1457 = vmatpush1.msra.mxu0 0.0
        %1458 = vmatprep.subr.mxu0 0.0
        %1459 = vmatpush1.msra.mxu0 0.0
        %1460 = vmatprep.subr.mxu0 0.0
        %1461 = vmatpush1.msra.mxu0 0.0
        %1462 = vmatprep.subr.mxu0 0.0
        %1463 = vmatpush1.msra.mxu0 0.0
        %1464 = vmatprep.subr.mxu0 0.0
        %1465 = vmatpush1.msra.mxu0 0.0
        %1466 = vmatprep.subr.mxu0 0.0
        %1467 = vmatpush1.msra.mxu0 0.0
        %1468 = vmatprep.subr.mxu0 0.0
        %1469 = vmatpush1.msra.mxu0 0.0
        %1470 = vmatprep.subr.mxu0 0.0
        %1471 = vmatpush1.msra.mxu0 0.0
        %1472 = vmatprep.subr.mxu0 0.0
        %1473 = vmatpush1.msra.mxu0 0.0
        %1474 = vmatprep.subr.mxu0 0.0
        %1475 = vmatpush1.msra.mxu0 0.0
        %1476 = vmatprep.subr.mxu0 0.0
        %1477 = vmatpush1.msra.mxu0 0.0
        %1478 = vmatprep.subr.mxu0 0.0
        %1479 = vmatpush1.msra.mxu0 0.0
        %1480 = vmatprep.subr.mxu0 0.0
        %1481 = vmatpush1.msra.mxu0 0.0
        %1482 = vmatprep.subr.mxu0 0.0
        %1483 = vmatpush1.msra.mxu0 %v1452
        %1484 = vmatprep.subr.mxu0 0.0
        %1485 = vmatpush1.msra.mxu0 %v1320
        %1486 = vmatprep.subr.mxu0 0.0
        %1487 = vmatpush2.msra.mxu0 0.0
        %1488 = vmatprep.subr.mxu0 0.0
        %1489 = vmatpush2.msra.mxu0 0.0
        %1490 = vmatprep.subr.mxu0 0.0
        %1491 = vmatpush2.msra.mxu0 0.0
        %1492 = vmatprep.subr.mxu0 0.0
        %1493 = vmatpush2.msra.mxu0 0.0
        %1494 = vmatprep.subr.mxu0 0.0
        %1495 = vmatpush2.msra.mxu0 0.0
        %1496 = vmatprep.subr.mxu0 0.0
        %1497 = vmatpush2.msra.mxu0 0.0
        %1498 = vmatprep.subr.mxu0 0.0
        %1499 = vmatpush2.msra.mxu0 0.0
        %1500 = vmatprep.subr.mxu0 0.0
        %1501 = vmatpush2.msra.mxu0 0.0
        %1502 = vmatprep.subr.mxu0 0.0
        %1503 = vmatpush2.msra.mxu0 0.0
        %1504 = vmatprep.subr.mxu0 0.0
        %1505 = vmatpush2.msra.mxu0 0.0
        %1506 = vmatprep.subr.mxu0 0.0
        %1507 = vmatpush2.msra.mxu0 0.0
        %1508 = vmatprep.subr.mxu0 0.0
        %1509 = vmatpush2.msra.mxu0 0.0
        %1510 = vmatprep.subr.mxu0 0.0
        %1511 = vmatpush2.msra.mxu0 0.0
        %1512 = vmatprep.subr.mxu0 0.0
        %1513 = vmatpush2.msra.mxu0 0.0
        %1514 = vmatprep.subr.mxu0 0.0
        %1515 = vmatpush2.msra.mxu0 0.0
        %1516 = vmatprep.subr.mxu0 0.0
        %1517 = vmatpush2.msra.mxu0 0.0
        %1518 = vmatprep.mubr.f32.mxu0 0.0
        %1519 = vmatmul.mubr.f32.gmra.mxu0 %v1445
        %v1520 = vpop.f32.mrf.mxu0
        %v1521 = vadd.f32 0.0, %v1520
        %v1522 = vpop.f32.mrf.mxu0
        %1523 = vmatprep.mubr.f32.mxu0 0.0
        %1524 = vmatmul.mubr.f32.gmra.mxu0 %v1448
        %v1525 = vpop.f32.mrf.mxu0
        %v1526 = vadd.f32 0.0, %v1525
        %v1527 = vpop.f32.mrf.mxu0
        %1528 = vdwg.mxu0
        %1529 = vrot.lane.b32.xlu0 %v1326, 112
        %v1530 = vpop.permute.xlu0 %1529
        %1531 = vrot.lane.b32.xlu0 %v1327, 112
        %v1532 = vpop.permute.xlu0 %1531
        %1533 = vrot.lane.b32.xlu0 %v1318, 48
        %v1534 = vpop.permute.xlu0 %1533
        %1535 = vrot.lane.b32.xlu0 %v1322, 48
        %v1536 = vpop.permute.xlu0 %1535
        %v1537 = vsel %vm1334, %v1530, 0
        %v1539 = vsel %vm1334, %v1532, 0
        %v1541 = vsel %vm1334, %v1534, 0
        %v1543 = vsel %vm1334, %v1536, 0
        %1545 = vmatprep.subr.mxu0 0.0
        %1546 = vmatpush1.xpose.msra.mxu0 0.0
        %1547 = vmatprep.subr.mxu0 0.0
        %1548 = vmatpush1.xpose.msra.mxu0 0.0
        %1549 = vmatprep.subr.mxu0 0.0
        %1550 = vmatpush1.xpose.msra.mxu0 0.0
        %1551 = vmatprep.subr.mxu0 0.0
        %1552 = vmatpush1.xpose.msra.mxu0 0.0
        %1553 = vmatprep.subr.mxu0 0.0
        %1554 = vmatpush1.xpose.msra.mxu0 0.0
        %1555 = vmatprep.subr.mxu0 0.0
        %1556 = vmatpush1.xpose.msra.mxu0 0.0
        %1557 = vmatprep.subr.mxu0 0.0
        %1558 = vmatpush1.xpose.msra.mxu0 0.0
        %1559 = vmatprep.subr.mxu0 0.0
        %1560 = vmatpush1.xpose.msra.mxu0 0.0
        %1561 = vmatprep.subr.mxu0 0.0
        %1562 = vmatpush1.xpose.msra.mxu0 0.0
        %1563 = vmatprep.subr.mxu0 0.0
        %1564 = vmatpush1.xpose.msra.mxu0 0.0
        %1565 = vmatprep.subr.mxu0 0.0
        %1566 = vmatpush1.xpose.msra.mxu0 0.0
        %1567 = vmatprep.subr.mxu0 0.0
        %1568 = vmatpush1.xpose.msra.mxu0 0.0
        %1569 = vmatprep.subr.mxu0 0.0
        %1570 = vmatpush1.xpose.msra.mxu0 0.0
        %1571 = vmatprep.subr.mxu0 0.0
        %1572 = vmatpush1.xpose.msra.mxu0 0.0
        %1573 = vmatprep.subr.mxu0 0.0
        %1574 = vmatpush1.xpose.msra.mxu0 %v1543
        %1575 = vmatprep.subr.mxu0 0.0
        %1576 = vmatpush1.xpose.msra.mxu0 %v1541
        %1577 = vmatprep.subr.mxu0 0.0
        %1578 = vmatpush2.xpose.msra.mxu0 0.0
        %1579 = vmatprep.subr.mxu0 0.0
        %1580 = vmatpush2.xpose.msra.mxu0 0.0
        %1581 = vmatprep.subr.mxu0 0.0
        %1582 = vmatpush2.xpose.msra.mxu0 0.0
        %1583 = vmatprep.subr.mxu0 0.0
        %1584 = vmatpush2.xpose.msra.mxu0 0.0
        %1585 = vmatprep.subr.mxu0 0.0
        %1586 = vmatpush2.xpose.msra.mxu0 0.0
        %1587 = vmatprep.subr.mxu0 0.0
        %1588 = vmatpush2.xpose.msra.mxu0 0.0
        %1589 = vmatprep.subr.mxu0 0.0
        %1590 = vmatpush2.xpose.msra.mxu0 0.0
        %1591 = vmatprep.subr.mxu0 0.0
        %1592 = vmatpush2.xpose.msra.mxu0 0.0
        %1593 = vmatprep.subr.mxu0 0.0
        %1594 = vmatpush2.xpose.msra.mxu0 0.0
        %1595 = vmatprep.subr.mxu0 0.0
        %1596 = vmatpush2.xpose.msra.mxu0 0.0
        %1597 = vmatprep.subr.mxu0 0.0
        %1598 = vmatpush2.xpose.msra.mxu0 0.0
        %1599 = vmatprep.subr.mxu0 0.0
        %1600 = vmatpush2.xpose.msra.mxu0 0.0
        %1601 = vmatprep.subr.mxu0 0.0
        %1602 = vmatpush2.xpose.msra.mxu0 0.0
        %1603 = vmatprep.subr.mxu0 0.0
        %1604 = vmatpush2.xpose.msra.mxu0 0.0
        %1605 = vmatprep.subr.mxu0 0.0
        %1606 = vmatpush2.xpose.msra.mxu0 0.0
        %1607 = vmatprep.subr.mxu0 0.0
        %1608 = vmatpush2.xpose.msra.mxu0 0.0
        %1609 = vmatprep.mubr.f32.mxu0 0.0
        %1610 = vmatmul.mubr.f32.gmra.mxu0 %v1537
        %v1611 = vpop.f32.mrf.mxu0
        %v1612 = vadd.f32 %v1206, %v1611
        %v1613 = vpop.f32.mrf.mxu0
        %1614 = vmatprep.mubr.f32.mxu0 0.0
        %1615 = vmatmul.mubr.f32.gmra.mxu0 %v1539
        %v1616 = vpop.f32.mrf.mxu0
        %v1617 = vadd.f32 %v1207, %v1616
        %v1618 = vpop.f32.mrf.mxu0
        %1619 = vdwg.mxu0
        %v1620 = vsel %vm1420, %v1612, -inf
        %1621 = vmax.xlane.f32.xlu0 %v1620
        %v1622 = vpop.xlane.xlu0 %1621
        %v1623 = vsel %vm1424, %v1617, -inf
        %1624 = vmax.xlane.f32.xlu0 %v1623
        %v1625 = vpop.xlane.xlu0 %1624
        %v1626 = vsub.f32 %v1612, %v1622
        %v1627 = vsub.f32 %v1617, %v1625
        %v1628 = vmul.f32 %v1626, 1.442695
        %v1629 = vpow.pop %v1628
        %v1630 = vmul.f32 %v1627, 1.442695
        %v1631 = vpow.pop %v1630
        %v1632 = vsel %vm1420, %v1629, 0.0
        %1633 = vadd.xlane.f32.xlu0 %v1632
        %v1634 = vpop.xlane.xlu0 %1633
        %v1635 = vsel %vm1424, %v1631, 0.0
        %1636 = vadd.xlane.f32.xlu0 %v1635
        %v1637 = vpop.xlane.xlu0 %1636
        %v1638 = vrcp.pop %v1634
        %v1639 = vrcp.pop %v1637
        %v1640 = vmul.f32 %v1629, %v1638
        %v1641 = vmul.f32 %v1631, %v1639
        %1643 = vrot.lane.b32.xlu0 %v1320, 112
        %v1644 = vpop.permute.xlu0 %1643
        %1645 = vrot.lane.b32.xlu0 %v1324, 112
        %v1646 = vpop.permute.xlu0 %1645
        %v1649 = vsel %vm1420, %v1640, 0
        %v1652 = vsel %vm1420, %v1641, 0
        %v1654 = vsel %vm1450, %v1646, 0
        %1656 = vmatprep.subr.mxu0 0.0
        %1657 = vmatpush1.msra.mxu0 0.0
        %1658 = vmatprep.subr.mxu0 0.0
        %1659 = vmatpush1.msra.mxu0 0.0
        %1660 = vmatprep.subr.mxu0 0.0
        %1661 = vmatpush1.msra.mxu0 0.0
        %1662 = vmatprep.subr.mxu0 0.0
        %1663 = vmatpush1.msra.mxu0 0.0
        %1664 = vmatprep.subr.mxu0 0.0
        %1665 = vmatpush1.msra.mxu0 0.0
        %1666 = vmatprep.subr.mxu0 0.0
        %1667 = vmatpush1.msra.mxu0 0.0
        %1668 = vmatprep.subr.mxu0 0.0
        %1669 = vmatpush1.msra.mxu0 0.0
        %1670 = vmatprep.subr.mxu0 0.0
        %1671 = vmatpush1.msra.mxu0 0.0
        %1672 = vmatprep.subr.mxu0 0.0
        %1673 = vmatpush1.msra.mxu0 0.0
        %1674 = vmatprep.subr.mxu0 0.0
        %1675 = vmatpush1.msra.mxu0 0.0
        %1676 = vmatprep.subr.mxu0 0.0
        %1677 = vmatpush1.msra.mxu0 0.0
        %1678 = vmatprep.subr.mxu0 0.0
        %1679 = vmatpush1.msra.mxu0 0.0
        %1680 = vmatprep.subr.mxu0 0.0
        %1681 = vmatpush1.msra.mxu0 0.0
        %1682 = vmatprep.subr.mxu0 0.0
        %1683 = vmatpush1.msra.mxu0 0.0
        %1684 = vmatprep.subr.mxu0 0.0
        %1685 = vmatpush1.msra.mxu0 %v1654
        %1686 = vmatprep.subr.mxu0 0.0
        %1687 = vmatpush1.msra.mxu0 %v1644
        %1688 = vmatprep.subr.mxu0 0.0
        %1689 = vmatpush2.msra.mxu0 0.0
        %1690 = vmatprep.subr.mxu0 0.0
        %1691 = vmatpush2.msra.mxu0 0.0
        %1692 = vmatprep.subr.mxu0 0.0
        %1693 = vmatpush2.msra.mxu0 0.0
        %1694 = vmatprep.subr.mxu0 0.0
        %1695 = vmatpush2.msra.mxu0 0.0
        %1696 = vmatprep.subr.mxu0 0.0
        %1697 = vmatpush2.msra.mxu0 0.0
        %1698 = vmatprep.subr.mxu0 0.0
        %1699 = vmatpush2.msra.mxu0 0.0
        %1700 = vmatprep.subr.mxu0 0.0
        %1701 = vmatpush2.msra.mxu0 0.0
        %1702 = vmatprep.subr.mxu0 0.0
        %1703 = vmatpush2.msra.mxu0 0.0
        %1704 = vmatprep.subr.mxu0 0.0
        %1705 = vmatpush2.msra.mxu0 0.0
        %1706 = vmatprep.subr.mxu0 0.0
        %1707 = vmatpush2.msra.mxu0 0.0
        %1708 = vmatprep.subr.mxu0 0.0
        %1709 = vmatpush2.msra.mxu0 0.0
        %1710 = vmatprep.subr.mxu0 0.0
        %1711 = vmatpush2.msra.mxu0 0.0
        %1712 = vmatprep.subr.mxu0 0.0
        %1713 = vmatpush2.msra.mxu0 0.0
        %1714 = vmatprep.subr.mxu0 0.0
        %1715 = vmatpush2.msra.mxu0 0.0
        %1716 = vmatprep.subr.mxu0 0.0
        %1717 = vmatpush2.msra.mxu0 0.0
        %1718 = vmatprep.subr.mxu0 0.0
        %1719 = vmatpush2.msra.mxu0 0.0
        %1720 = vmatprep.mubr.f32.mxu0 0.0
        %1721 = vmatmul.mubr.f32.gmra.mxu0 %v1649
        %v1722 = vpop.f32.mrf.mxu0
        %v1723 = vadd.f32 0.0, %v1722
        %v1724 = vpop.f32.mrf.mxu0
        %1725 = vmatprep.mubr.f32.mxu0 0.0
        %1726 = vmatmul.mubr.f32.gmra.mxu0 %v1652
        %v1727 = vpop.f32.mrf.mxu0
        %v1728 = vadd.f32 0.0, %v1727
        %v1729 = vpop.f32.mrf.mxu0
        %1730 = vdwg.mxu0
        %1731 = vrot.lane.b32.xlu0 %v1326, 96
        %v1732 = vpop.permute.xlu0 %1731
        %1733 = vrot.lane.b32.xlu0 %v1327, 96
        %v1734 = vpop.permute.xlu0 %1733
        %1735 = vrot.lane.b32.xlu0 %v1318, 32
        %v1736 = vpop.permute.xlu0 %1735
        %1737 = vrot.lane.b32.xlu0 %v1322, 32
        %v1738 = vpop.permute.xlu0 %1737
        %v1739 = vsel %vm1334, %v1732, 0
        %v1741 = vsel %vm1334, %v1734, 0
        %v1743 = vsel %vm1334, %v1736, 0
        %v1745 = vsel %vm1334, %v1738, 0
        %1747 = vmatprep.subr.mxu0 0.0
        %1748 = vmatpush1.xpose.msra.mxu0 0.0
        %1749 = vmatprep.subr.mxu0 0.0
        %1750 = vmatpush1.xpose.msra.mxu0 0.0
        %1751 = vmatprep.subr.mxu0 0.0
        %1752 = vmatpush1.xpose.msra.mxu0 0.0
        %1753 = vmatprep.subr.mxu0 0.0
        %1754 = vmatpush1.xpose.msra.mxu0 0.0
        %1755 = vmatprep.subr.mxu0 0.0
        %1756 = vmatpush1.xpose.msra.mxu0 0.0
        %1757 = vmatprep.subr.mxu0 0.0
        %1758 = vmatpush1.xpose.msra.mxu0 0.0
        %1759 = vmatprep.subr.mxu0 0.0
        %1760 = vmatpush1.xpose.msra.mxu0 0.0
        %1761 = vmatprep.subr.mxu0 0.0
        %1762 = vmatpush1.xpose.msra.mxu0 0.0
        %1763 = vmatprep.subr.mxu0 0.0
        %1764 = vmatpush1.xpose.msra.mxu0 0.0
        %1765 = vmatprep.subr.mxu0 0.0
        %1766 = vmatpush1.xpose.msra.mxu0 0.0
        %1767 = vmatprep.subr.mxu0 0.0
        %1768 = vmatpush1.xpose.msra.mxu0 0.0
        %1769 = vmatprep.subr.mxu0 0.0
        %1770 = vmatpush1.xpose.msra.mxu0 0.0
        %1771 = vmatprep.subr.mxu0 0.0
        %1772 = vmatpush1.xpose.msra.mxu0 0.0
        %1773 = vmatprep.subr.mxu0 0.0
        %1774 = vmatpush1.xpose.msra.mxu0 0.0
        %1775 = vmatprep.subr.mxu0 0.0
        %1776 = vmatpush1.xpose.msra.mxu0 %v1745
        %1777 = vmatprep.subr.mxu0 0.0
        %1778 = vmatpush1.xpose.msra.mxu0 %v1743
        %1779 = vmatprep.subr.mxu0 0.0
        %1780 = vmatpush2.xpose.msra.mxu0 0.0
        %1781 = vmatprep.subr.mxu0 0.0
        %1782 = vmatpush2.xpose.msra.mxu0 0.0
        %1783 = vmatprep.subr.mxu0 0.0
        %1784 = vmatpush2.xpose.msra.mxu0 0.0
        %1785 = vmatprep.subr.mxu0 0.0
        %1786 = vmatpush2.xpose.msra.mxu0 0.0
        %1787 = vmatprep.subr.mxu0 0.0
        %1788 = vmatpush2.xpose.msra.mxu0 0.0
        %1789 = vmatprep.subr.mxu0 0.0
        %1790 = vmatpush2.xpose.msra.mxu0 0.0
        %1791 = vmatprep.subr.mxu0 0.0
        %1792 = vmatpush2.xpose.msra.mxu0 0.0
        %1793 = vmatprep.subr.mxu0 0.0
        %1794 = vmatpush2.xpose.msra.mxu0 0.0
        %1795 = vmatprep.subr.mxu0 0.0
        %1796 = vmatpush2.xpose.msra.mxu0 0.0
        %1797 = vmatprep.subr.mxu0 0.0
        %1798 = vmatpush2.xpose.msra.mxu0 0.0
        %1799 = vmatprep.subr.mxu0 0.0
        %1800 = vmatpush2.xpose.msra.mxu0 0.0
        %1801 = vmatprep.subr.mxu0 0.0
        %1802 = vmatpush2.xpose.msra.mxu0 0.0
        %1803 = vmatprep.subr.mxu0 0.0
        %1804 = vmatpush2.xpose.msra.mxu0 0.0
        %1805 = vmatprep.subr.mxu0 0.0
        %1806 = vmatpush2.xpose.msra.mxu0 0.0
        %1807 = vmatprep.subr.mxu0 0.0
        %1808 = vmatpush2.xpose.msra.mxu0 0.0
        %1809 = vmatprep.subr.mxu0 0.0
        %1810 = vmatpush2.xpose.msra.mxu0 0.0
        %1811 = vmatprep.mubr.f32.mxu0 0.0
        %1812 = vmatmul.mubr.f32.gmra.mxu0 %v1739
        %v1813 = vpop.f32.mrf.mxu0
        %v1814 = vadd.f32 %v1206, %v1813
        %v1815 = vpop.f32.mrf.mxu0
        %1816 = vmatprep.mubr.f32.mxu0 0.0
        %1817 = vmatmul.mubr.f32.gmra.mxu0 %v1741
        %v1818 = vpop.f32.mrf.mxu0
        %v1819 = vadd.f32 %v1207, %v1818
        %v1820 = vpop.f32.mrf.mxu0
        %1821 = vdwg.mxu0
        %v1822 = vsel %vm1420, %v1814, -inf
        %1823 = vmax.xlane.f32.xlu0 %v1822
        %v1824 = vpop.xlane.xlu0 %1823
        %v1825 = vsel %vm1424, %v1819, -inf
        %1826 = vmax.xlane.f32.xlu0 %v1825
        %v1827 = vpop.xlane.xlu0 %1826
        %v1828 = vsub.f32 %v1814, %v1824
        %v1829 = vsub.f32 %v1819, %v1827
        %v1830 = vmul.f32 %v1828, 1.442695
        %v1831 = vpow.pop %v1830
        %v1832 = vmul.f32 %v1829, 1.442695
        %v1833 = vpow.pop %v1832
        %v1834 = vsel %vm1420, %v1831, 0.0
        %1835 = vadd.xlane.f32.xlu0 %v1834
        %v1836 = vpop.xlane.xlu0 %1835
        %v1837 = vsel %vm1424, %v1833, 0.0
        %1838 = vadd.xlane.f32.xlu0 %v1837
        %v1839 = vpop.xlane.xlu0 %1838
        %v1840 = vrcp.pop %v1836
        %v1841 = vrcp.pop %v1839
        %v1842 = vmul.f32 %v1831, %v1840
        %v1843 = vmul.f32 %v1833, %v1841
        %1844 = vrot.lane.b32.xlu0 %v1320, 96
        %v1845 = vpop.permute.xlu0 %1844
        %1846 = vrot.lane.b32.xlu0 %v1324, 96
        %v1847 = vpop.permute.xlu0 %1846
        %v1850 = vsel %vm1420, %v1842, 0
        %v1853 = vsel %vm1420, %v1843, 0
        %v1855 = vsel %vm1450, %v1847, 0
        %1857 = vmatprep.subr.mxu0 0.0
        %1858 = vmatpush1.msra.mxu0 0.0
        %1859 = vmatprep.subr.mxu0 0.0
        %1860 = vmatpush1.msra.mxu0 0.0
        %1861 = vmatprep.subr.mxu0 0.0
        %1862 = vmatpush1.msra.mxu0 0.0
        %1863 = vmatprep.subr.mxu0 0.0
        %1864 = vmatpush1.msra.mxu0 0.0
        %1865 = vmatprep.subr.mxu0 0.0
        %1866 = vmatpush1.msra.mxu0 0.0
        %1867 = vmatprep.subr.mxu0 0.0
        %1868 = vmatpush1.msra.mxu0 0.0
        %1869 = vmatprep.subr.mxu0 0.0
        %1870 = vmatpush1.msra.mxu0 0.0
        %1871 = vmatprep.subr.mxu0 0.0
        %1872 = vmatpush1.msra.mxu0 0.0
        %1873 = vmatprep.subr.mxu0 0.0
        %1874 = vmatpush1.msra.mxu0 0.0
        %1875 = vmatprep.subr.mxu0 0.0
        %1876 = vmatpush1.msra.mxu0 0.0
        %1877 = vmatprep.subr.mxu0 0.0
        %1878 = vmatpush1.msra.mxu0 0.0
        %1879 = vmatprep.subr.mxu0 0.0
        %1880 = vmatpush1.msra.mxu0 0.0
        %1881 = vmatprep.subr.mxu0 0.0
        %1882 = vmatpush1.msra.mxu0 0.0
        %1883 = vmatprep.subr.mxu0 0.0
        %1884 = vmatpush1.msra.mxu0 0.0
        %1885 = vmatprep.subr.mxu0 0.0
        %1886 = vmatpush1.msra.mxu0 %v1855
        %1887 = vmatprep.subr.mxu0 0.0
        %1888 = vmatpush1.msra.mxu0 %v1845
        %1889 = vmatprep.subr.mxu0 0.0
        %1890 = vmatpush2.msra.mxu0 0.0
        %1891 = vmatprep.subr.mxu0 0.0
        %1892 = vmatpush2.msra.mxu0 0.0
        %1893 = vmatprep.subr.mxu0 0.0
        %1894 = vmatpush2.msra.mxu0 0.0
        %1895 = vmatprep.subr.mxu0 0.0
        %1896 = vmatpush2.msra.mxu0 0.0
        %1897 = vmatprep.subr.mxu0 0.0
        %1898 = vmatpush2.msra.mxu0 0.0
        %1899 = vmatprep.subr.mxu0 0.0
        %1900 = vmatpush2.msra.mxu0 0.0
        %1901 = vmatprep.subr.mxu0 0.0
        %1902 = vmatpush2.msra.mxu0 0.0
        %1903 = vmatprep.subr.mxu0 0.0
        %1904 = vmatpush2.msra.mxu0 0.0
        %1905 = vmatprep.subr.mxu0 0.0
        %1906 = vmatpush2.msra.mxu0 0.0
        %1907 = vmatprep.subr.mxu0 0.0
        %1908 = vmatpush2.msra.mxu0 0.0
        %1909 = vmatprep.subr.mxu0 0.0
        %1910 = vmatpush2.msra.mxu0 0.0
        %1911 = vmatprep.subr.mxu0 0.0
        %1912 = vmatpush2.msra.mxu0 0.0
        %1913 = vmatprep.subr.mxu0 0.0
        %1914 = vmatpush2.msra.mxu0 0.0
        %1915 = vmatprep.subr.mxu0 0.0
        %1916 = vmatpush2.msra.mxu0 0.0
        %1917 = vmatprep.subr.mxu0 0.0
        %1918 = vmatpush2.msra.mxu0 0.0
        %1919 = vmatprep.subr.mxu0 0.0
        %1920 = vmatpush2.msra.mxu0 0.0
        %1921 = vmatprep.mubr.f32.mxu0 0.0
        %1922 = vmatmul.mubr.f32.gmra.mxu0 %v1850
        %v1923 = vpop.f32.mrf.mxu0
        %v1924 = vadd.f32 0.0, %v1923
        %v1925 = vpop.f32.mrf.mxu0
        %1926 = vmatprep.mubr.f32.mxu0 0.0
        %1927 = vmatmul.mubr.f32.gmra.mxu0 %v1853
        %v1928 = vpop.f32.mrf.mxu0
        %v1929 = vadd.f32 0.0, %v1928
        %v1930 = vpop.f32.mrf.mxu0
        %1931 = vdwg.mxu0
        %1932 = vrot.lane.b32.xlu0 %v1326, 80
        %v1933 = vpop.permute.xlu0 %1932
        %1934 = vrot.lane.b32.xlu0 %v1327, 80
        %v1935 = vpop.permute.xlu0 %1934
        %1936 = vrot.lane.b32.xlu0 %v1318, 16
        %v1937 = vpop.permute.xlu0 %1936
        %1938 = vrot.lane.b32.xlu0 %v1322, 16
        %v1939 = vpop.permute.xlu0 %1938
        %v1940 = vsel %vm1334, %v1933, 0
        %v1942 = vsel %vm1334, %v1935, 0
        %v1944 = vsel %vm1334, %v1937, 0
        %v1946 = vsel %vm1334, %v1939, 0
        %1948 = vmatprep.subr.mxu0 0.0
        %1949 = vmatpush1.xpose.msra.mxu0 0.0
        %1950 = vmatprep.subr.mxu0 0.0
        %1951 = vmatpush1.xpose.msra.mxu0 0.0
        %1952 = vmatprep.subr.mxu0 0.0
        %1953 = vmatpush1.xpose.msra.mxu0 0.0
        %1954 = vmatprep.subr.mxu0 0.0
        %1955 = vmatpush1.xpose.msra.mxu0 0.0
        %1956 = vmatprep.subr.mxu0 0.0
        %1957 = vmatpush1.xpose.msra.mxu0 0.0
        %1958 = vmatprep.subr.mxu0 0.0
        %1959 = vmatpush1.xpose.msra.mxu0 0.0
        %1960 = vmatprep.subr.mxu0 0.0
        %1961 = vmatpush1.xpose.msra.mxu0 0.0
        %1962 = vmatprep.subr.mxu0 0.0
        %1963 = vmatpush1.xpose.msra.mxu0 0.0
        %1964 = vmatprep.subr.mxu0 0.0
        %1965 = vmatpush1.xpose.msra.mxu0 0.0
        %1966 = vmatprep.subr.mxu0 0.0
        %1967 = vmatpush1.xpose.msra.mxu0 0.0
        %1968 = vmatprep.subr.mxu0 0.0
        %1969 = vmatpush1.xpose.msra.mxu0 0.0
        %1970 = vmatprep.subr.mxu0 0.0
        %1971 = vmatpush1.xpose.msra.mxu0 0.0
        %1972 = vmatprep.subr.mxu0 0.0
        %1973 = vmatpush1.xpose.msra.mxu0 0.0
        %1974 = vmatprep.subr.mxu0 0.0
        %1975 = vmatpush1.xpose.msra.mxu0 0.0
        %1976 = vmatprep.subr.mxu0 0.0
        %1977 = vmatpush1.xpose.msra.mxu0 %v1946
        %1978 = vmatprep.subr.mxu0 0.0
        %1979 = vmatpush1.xpose.msra.mxu0 %v1944
        %1980 = vmatprep.subr.mxu0 0.0
        %1981 = vmatpush2.xpose.msra.mxu0 0.0
        %1982 = vmatprep.subr.mxu0 0.0
        %1983 = vmatpush2.xpose.msra.mxu0 0.0
        %1984 = vmatprep.subr.mxu0 0.0
        %1985 = vmatpush2.xpose.msra.mxu0 0.0
        %1986 = vmatprep.subr.mxu0 0.0
        %1987 = vmatpush2.xpose.msra.mxu0 0.0
        %1988 = vmatprep.subr.mxu0 0.0
        %1989 = vmatpush2.xpose.msra.mxu0 0.0
        %1990 = vmatprep.subr.mxu0 0.0
        %1991 = vmatpush2.xpose.msra.mxu0 0.0
        %1992 = vmatprep.subr.mxu0 0.0
        %1993 = vmatpush2.xpose.msra.mxu0 0.0
        %1994 = vmatprep.subr.mxu0 0.0
        %1995 = vmatpush2.xpose.msra.mxu0 0.0
        %1996 = vmatprep.subr.mxu0 0.0
        %1997 = vmatpush2.xpose.msra.mxu0 0.0
        %1998 = vmatprep.subr.mxu0 0.0
        %1999 = vmatpush2.xpose.msra.mxu0 0.0
        %2000 = vmatprep.subr.mxu0 0.0
        %2001 = vmatpush2.xpose.msra.mxu0 0.0
        %2002 = vmatprep.subr.mxu0 0.0
        %2003 = vmatpush2.xpose.msra.mxu0 0.0
        %2004 = vmatprep.subr.mxu0 0.0
        %2005 = vmatpush2.xpose.msra.mxu0 0.0
        %2006 = vmatprep.subr.mxu0 0.0
        %2007 = vmatpush2.xpose.msra.mxu0 0.0
        %2008 = vmatprep.subr.mxu0 0.0
        %2009 = vmatpush2.xpose.msra.mxu0 0.0
        %2010 = vmatprep.subr.mxu0 0.0
        %2011 = vmatpush2.xpose.msra.mxu0 0.0
        %2012 = vmatprep.mubr.f32.mxu0 0.0
        %2013 = vmatmul.mubr.f32.gmra.mxu0 %v1940
        %v2014 = vpop.f32.mrf.mxu0
        %v2015 = vadd.f32 %v1206, %v2014
        %v2016 = vpop.f32.mrf.mxu0
        %2017 = vmatprep.mubr.f32.mxu0 0.0
        %2018 = vmatmul.mubr.f32.gmra.mxu0 %v1942
        %v2019 = vpop.f32.mrf.mxu0
        %v2020 = vadd.f32 %v1207, %v2019
        %v2021 = vpop.f32.mrf.mxu0
        %2022 = vdwg.mxu0
        %v2023 = vsel %vm1420, %v2015, -inf
        %2024 = vmax.xlane.f32.xlu0 %v2023
        %v2025 = vpop.xlane.xlu0 %2024
        %v2026 = vsel %vm1424, %v2020, -inf
        %2027 = vmax.xlane.f32.xlu0 %v2026
        %v2028 = vpop.xlane.xlu0 %2027
        %v2029 = vsub.f32 %v2015, %v2025
        %v2030 = vsub.f32 %v2020, %v2028
        %v2031 = vmul.f32 %v2029, 1.442695
        %v2032 = vpow.pop %v2031
        %v2033 = vmul.f32 %v2030, 1.442695
        %v2034 = vpow.pop %v2033
        %v2035 = vsel %vm1420, %v2032, 0.0
        %2036 = vadd.xlane.f32.xlu0 %v2035
        %v2037 = vpop.xlane.xlu0 %2036
        %v2038 = vsel %vm1424, %v2034, 0.0
        %2039 = vadd.xlane.f32.xlu0 %v2038
        %v2040 = vpop.xlane.xlu0 %2039
        %v2041 = vrcp.pop %v2037
        %v2042 = vrcp.pop %v2040
        %v2043 = vmul.f32 %v2032, %v2041
        %v2044 = vmul.f32 %v2034, %v2042
        %2045 = vrot.lane.b32.xlu0 %v1320, 80
        %v2046 = vpop.permute.xlu0 %2045
        %2047 = vrot.lane.b32.xlu0 %v1324, 80
        %v2048 = vpop.permute.xlu0 %2047
        %v2051 = vsel %vm1420, %v2043, 0
        %v2054 = vsel %vm1420, %v2044, 0
        %v2056 = vsel %vm1450, %v2048, 0
        %2058 = vmatprep.subr.mxu0 0.0
        %2059 = vmatpush1.msra.mxu0 0.0
        %2060 = vmatprep.subr.mxu0 0.0
        %2061 = vmatpush1.msra.mxu0 0.0
        %2062 = vmatprep.subr.mxu0 0.0
        %2063 = vmatpush1.msra.mxu0 0.0
        %2064 = vmatprep.subr.mxu0 0.0
        %2065 = vmatpush1.msra.mxu0 0.0
        %2066 = vmatprep.subr.mxu0 0.0
        %2067 = vmatpush1.msra.mxu0 0.0
        %2068 = vmatprep.subr.mxu0 0.0
        %2069 = vmatpush1.msra.mxu0 0.0
        %2070 = vmatprep.subr.mxu0 0.0
        %2071 = vmatpush1.msra.mxu0 0.0
        %2072 = vmatprep.subr.mxu0 0.0
        %2073 = vmatpush1.msra.mxu0 0.0
        %2074 = vmatprep.subr.mxu0 0.0
        %2075 = vmatpush1.msra.mxu0 0.0
        %2076 = vmatprep.subr.mxu0 0.0
        %2077 = vmatpush1.msra.mxu0 0.0
        %2078 = vmatprep.subr.mxu0 0.0
        %2079 = vmatpush1.msra.mxu0 0.0
        %2080 = vmatprep.subr.mxu0 0.0
        %2081 = vmatpush1.msra.mxu0 0.0
        %2082 = vmatprep.subr.mxu0 0.0
        %2083 = vmatpush1.msra.mxu0 0.0
        %2084 = vmatprep.subr.mxu0 0.0
        %2085 = vmatpush1.msra.mxu0 0.0
        %2086 = vmatprep.subr.mxu0 0.0
        %2087 = vmatpush1.msra.mxu0 %v2056
        %2088 = vmatprep.subr.mxu0 0.0
        %2089 = vmatpush1.msra.mxu0 %v2046
        %2090 = vmatprep.subr.mxu0 0.0
        %2091 = vmatpush2.msra.mxu0 0.0
        %2092 = vmatprep.subr.mxu0 0.0
        %2093 = vmatpush2.msra.mxu0 0.0
        %2094 = vmatprep.subr.mxu0 0.0
        %2095 = vmatpush2.msra.mxu0 0.0
        %2096 = vmatprep.subr.mxu0 0.0
        %2097 = vmatpush2.msra.mxu0 0.0
        %2098 = vmatprep.subr.mxu0 0.0
        %2099 = vmatpush2.msra.mxu0 0.0
        %2100 = vmatprep.subr.mxu0 0.0
        %2101 = vmatpush2.msra.mxu0 0.0
        %2102 = vmatprep.subr.mxu0 0.0
        %2103 = vmatpush2.msra.mxu0 0.0
        %2104 = vmatprep.subr.mxu0 0.0
        %2105 = vmatpush2.msra.mxu0 0.0
        %2106 = vmatprep.subr.mxu0 0.0
        %2107 = vmatpush2.msra.mxu0 0.0
        %2108 = vmatprep.subr.mxu0 0.0
        %2109 = vmatpush2.msra.mxu0 0.0
        %2110 = vmatprep.subr.mxu0 0.0
        %2111 = vmatpush2.msra.mxu0 0.0
        %2112 = vmatprep.subr.mxu0 0.0
        %2113 = vmatpush2.msra.mxu0 0.0
        %2114 = vmatprep.subr.mxu0 0.0
        %2115 = vmatpush2.msra.mxu0 0.0
        %2116 = vmatprep.subr.mxu0 0.0
        %2117 = vmatpush2.msra.mxu0 0.0
        %2118 = vmatprep.subr.mxu0 0.0
        %2119 = vmatpush2.msra.mxu0 0.0
        %2120 = vmatprep.subr.mxu0 0.0
        %2121 = vmatpush2.msra.mxu0 0.0
        %2122 = vmatprep.mubr.f32.mxu0 0.0
        %2123 = vmatmul.mubr.f32.gmra.mxu0 %v2051
        %v2124 = vpop.f32.mrf.mxu0
        %v2125 = vadd.f32 0.0, %v2124
        %v2126 = vpop.f32.mrf.mxu0
        %2127 = vmatprep.mubr.f32.mxu0 0.0
        %2128 = vmatmul.mubr.f32.gmra.mxu0 %v2054
        %v2129 = vpop.f32.mrf.mxu0
        %v2130 = vadd.f32 0.0, %v2129
        %v2131 = vpop.f32.mrf.mxu0
        %2132 = vdwg.mxu0
        %2135 = vrot.lane.b32.xlu0 %v1723, 16
        %v2136 = vpop.permute.xlu0 %2135
        %2137 = vrot.lane.b32.xlu0 %v1728, 16
        %v2138 = vpop.permute.xlu0 %2137
        %2143 = vrot.lane.b32.xlu0 %v1924, 32
        %v2144 = vpop.permute.xlu0 %2143
        %2145 = vrot.lane.b32.xlu0 %v1929, 32
        %v2146 = vpop.permute.xlu0 %2145
        %2151 = vrot.lane.b32.xlu0 %v2125, 48
        %v2152 = vpop.permute.xlu0 %2151
        %2153 = vrot.lane.b32.xlu0 %v2130, 48
        %v2154 = vpop.permute.xlu0 %2153
        %v2157 = vsel %vm1334, %v1521, %v2136
        %v2158 = vsel %vm1334, %v1526, %v2138
        %v2159 = vsel %vm1210, %v2157, %v2144
        %v2160 = vsel %vm1210, %v2158, %v2146
        %vm2161 = vcmask 392192
        %v2162 = vsel %vm2161, %v2159, %v2152
        %v2163 = vsel %vm2161, %v2160, %v2154
        %v2164 = vpack.c.bf16 %v2163, %v2162
        %v2165 = vld [vmem:[%s856] sm:$0xf]
        %v2166 = vld [vmem:[%s856 + $0x4] sm:$0xf]
        %v2167 = vld [vmem:[%s856 + $0x8] sm:$0xf]
        %v2168 = vld [vmem:[%s856 + $0xc] sm:$0xf]
        %v2169 = vld [vmem:[%s856 + $0x10] sm:$0xf]
        %v2170 = vld [vmem:[%s856 + $0x14] sm:$0xf]
        %v2171 = vld [vmem:[%s856 + $0x18] sm:$0xf]
        %v2172 = vld [vmem:[%s856 + $0x1c] sm:$0xf]
        %v2181 = vunpack.c.l.b16 %v2165
        %v2182 = vunpack.c.l.b16 %v2166
        %v2183 = vunpack.c.l.b16 %v2167
        %v2184 = vunpack.c.l.b16 %v2168
        %v2185 = vunpack.c.l.b16 %v2169
        %v2186 = vunpack.c.l.b16 %v2170
        %v2187 = vunpack.c.l.b16 %v2171
        %v2188 = vunpack.c.l.b16 %v2172
        %v2189 = vpack.c.b16 %v2182, %v2181
        %v2190 = vpack.c.b16 %v2184, %v2183
        %v2191 = vpack.c.b16 %v2186, %v2185
        %v2192 = vpack.c.b16 %v2188, %v2187
        %vm2197 = vcmask 523264
        %v2199 = vsel %vm2197, %v2164, 0
        %2201 = vmatprep.subr.bf16.mxu0 0
        %2202 = vmatpush1.bf16.msra.mxu0 0
        %2203 = vmatprep.subr.bf16.mxu0 0
        %2204 = vmatpush1.bf16.msra.mxu0 0
        %2205 = vmatprep.subr.bf16.mxu0 0
        %2206 = vmatpush1.bf16.msra.mxu0 0
        %2207 = vmatprep.subr.bf16.mxu0 0
        %2208 = vmatpush1.bf16.msra.mxu0 0
        %2209 = vmatprep.subr.bf16.mxu0 0
        %2210 = vmatpush1.bf16.msra.mxu0 %v2192
        %2211 = vmatprep.subr.bf16.mxu0 0
        %2212 = vmatpush1.bf16.msra.mxu0 %v2191
        %2213 = vmatprep.subr.bf16.mxu0 0
        %2214 = vmatpush1.bf16.msra.mxu0 %v2190
        %2215 = vmatprep.subr.bf16.mxu0 0
        %2216 = vmatpush1.bf16.msra.mxu0 %v2189
        %2217 = vmatprep.subr.bf16.mxu0 0
        %2218 = vmatpush2.bf16.msra.mxu0 0
        %2219 = vmatprep.subr.bf16.mxu0 0
        %2220 = vmatpush2.bf16.msra.mxu0 0
        %2221 = vmatprep.subr.bf16.mxu0 0
        %2222 = vmatpush2.bf16.msra.mxu0 0
        %2223 = vmatprep.subr.bf16.mxu0 0
        %2224 = vmatpush2.bf16.msra.mxu0 0
        %2225 = vmatprep.subr.bf16.mxu0 0
        %2226 = vmatpush2.bf16.msra.mxu0 0
        %2227 = vmatprep.subr.bf16.mxu0 0
        %2228 = vmatpush2.bf16.msra.mxu0 0
        %2229 = vmatprep.subr.bf16.mxu0 0
        %2230 = vmatpush2.bf16.msra.mxu0 0
        %2231 = vmatprep.subr.bf16.mxu0 0
        %2232 = vmatpush2.bf16.msra.mxu0 0
        %2233 = vmatprep.mubr.bf16.mxu0 0
        %2234 = vmatmul.mubr.bf16.gmra.mxu0 %v2199
        %v2235 = vpop.f32.mrf.mxu0
        %v2236 = vadd.f32 0.0, %v2235
        %v2237 = vpop.f32.mrf.mxu0
        %v2238 = vpop.f32.mrf.mxu0
        %v2239 = vadd.f32 0.0, %v2238
        %v2240 = vpop.f32.mrf.mxu0
        %2241 = vdwg.mxu0
        %v2242 = vadd.f32 %v1173, %v2236
        %v2243 = vadd.f32 %v1174, %v2239
        %v2244 = vld [vmem:[%s859] sm:$0x1]
        %v2246 = vlaneseq
        %v2247 = vshrl.u32 %v2246, 7
        %v2248 = vsub.s32 0, %v2247
        %v2249 = vrot.slane %v2244, %v2248
        %v2251 = vadd.f32 %v2242, %v2249
        %v2252 = vadd.f32 %v2243, %v2249
        %v2253 = vld [vmem:[%s862] sm:$0x1]
        %v2254 = vld [vmem:[%s865] sm:$0x1]
        %v2255 = vsel %vm1210, %v2251, 0.0
        %2256 = vadd.xlane.f32.xlu0 %v2255
        %v2257 = vpop.xlane.xlu0 %2256
        %v2258 = vsel %vm1214, %v2252, 0.0
        %2259 = vadd.xlane.f32.xlu0 %v2258
        %v2260 = vpop.xlane.xlu0 %2259
        %v2261 = vmul.f32 %v2257, %v1218
        %v2262 = vmul.f32 %v2260, %v1218
        %v2263 = vsub.f32 %v2251, %v2261
        %v2264 = vsub.f32 %v2252, %v2262
        %v2265 = vmul.f32 %v2263, %v2263
        %v2266 = vmul.f32 %v2264, %v2264
        %v2267 = vsel %vm1210, %v2265, 0.0
        %2268 = vadd.xlane.f32.xlu0 %v2267
        %v2269 = vpop.xlane.xlu0 %2268
        %v2270 = vsel %vm1214, %v2266, 0.0
        %2271 = vadd.xlane.f32.xlu0 %v2270
        %v2272 = vpop.xlane.xlu0 %2271
        %v2273 = vmul.f32 %v2269, %v1218
        %v2274 = vmul.f32 %v2272, %v1218
        %v2275 = vadd.f32 %v2273, 1e-05
        %v2276 = vadd.f32 %v2274, 1e-05
        %v2277 = vrsqrt.pop %v2275
        %v2278 = vrsqrt.pop %v2276
        %v2279 = vmul.f32 %v2263, %v2277
        %v2280 = vmul.f32 %v2264, %v2278
        %v2282 = vlaneseq
        %v2283 = vshrl.u32 %v2282, 7
        %v2284 = vsub.s32 0, %v2283
        %v2285 = vrot.slane %v2253, %v2284
        %v2287 = vmul.f32 %v2279, %v2285
        %v2288 = vmul.f32 %v2280, %v2285
        %v2290 = vlaneseq
        %v2291 = vshrl.u32 %v2290, 7
        %v2292 = vsub.s32 0, %v2291
        %v2293 = vrot.slane %v2254, %v2292
        %v2295 = vadd.f32 %v2287, %v2293
        %v2296 = vadd.f32 %v2288, %v2293
        %v2297 = vpack.c.bf16 %v2296, %v2295
        %v2298 = vld [vmem:[%s870] sm:$0xf]
        %v2299 = vld [vmem:[%s870 + $0x4] sm:$0xf]
        %v2300 = vld [vmem:[%s870 + $0x8] sm:$0xf]
        %v2301 = vld [vmem:[%s870 + $0xc] sm:$0xf]
        %v2302 = vld [vmem:[%s873] sm:$0x1]
        %v2304 = vlaneseq
        %v2305 = vshrl.u32 %v2304, 7
        %v2306 = vsub.s32 0, %v2305
        %v2307 = vrot.slane %v2302, %v2306
        %v2313 = vunpack.c.l.b16 %v2298
        %v2314 = vunpack.c.l.b16 %v2299
        %v2315 = vunpack.c.l.b16 %v2300
        %v2316 = vunpack.c.l.b16 %v2301
        %v2317 = vpack.c.b16 %v2314, %v2313
        %v2318 = vpack.c.b16 %v2316, %v2315
        %v2322 = vsel %vm1210, %v2297, 0
        %2324 = vmatprep.subr.bf16.mxu0 0
        %2325 = vmatpush1.bf16.msra.mxu0 0
        %2326 = vmatprep.subr.bf16.mxu0 0
        %2327 = vmatpush1.bf16.msra.mxu0 0
        %2328 = vmatprep.subr.bf16.mxu0 0
        %2329 = vmatpush1.bf16.msra.mxu0 0
        %2330 = vmatprep.subr.bf16.mxu0 0
        %2331 = vmatpush1.bf16.msra.mxu0 0
        %2332 = vmatprep.subr.bf16.mxu0 0
        %2333 = vmatpush1.bf16.msra.mxu0 0
        %2334 = vmatprep.subr.bf16.mxu0 0
        %2335 = vmatpush1.bf16.msra.mxu0 0
        %2336 = vmatprep.subr.bf16.mxu0 0
        %2337 = vmatpush1.bf16.msra.mxu0 %v2318
        %2338 = vmatprep.subr.bf16.mxu0 0
        %2339 = vmatpush1.bf16.msra.mxu0 %v2317
        %2340 = vmatprep.subr.bf16.mxu0 0
        %2341 = vmatpush2.bf16.msra.mxu0 0
        %2342 = vmatprep.subr.bf16.mxu0 0
        %2343 = vmatpush2.bf16.msra.mxu0 0
        %2344 = vmatprep.subr.bf16.mxu0 0
        %2345 = vmatpush2.bf16.msra.mxu0 0
        %2346 = vmatprep.subr.bf16.mxu0 0
        %2347 = vmatpush2.bf16.msra.mxu0 0
        %2348 = vmatprep.subr.bf16.mxu0 0
        %2349 = vmatpush2.bf16.msra.mxu0 0
        %2350 = vmatprep.subr.bf16.mxu0 0
        %2351 = vmatpush2.bf16.msra.mxu0 0
        %2352 = vmatprep.subr.bf16.mxu0 0
        %2353 = vmatpush2.bf16.msra.mxu0 0
        %2354 = vmatprep.subr.bf16.mxu0 0
        %2355 = vmatpush2.bf16.msra.mxu0 0
        %2356 = vmatprep.mubr.bf16.mxu0 0
        %2357 = vmatmul.mubr.bf16.gmra.mxu0 %v2322
        %v2358 = vpop.f32.mrf.mxu0
        %v2359 = vadd.f32 %v2307, %v2358
        %v2360 = vpop.f32.mrf.mxu0
        %v2361 = vpop.f32.mrf.mxu0
        %v2362 = vadd.f32 %v2307, %v2361
        %v2363 = vpop.f32.mrf.mxu0
        %2364 = vdwg.mxu0
        %v2365 = vmul.f32 %v2359, 0.5
        %v2366 = vmul.f32 %v2362, 0.5
        %v2367 = vmul.f32 %v2359, 0.70710677
        %v2368 = vmul.f32 %v2362, 0.70710677
        %v2369 = verf.f32.pop %v2367
        %v2370 = verf.f32.pop %v2368
        %v2371 = vadd.f32 %v2369, 1.0
        %v2372 = vadd.f32 %v2370, 1.0
        %v2373 = vmul.f32 %v2365, %v2371
        %v2374 = vmul.f32 %v2366, %v2372
        %v2375 = vpack.c.bf16 %v2374, %v2373
        %v2376 = vld [vmem:[%s878] sm:$0xf]
        %v2377 = vld [vmem:[%s878 + $0x4] sm:$0xf]
        %v2378 = vld [vmem:[%s878 + $0x8] sm:$0xf]
        %v2379 = vld [vmem:[%s878 + $0xc] sm:$0xf]
        %v2380 = vld [vmem:[%s878 + $0x10] sm:$0xf]
        %v2381 = vld [vmem:[%s878 + $0x14] sm:$0xf]
        %v2382 = vld [vmem:[%s878 + $0x18] sm:$0xf]
        %v2383 = vld [vmem:[%s878 + $0x1c] sm:$0xf]
        %v2384 = vld [vmem:[%s881] sm:$0x1]
        %v2386 = vlaneseq
        %v2387 = vshrl.u32 %v2386, 7
        %v2388 = vsub.s32 0, %v2387
        %v2389 = vrot.slane %v2384, %v2388
        %v2399 = vunpack.c.l.b16 %v2376
        %v2400 = vunpack.c.l.b16 %v2377
        %v2401 = vunpack.c.l.b16 %v2378
        %v2402 = vunpack.c.l.b16 %v2379
        %v2403 = vunpack.c.l.b16 %v2380
        %v2404 = vunpack.c.l.b16 %v2381
        %v2405 = vunpack.c.l.b16 %v2382
        %v2406 = vunpack.c.l.b16 %v2383
        %v2407 = vpack.c.b16 %v2400, %v2399
        %v2408 = vpack.c.b16 %v2402, %v2401
        %v2409 = vpack.c.b16 %v2404, %v2403
        %v2410 = vpack.c.b16 %v2406, %v2405
        %v2416 = vsel %vm2197, %v2375, 0
        %2418 = vmatprep.subr.bf16.mxu0 0
        %2419 = vmatpush1.bf16.msra.mxu0 0
        %2420 = vmatprep.subr.bf16.mxu0 0
        %2421 = vmatpush1.bf16.msra.mxu0 0
        %2422 = vmatprep.subr.bf16.mxu0 0
        %2423 = vmatpush1.bf16.msra.mxu0 0
        %2424 = vmatprep.subr.bf16.mxu0 0
        %2425 = vmatpush1.bf16.msra.mxu0 0
        %2426 = vmatprep.subr.bf16.mxu0 0
        %2427 = vmatpush1.bf16.msra.mxu0 %v2410
        %2428 = vmatprep.subr.bf16.mxu0 0
        %2429 = vmatpush1.bf16.msra.mxu0 %v2409
        %2430 = vmatprep.subr.bf16.mxu0 0
        %2431 = vmatpush1.bf16.msra.mxu0 %v2408
        %2432 = vmatprep.subr.bf16.mxu0 0
        %2433 = vmatpush1.bf16.msra.mxu0 %v2407
        %2434 = vmatprep.subr.bf16.mxu0 0
        %2435 = vmatpush2.bf16.msra.mxu0 0
        %2436 = vmatprep.subr.bf16.mxu0 0
        %2437 = vmatpush2.bf16.msra.mxu0 0
        %2438 = vmatprep.subr.bf16.mxu0 0
        %2439 = vmatpush2.bf16.msra.mxu0 0
        %2440 = vmatprep.subr.bf16.mxu0 0
        %2441 = vmatpush2.bf16.msra.mxu0 0
        %2442 = vmatprep.subr.bf16.mxu0 0
        %2443 = vmatpush2.bf16.msra.mxu0 0
        %2444 = vmatprep.subr.bf16.mxu0 0
        %2445 = vmatpush2.bf16.msra.mxu0 0
        %2446 = vmatprep.subr.bf16.mxu0 0
        %2447 = vmatpush2.bf16.msra.mxu0 0
        %2448 = vmatprep.subr.bf16.mxu0 0
        %2449 = vmatpush2.bf16.msra.mxu0 0
        %2450 = vmatprep.mubr.bf16.mxu0 0
        %2451 = vmatmul.mubr.bf16.gmra.mxu0 %v2416
        %v2452 = vpop.f32.mrf.mxu0
        %v2453 = vadd.f32 %v2389, %v2452
        %v2454 = vpop.f32.mrf.mxu0
        %v2455 = vpop.f32.mrf.mxu0
        %v2456 = vadd.f32 %v2389, %v2455
        %v2457 = vpop.f32.mrf.mxu0
        %2458 = vdwg.mxu0
        %v2459 = vadd.f32 %v2251, %v2453
        %v2460 = vadd.f32 %v2252, %v2456
        %2461 = vst.msk [vmem:[#allocation2] sm:$0xff] %vm1210, %v2459
        %2462 = vst.msk [vmem:[#allocation2 + $0x8] sm:$0x3] %vm1214, %v2460
        %p2463 = scmp.eq.s32.totalorder %s36, 1
        // Predicated region
        $region121: #{transformer_net_forward.1} parent=115 // pred_check
          %p2464 = pneg %p2463
        $region122: #{transformer_net_forward.1} parent=115 // pred_check_branch
          %2466 = sbr.rel (%p2464) target = $region124
        $region123: #{transformer_net_forward.1} parent=115 // pred_region
          %v2468 = vrot.slane %v2459, 4
          %vm2470 = vcmask 1040384
          %v2471 = vsel %vm2470, %v2459, %v2468
          %v2472 = vld [vmem:[%s20] sm:$0x1]
          %v2473 = vld [vmem:[%s21] sm:$0x1]
          %v2474 = vsel %vm1214, %v2471, 0.0
          %2475 = vadd.xlane.f32.xlu0 %v2474
          %v2476 = vpop.xlane.xlu0 %2475
          %v2477 = vmul.f32 %v2476, %v1218
          %v2478 = vsub.f32 %v2471, %v2477
          %v2479 = vmul.f32 %v2478, %v2478
          %v2480 = vsel %vm1214, %v2479, 0.0
          %2481 = vadd.xlane.f32.xlu0 %v2480
          %v2482 = vpop.xlane.xlu0 %2481
          %v2483 = vmul.f32 %v2482, %v1218
          %v2484 = vadd.f32 %v2483, 1e-05
          %v2485 = vrsqrt.pop %v2484
          %v2486 = vmul.f32 %v2478, %v2485
          %v2488 = vlaneseq
          %v2489 = vshrl.u32 %v2488, 7
          %v2490 = vsub.s32 0, %v2489
          %v2491 = vrot.slane %v2472, %v2490
          %v2493 = vmul.f32 %v2486, %v2491
          %v2495 = vlaneseq
          %v2496 = vshrl.u32 %v2495, 7
          %v2497 = vsub.s32 0, %v2496
          %v2498 = vrot.slane %v2473, %v2497
          %v2500 = vadd.f32 %v2493, %v2498
          %v2501 = vpack.c.bf16 %v2500, %v2500
          %v2502 = vld [vmem:[%s22] sm:$0xf]
          %v2503 = vld [vmem:[%s22 + $0x4] sm:$0xf]
          %v2504 = vld [vmem:[%s22 + $0x8] sm:$0xf]
          %v2505 = vld [vmem:[%s22 + $0xc] sm:$0xf]
          %v2506 = vld [vmem:[%s23] sm:$0x1]
          %v2508 = vlaneseq
          %v2509 = vshrl.u32 %v2508, 7
          %v2510 = vsub.s32 0, %v2509
          %v2511 = vrot.slane %v2506, %v2510
          %v2517 = vunpack.c.l.b16 %v2502
          %v2518 = vunpack.c.l.b16 %v2503
          %v2519 = vunpack.c.l.b16 %v2504
          %v2520 = vunpack.c.l.b16 %v2505
          %v2521 = vpack.c.b16 %v2518, %v2517
          %v2522 = vpack.c.b16 %v2520, %v2519
          %v2526 = vsel %vm1210, %v2501, 0
          %2528 = vmatprep.subr.bf16.mxu0 0
          %2529 = vmatpush1.bf16.msra.mxu0 0
          %2530 = vmatprep.subr.bf16.mxu0 0
          %2531 = vmatpush1.bf16.msra.mxu0 0
          %2532 = vmatprep.subr.bf16.mxu0 0
          %2533 = vmatpush1.bf16.msra.mxu0 0
          %2534 = vmatprep.subr.bf16.mxu0 0
          %2535 = vmatpush1.bf16.msra.mxu0 0
          %2536 = vmatprep.subr.bf16.mxu0 0
          %2537 = vmatpush1.bf16.msra.mxu0 0
          %2538 = vmatprep.subr.bf16.mxu0 0
          %2539 = vmatpush1.bf16.msra.mxu0 0
          %2540 = vmatprep.subr.bf16.mxu0 0
          %2541 = vmatpush1.bf16.msra.mxu0 %v2522
          %2542 = vmatprep.subr.bf16.mxu0 0
          %2543 = vmatpush1.bf16.msra.mxu0 %v2521
          %2544 = vmatprep.subr.bf16.mxu0 0
          %2545 = vmatpush2.bf16.msra.mxu0 0
          %2546 = vmatprep.subr.bf16.mxu0 0
          %2547 = vmatpush2.bf16.msra.mxu0 0
          %2548 = vmatprep.subr.bf16.mxu0 0
          %2549 = vmatpush2.bf16.msra.mxu0 0
          %2550 = vmatprep.subr.bf16.mxu0 0
          %2551 = vmatpush2.bf16.msra.mxu0 0
          %2552 = vmatprep.subr.bf16.mxu0 0
          %2553 = vmatpush2.bf16.msra.mxu0 0
          %2554 = vmatprep.subr.bf16.mxu0 0
          %2555 = vmatpush2.bf16.msra.mxu0 0
          %2556 = vmatprep.subr.bf16.mxu0 0
          %2557 = vmatpush2.bf16.msra.mxu0 0
          %2558 = vmatprep.subr.bf16.mxu0 0
          %2559 = vmatpush2.bf16.msra.mxu0 0
          %2560 = vmatprep.mubr.bf16.mxu0 0
          %2561 = vmatmul.mubr.bf16.gmra.mxu0 %v2526
          %v2562 = vpop.f32.mrf.mxu0
          %v2563 = vadd.f32 %v2511, %v2562
          %v2564 = vpop.f32.mrf.mxu0
          %v2565 = vpop.f32.mrf.mxu0
          %v2566 = vpop.f32.mrf.mxu0
          %2567 = vdwg.mxu0
          %v2568 = vsel %vm1424, %v2563, -inf
          %2569 = vmax.xlane.f32.xlu0 %v2568
          %v2570 = vpop.xlane.xlu0 %2569
          %v2571 = vsub.f32 %v2563, %v2570
          %v2572 = vmul.f32 %v2571, 1.442695
          %v2573 = vpow.pop %v2572
          %v2574 = vsel %vm1424, %v2573, 0.0
          %2575 = vadd.xlane.f32.xlu0 %v2574
          %v2576 = vpop.xlane.xlu0 %2575
          %v2577 = vlog2.pop %v2576
          %v2578 = vmul.f32 %v2577, 0.6931472
          %v2579 = vsub.f32 %v2571, %v2578
          %2580 = vst.msk [vmem:[#allocation3] sm:$0x3] %vm1424, %v2579
        $region124: #{transformer_net_forward.1} parent=115 // pred_fallthru
          _
        // Predicated region
        $region125: #{transformer_net_forward.1} parent=115 // pred_check
          %p2581 = pneg %p608
        $region126: #{transformer_net_forward.1} parent=115 // pred_check_branch
          %2583 = sbr.rel (%p2581) target = $region128
        $region127: #{transformer_net_forward.1} parent=115 // pred_region
          %s2585 = ssub.s32 32, 32
          %2586 = vsyncadd [#allocation4], %s2585
          %s2588 = sshll.u32 [#allocation3], 4
          %s2589 = int_to_ptr.vmem [resolvable:$true] %s2588
          %2591 = dma.vmem_to_hbm [thread:$0]  %s2589, 32, %s24, [#allocation4]
        $region128: #{transformer_net_forward.1} parent=115 // pred_fallthru
          _
        // Predicated region
        $region129: #{transformer_net_forward.1} parent=115 // pred_check
          %p2592 = pneg %p608
        $region130: #{transformer_net_forward.1} parent=115 // pred_check_branch
          %2594 = sbr.rel (%p2592) target = $region132
        $region131: #{transformer_net_forward.1} parent=115 // pred_region
          %2595 = dma.done [#allocation4], 32
        $region132: #{transformer_net_forward.1} parent=115 // pred_fallthru
          _
      $region116: #{transformer_net_forward.1} parent=5 // pred_fallthru
        _
      %p2596 = scmp.le.s32.totalorder 2, %s31
      // Predicated region
      $region133: #{transformer_net_forward.1} parent=5 // pred_check
        %p2597 = pneg %p2596
      $region134: #{transformer_net_forward.1} parent=5 // pred_check_branch
        %2599 = sbr.rel (%p2597) target = $region136
      $region135: #{transformer_net_forward.1} parent=5 // pred_region
        %s2600 = ssub.s32 %s31, 2
      $region136: #{transformer_net_forward.1} parent=5 // pred_fallthru
        _
    $region6: #{transformer_net_forward.1} parent=1 // loop_footer
      %s35 = sadd.s32 1, %s31
    $region7: #{transformer_net_forward.1} parent=1 // loop_footer_branch
      %30 = sbr.rel target = $region3
    $region8: #{transformer_net_forward.1} parent=1 // loop_exit
      _
    %2601 = vsyncpa [#allocation4], 1
    %s2602 = scalar_lea.sflag [#allocation4], 1
    %2603 = vsyncpa %s2602, 1

</llo_original>
